<compile_context>
chip_gen: v6e
topology: v6e:2x2x1
jax: 0.10.0
libtpu: 0.0.40
codegen_flags: <defaults>
</compile_context>

<pallas_src>
import functools
import math

import jax
import jax.numpy as jnp
from jax.experimental import pallas as pl
from jax.experimental.pallas import tpu as pltpu


# -----------------------------------------------------------------------------
# Small static helpers
# -----------------------------------------------------------------------------
def _largest_divisor_leq(n, cap):
    d = max(1, min(cap, n))
    while n % d:
        d -= 1
    return d


def _pick_row_block(n_rows, ls, cap):
    # Row blocks must align with sequence-group boundaries so the in-kernel
    # RoPE position of a row is simply its offset inside the block (mod ls).
    if cap >= ls:
        groups_per_block = _largest_divisor_leq(n_rows // ls, max(1, cap // ls))
        return groups_per_block * ls
    return _largest_divisor_leq(ls, cap)


def _rope_tables(ls, head_dim, n_head):
    # Exact transcription of the PyTorch module's rope frequencies.
    j = jnp.arange(0, head_dim, 2, dtype=jnp.float32)
    pos = 10000.0 ** ((-2.0 * j - 1.0) / head_dim)              # (hd/2,)
    t = jnp.arange(ls, dtype=jnp.float32)[:, None] * pos[None, :]
    rot = jnp.concatenate([t, t], axis=-1)                      # (ls, hd)
    cos = jnp.tile(jnp.cos(rot), (1, n_head))                   # (ls, n_head*hd)
    sin = jnp.tile(jnp.sin(rot), (1, n_head))
    return cos, sin


# -----------------------------------------------------------------------------
# Kernel 1: fused QKV projection + RMSNorm(q,k) + RoPE + softmax-scale on q
# -----------------------------------------------------------------------------
def _qkv_rmsnorm_rope_kernel(x_ref, w_ref, g_ref, cos_ref, sin_ref,
                             q_ref, k_ref, v_ref, *, n_embd, eps, q_scale):
    e = n_embd
    x = x_ref[...]                                    # native dtype -> MXU
    # Three separate dots avoid materializing a (TN, 3E) f32 intermediate.
    q = jnp.dot(x, w_ref[:, :e], preferred_element_type=jnp.float32)
    k = jnp.dot(x, w_ref[:, e:2 * e], preferred_element_type=jnp.float32)
    v = jnp.dot(x, w_ref[:, 2 * e:], preferred_element_type=jnp.float32)

    g = g_ref[...].astype(jnp.float32)                # (1, E) RMSNorm weight
    cos = cos_ref[...].astype(jnp.float32)            # (TN, E), head-packed
    sin = sin_ref[...].astype(jnp.float32)

    def rms(t):                                       # f32 statistics
        return t * jax.lax.rsqrt(jnp.mean(t * t, axis=-1, keepdims=True) + eps) * g

    def rope(t):
        # Interleaved pair rotation (x0, x1) -> (-x1, x0), per head. head_dim is
        # even, so the pair structure is preserved in the packed (.., H*hd)
        # layout and the +-1 lane roll never mixes values across head borders.
        d_model = t.shape[1]
        left = pltpu.roll(t, shift=d_model - 1, axis=1)     # t[:, j + 1]
        right = pltpu.roll(t, shift=1, axis=1)              # t[:, j - 1]
        lane = jax.lax.broadcasted_iota(jnp.int32, t.shape, 1)
        rot = jnp.where(lane % 2 == 0, -left, right)
        return t * cos + rot * sin

    # Attention softmax scale (1/sqrt(hd), muP=False) folded into q here so the
    # flash kernel does no per-step score scaling.
    q_ref[...] = (rope(rms(q)) * q_scale).astype(q_ref.dtype)
    k_ref[...] = rope(rms(k)).astype(k_ref.dtype)
    v_ref[...] = v.astype(v_ref.dtype)


def qkv_rmsnorm_rope(x2d, w_qkv, ln_w, cos, sin, *, eps, q_scale, row_block):
    n, c = x2d.shape
    e3 = w_qkv.shape[1]
    e = e3 // 3
    ls = cos.shape[0]
    tn = _pick_row_block(n, ls, row_block)

    if tn >= ls:                          # whole groups per block -> constant rope table
        reps = tn // ls
        cos_in = jnp.tile(cos, (reps, 1)) if reps > 1 else cos
        sin_in = jnp.tile(sin, (reps, 1)) if reps > 1 else sin
        cs_map = lambda i: (0, 0)
    else:                                 # several row blocks per group
        blocks_per_group = ls // tn
        cos_in, sin_in = cos, sin
        cs_map = lambda i: (i % blocks_per_group, 0)

    out_sds = jax.ShapeDtypeStruct((n, e), x2d.dtype)
    # TODO(synk): add a contraction (C) grid axis + f32 accumulator scratch for
    # production embed dims where the resident (C, 3E) weight exceeds VMEM.
    return pl.pallas_call(
        functools.partial(_qkv_rmsnorm_rope_kernel, n_embd=e, eps=float(eps),
                          q_scale=float(q_scale)),
        out_shape=(out_sds, out_sds, out_sds),
        grid_spec=pltpu.PrefetchScalarGridSpec(
            num_scalar_prefetch=0,
            grid=(n // tn,),
            in_specs=[
                pl.BlockSpec((tn, c), lambda i: (i, 0)),
                pl.BlockSpec((c, e3), lambda i: (0, 0)),
                pl.BlockSpec((1, e), lambda i: (0, 0)),
                pl.BlockSpec((tn, e), cs_map),
                pl.BlockSpec((tn, e), cs_map),
            ],
            out_specs=[
                pl.BlockSpec((tn, e), lambda i: (i, 0)),
                pl.BlockSpec((tn, e), lambda i: (i, 0)),
                pl.BlockSpec((tn, e), lambda i: (i, 0)),
            ],
        ),
        compiler_params=pltpu.CompilerParams(
            dimension_semantics=("parallel",),
            vmem_limit_bytes=32 * 1024 * 1024),
    )(x2d, w_qkv, ln_w.reshape(1, e), cos_in, sin_in)


# -----------------------------------------------------------------------------
# Kernel 2: causal flash attention on a flattened lower-triangular grid
# -----------------------------------------------------------------------------
def _flash_causal_kernel(qi_ref, ki_ref, q_ref, k_ref, v_ref, o_ref,
                         m_sc, l_sc, acc_sc):
    t = pl.program_id(1)
    qi = qi_ref[t]
    ki = ki_ref[t]
    neg = jnp.float32(-1e30)

    @pl.when(ki == 0)
    def _():
        m_sc[...] = jnp.full(m_sc.shape, neg, jnp.float32)
        l_sc[...] = jnp.zeros(l_sc.shape, jnp.float32)
        acc_sc[...] = jnp.zeros(acc_sc.shape, jnp.float32)

    # Native-dtype operands straight to the MXU; f32 accumulation and stats.
    q = q_ref[...]                                    # (G, BQ, D), scale pre-folded
    k = k_ref[...]                                    # (G, BK, D)
    v = v_ref[...]                                    # (G, BK, D)
    s = jnp.einsum('gqd,gkd->gqk', q, k, preferred_element_type=jnp.float32)

    def online_softmax_update(scores):
        m_prev = m_sc[...]                            # (G, BQ, 1)
        m_new = jnp.maximum(m_prev, jnp.max(scores, axis=-1, keepdims=True))
        alpha = jnp.exp(m_prev - m_new)
        p = jnp.exp(scores - m_new)                   # f32
        l_sc[...] = alpha * l_sc[...] + jnp.sum(p, axis=-1, keepdims=True)
        acc_sc[...] = alpha * acc_sc[...] + jnp.einsum(
            'gqk,gkd->gqd', p.astype(v.dtype), v, preferred_element_type=jnp.float32)
        m_sc[...] = m_new

    @pl.when(ki < qi)              # strictly below the diagonal: no mask needed
    def _():
        online_softmax_update(s)

    @pl.when(ki == qi)             # diagonal block: mask, update, finalize
    def _():
        rows = jax.lax.broadcasted_iota(jnp.int32, s.shape, 1)
        cols = jax.lax.broadcasted_iota(jnp.int32, s.shape, 2)
        online_softmax_update(jnp.where(cols <= rows, s, neg))
        inv_l = pl.reciprocal(l_sc[...], approx=True)          # EUP slot
        o_ref[...] = (acc_sc[...] * inv_l).astype(o_ref.dtype)


def flash_causal_attention(q, k, v, *, block=128, heads_per_block=1):
    bh, s, d = q.shape
    bq = bk = min(block, s)
    assert s % bq == 0  # TODO(synk): ragged sequence lengths
    g = heads_per_block
    assert bh % g == 0
    nq = s // bq
    n_steps = nq * (nq + 1) // 2

    # Flattened lower-triangular enumeration of (qi, ki): above-diagonal blocks
    # cost neither a grid step nor any K/V DMA.
    qi_list, ki_list = [], []
    for i in range(nq):
        for j in range(i + 1):
            qi_list.append(i)
            ki_list.append(j)
    qi_idx = jnp.asarray(qi_list, dtype=jnp.int32)
    ki_idx = jnp.asarray(ki_list, dtype=jnp.int32)

    return pl.pallas_call(
        _flash_causal_kernel,
        out_shape=jax.ShapeDtypeStruct((bh, s, d), q.dtype),
        grid_spec=pltpu.PrefetchScalarGridSpec(
            num_scalar_prefetch=2,
            grid=(bh // g, n_steps),
            in_specs=[
                pl.BlockSpec((g, bq, d), lambda b, t, qi, ki: (b, qi[t], 0)),
                pl.BlockSpec((g, bk, d), lambda b, t, qi, ki: (b, ki[t], 0)),
                pl.BlockSpec((g, bk, d), lambda b, t, qi, ki: (b, ki[t], 0)),
            ],
            out_specs=pl.BlockSpec((g, bq, d), lambda b, t, qi, ki: (b, qi[t], 0)),
            scratch_shapes=[
                pltpu.VMEM((g, bq, 1), jnp.float32),   # running max m
                pltpu.VMEM((g, bq, 1), jnp.float32),   # running sum l
                pltpu.VMEM((g, bq, d), jnp.float32),   # output accumulator
            ],
        ),
        compiler_params=pltpu.CompilerParams(
            dimension_semantics=("parallel", "arbitrary")),
    )(qi_idx, ki_idx, q, k, v)


# -----------------------------------------------------------------------------
# Kernel 3: output projection (csa_proj_to_embd, bias=False)
# -----------------------------------------------------------------------------
def _linear_kernel(x_ref, w_ref, o_ref):
    o_ref[...] = jnp.dot(x_ref[...], w_ref[...],
                         preferred_element_type=jnp.float32).astype(o_ref.dtype)


def linear(x2d, w, *, row_block=512):
    n, c = x2d.shape
    e = w.shape[1]
    tn = _largest_divisor_leq(n, row_block)
    # TODO(synk): tile the contraction (C) axis for production embed dims.
    return pl.pallas_call(
        _linear_kernel,
        out_shape=jax.ShapeDtypeStruct((n, e), x2d.dtype),
        grid_spec=pltpu.PrefetchScalarGridSpec(
            num_scalar_prefetch=0,
            grid=(n // tn,),
            in_specs=[pl.BlockSpec((tn, c), lambda i: (i, 0)),
                      pl.BlockSpec((c, e), lambda i: (0, 0))],
            out_specs=pl.BlockSpec((tn, e), lambda i: (i, 0)),
        ),
        compiler_params=pltpu.CompilerParams(
            dimension_semantics=("parallel",),
            vmem_limit_bytes=32 * 1024 * 1024),
    )(x2d, w)


# -----------------------------------------------------------------------------
# Full forward (wrapper stitching the Pallas kernels together)
# -----------------------------------------------------------------------------
def local_causal_self_attention(x, w_qkv, ln_w, w_proj, *, n_head, eps=1e-6,
                                use_rope=True, row_block=512, seq_block=128):
    B, ng, ls, C = x.shape
    E = w_proj.shape[0]
    hd = E // n_head
    N = B * ng * ls
    scale = 1.0 / math.sqrt(hd)                       # muP=False

    if use_rope:
        cos, sin = _rope_tables(ls, hd, n_head)
    else:
        cos = jnp.ones((ls, E), jnp.float32)
        sin = jnp.zeros((ls, E), jnp.float32)

    # Fused: QKV projection + RMSNorm(q,k) + RoPE + softmax scale folded into q.
    q2, k2, v2 = qkv_rmsnorm_rope(x.reshape(N, C), w_qkv, ln_w, cos, sin,
                                  eps=eps, q_scale=scale, row_block=row_block)

    # Head split / merge are pure layout ops.
    # TODO(synk): fold these transposes into the kernels' out_specs.
    def to_bh(t):
        return (t.reshape(B, ng, ls, n_head, hd)
                 .transpose(0, 1, 3, 2, 4)
                 .reshape(B * ng * n_head, ls, hd))

    # Process several heads per flash step while head_dim < 128 lanes.
    g = 1 if hd >= 128 else min(n_head, max(1, 128 // hd))
    while n_head % g:
        g -= 1

    y = flash_causal_attention(to_bh(q2), to_bh(k2), to_bh(v2),
                               block=seq_block, heads_per_block=g)
    y = (y.reshape(B, ng, n_head, ls, hd)
          .transpose(0, 1, 3, 2, 4)
          .reshape(N, E))
    out = linear(y, w_proj, row_block=row_block)      # csa_proj_to_embd
    # TODO(synk): resid/attn dropout (0.0), mem tokens, soft experts not implemented.
    return out.reshape(B, ng, ls, E)


# -----------------------------------------------------------------------------
# Pure-JAX reference (mirrors the PyTorch module, non-flash path)
# -----------------------------------------------------------------------------
def _rotate_embeddings(x):
    *lead, d = x.shape
    xr = x.reshape(*lead, d // 2, 2)[..., ::-1]                 # (x0,x1) -> (x1,x0)
    xr = xr * jnp.array([-1.0, 1.0], dtype=x.dtype)             # -> (-x1, x0)
    return xr.reshape(*lead, d)


def _reference_forward(x, w_qkv, ln_w, w_proj, *, n_head, eps=1e-6, use_rope=True):
    B, ng, ls, C = x.shape
    E = w_proj.shape[0]
    hd = E // n_head
    qkv = jnp.einsum('bgsc,ce->bgse', x, w_qkv)
    q, k, v = jnp.split(qkv, 3, axis=-1)

    def rms(t):
        t32 = t.astype(jnp.float32)
        return (t32 * jax.lax.rsqrt(jnp.mean(t32 * t32, axis=-1, keepdims=True)
                                    + eps)).astype(t.dtype) * ln_w

    q, k = rms(q), rms(k)

    def to_heads(t):
        return t.reshape(B, ng, ls, n_head, hd).transpose(0, 1, 3, 2, 4)

    q, k, v = to_heads(q), to_heads(k), to_heads(v)
    if use_rope:
        cos, sin = _rope_tables(ls, hd, 1)                      # (ls, hd)
        q = q * cos + _rotate_embeddings(q) * sin
        k = k * cos + _rotate_embeddings(k) * sin

    att = jnp.einsum('bghqd,bghkd->bghqk', q, k) * (1.0 / math.sqrt(hd))
    mask = jnp.tril(jnp.ones((ls, ls), dtype=bool))
    att = jnp.where(mask, att, -jnp.finfo(att.dtype).max)
    att = jax.nn.softmax(att, axis=-1)
    y = jnp.einsum('bghqk,bghkd->bghqd', att, v)
    y = y.transpose(0, 1, 3, 2, 4).reshape(B, ng, ls, E)
    return jnp.einsum('bgse,ef->bgsf', y, w_proj)


if __name__ == "__main__":
    key = jax.random.PRNGKey(0)
    kx, kw1, kw2, kg = jax.random.split(key, 4)

    # Small, lane-friendly shapes: (B, n_groups, local_seq, in_n_embd).
    # ls=256 with seq_block=128 exercises the triangular (qi, ki) grid.
    B, ng, ls = 2, 2, 256
    C = 128        # in_n_embd
    E = 128        # out_n_embd
    n_head = 2     # head_dim = 64

    x = jax.random.normal(kx, (B, ng, ls, C), dtype=jnp.float32)
    w_qkv = 0.02 * jax.random.normal(kw1, (C, 3 * E), dtype=jnp.float32)
    ln_w = 1.0 + 0.1 * jax.random.normal(kg, (E,), dtype=jnp.float32)  # RMSNorm weight
    w_proj = 0.02 * jax.random.normal(kw2, (E, E), dtype=jnp.float32)

    out = local_causal_self_attention(x, w_qkv, ln_w, w_proj, n_head=n_head)
    out = jax.block_until_ready(out)

    ref = _reference_forward(x, w_qkv, ln_w, w_proj, n_head=n_head)
    assert out.shape == (B, ng, ls, E)
    max_err = float(jnp.max(jnp.abs(out - ref)))
    assert jnp.allclose(out, ref, atol=1e-2, rtol=1e-2), max_err
    print("KERNEL_OK")
</pallas_src>

<mosaic_0001>
module attributes {stable_mosaic.version = 11 : i64} {
  func.func @_qkv_rmsnorm_rope_kernel(%arg0: i32, %arg1: memref<512x128xf32, #tpu.memory_space<vmem>>, %arg2: memref<128x384xf32, #tpu.memory_space<vmem>>, %arg3: memref<1x128xf32, #tpu.memory_space<vmem>>, %arg4: memref<512x128xf32, #tpu.memory_space<vmem>>, %arg5: memref<512x128xf32, #tpu.memory_space<vmem>>, %arg6: memref<512x128xf32, #tpu.memory_space<vmem>>, %arg7: memref<512x128xf32, #tpu.memory_space<vmem>>, %arg8: memref<512x128xf32, #tpu.memory_space<vmem>>) attributes {dimension_semantics = [#tpu.dimension_semantics<parallel>], iteration_bounds = array<i64: 2>, scalar_prefetch = 0 : i64, scratch_operands = 0 : i64, tpu.core_type = #tpu.core_type<tc>, window_params = [{transform_indices = @transform_0, window_bounds = array<i64: 512, 128>}, {pipeline_mode = #tpu.pipeline_mode<synchronous>, transform_indices = @transform_1, window_bounds = array<i64: 128, 384>}, {pipeline_mode = #tpu.pipeline_mode<synchronous>, transform_indices = @transform_2, window_bounds = array<i64: 1, 128>}, {pipeline_mode = #tpu.pipeline_mode<synchronous>, transform_indices = @transform_3, window_bounds = array<i64: 512, 128>}, {pipeline_mode = #tpu.pipeline_mode<synchronous>, transform_indices = @transform_4, window_bounds = array<i64: 512, 128>}, {transform_indices = @transform_5, window_bounds = array<i64: 512, 128>}, {transform_indices = @transform_6, window_bounds = array<i64: 512, 128>}, {transform_indices = @transform_7, window_bounds = array<i64: 512, 128>}]} {
    %c0 = arith.constant 0 : index
    %c0_0 = arith.constant 0 : index
    %0 = vector.load %arg1[%c0, %c0_0] : memref<512x128xf32, #tpu.memory_space<vmem>>, vector<512x128xf32>
    %c0_1 = arith.constant 0 : index
    %c0_2 = arith.constant 0 : index
    %1 = vector.load %arg2[%c0_1, %c0_2] : memref<128x384xf32, #tpu.memory_space<vmem>>, vector<128x128xf32>
    %cst = arith.constant dense<0.000000e+00> : vector<512x128xf32>
    %2 = tpu.matmul %0, %1, %cst {dimension_numbers = #tpu.dot_dimension_numbers<[1], [0], [0], [1], [0, 0, 1, 1], [], []>} : vector<512x128xf32>, vector<128x128xf32>, vector<512x128xf32> -> vector<512x128xf32>
    %c0_3 = arith.constant 0 : index
    %c128 = arith.constant 128 : index
    %3 = vector.load %arg2[%c0_3, %c128] : memref<128x384xf32, #tpu.memory_space<vmem>>, vector<128x128xf32>
    %cst_4 = arith.constant dense<0.000000e+00> : vector<512x128xf32>
    %4 = tpu.matmul %0, %3, %cst_4 {dimension_numbers = #tpu.dot_dimension_numbers<[1], [0], [0], [1], [0, 0, 1, 1], [], []>} : vector<512x128xf32>, vector<128x128xf32>, vector<512x128xf32> -> vector<512x128xf32>
    %c0_5 = arith.constant 0 : index
    %c256 = arith.constant 256 : index
    %5 = vector.load %arg2[%c0_5, %c256] : memref<128x384xf32, #tpu.memory_space<vmem>>, vector<128x128xf32>
    %cst_6 = arith.constant dense<0.000000e+00> : vector<512x128xf32>
    %6 = tpu.matmul %0, %5, %cst_6 {dimension_numbers = #tpu.dot_dimension_numbers<[1], [0], [0], [1], [0, 0, 1, 1], [], []>} : vector<512x128xf32>, vector<128x128xf32>, vector<512x128xf32> -> vector<512x128xf32>
    %c0_7 = arith.constant 0 : index
    %c0_8 = arith.constant 0 : index
    %7 = vector.load %arg3[%c0_7, %c0_8] : memref<1x128xf32, #tpu.memory_space<vmem>>, vector<1x128xf32>
    %c0_9 = arith.constant 0 : index
    %c0_10 = arith.constant 0 : index
    %8 = vector.load %arg4[%c0_9, %c0_10] : memref<512x128xf32, #tpu.memory_space<vmem>>, vector<512x128xf32>
    %c0_11 = arith.constant 0 : index
    %c0_12 = arith.constant 0 : index
    %9 = vector.load %arg5[%c0_11, %c0_12] : memref<512x128xf32, #tpu.memory_space<vmem>>, vector<512x128xf32>
    %10 = arith.mulf %2, %2 : vector<512x128xf32>
    %cst_13 = arith.constant dense<0.000000e+00> : vector<512xf32>
    %11 = vector.multi_reduction <add>, %10, %cst_13 [1] : vector<512x128xf32> to vector<512xf32>
    %12 = vector.shape_cast %11 : vector<512xf32> to vector<512x1xf32>
    %cst_14 = arith.constant 1.280000e+02 : f32
    %13 = vector.broadcast %cst_14 : f32 to vector<512x1xf32>
    %14 = arith.divf %12, %13 : vector<512x1xf32>
    %cst_15 = arith.constant 9.99999997E-7 : f32
    %15 = vector.broadcast %cst_15 : f32 to vector<512x1xf32>
    %16 = arith.addf %14, %15 : vector<512x1xf32>
    %17 = math.rsqrt %16 : vector<512x1xf32>
    %18 = vector.broadcast %17 : vector<512x1xf32> to vector<512x128xf32>
    %19 = arith.mulf %2, %18 : vector<512x128xf32>
    %20 = vector.broadcast %7 : vector<1x128xf32> to vector<512x128xf32>
    %21 = arith.mulf %19, %20 : vector<512x128xf32>
    %c127_i32 = arith.constant 127 : i32
    %22 = tpu.dynamic_rotate %21 by %c127_i32 dim 1 : vector<512x128xf32>, i32 -> vector<512x128xf32>
    %c1_i32 = arith.constant 1 : i32
    %23 = tpu.dynamic_rotate %21 by %c1_i32 dim 1 : vector<512x128xf32>, i32 -> vector<512x128xf32>
    %24 = tpu.iota {dimensions = array<i32: 1>} : vector<512x128xi32>
    %c2_i32 = arith.constant 2 : i32
    %c0_i32 = arith.constant 0 : i32
    %25 = arith.cmpi eq, %c2_i32, %c0_i32 : i32
    %c1_i32_16 = arith.constant 1 : i32
    %26 = arith.select %25, %c1_i32_16, %c2_i32 : i32
    %27 = vector.broadcast %26 : i32 to vector<512x128xi32>
    %28 = arith.remsi %24, %27 : vector<512x128xi32>
    %c0_i32_17 = arith.constant 0 : i32
    %29 = vector.broadcast %c0_i32_17 : i32 to vector<512x128xi32>
    %30 = arith.cmpi ne, %28, %29 : vector<512x128xi32>
    %c0_i32_18 = arith.constant 0 : i32
    %31 = vector.broadcast %c0_i32_18 : i32 to vector<512x128xi32>
    %32 = arith.cmpi slt, %28, %31 : vector<512x128xi32>
    %c0_i32_19 = arith.constant 0 : i32
    %33 = arith.cmpi slt, %26, %c0_i32_19 : i32
    %34 = vector.broadcast %33 : i1 to vector<512x128xi1>
    %35 = vector.broadcast %34 : vector<512x128xi1> to vector<512x128xi1>
    %36 = arith.xori %32, %35 : vector<512x128xi1>
    %37 = arith.andi %36, %30 : vector<512x128xi1>
    %38 = vector.broadcast %26 : i32 to vector<512x128xi32>
    %39 = arith.addi %28, %38 : vector<512x128xi32>
    %40 = arith.select %37, %39, %28 : vector<512x128xi1>, vector<512x128xi32>
    %c0_i32_20 = arith.constant 0 : i32
    %41 = vector.broadcast %c0_i32_20 : i32 to vector<512x128xi32>
    %42 = arith.cmpi eq, %40, %41 : vector<512x128xi32>
    %cst_21 = arith.constant 0.000000e+00 : f32
    %43 = vector.broadcast %cst_21 : f32 to vector<512x128xf32>
    %44 = arith.subf %43, %22 : vector<512x128xf32>
    %45 = arith.select %42, %44, %23 : vector<512x128xi1>, vector<512x128xf32>
    %46 = arith.mulf %21, %8 : vector<512x128xf32>
    %47 = arith.mulf %45, %9 : vector<512x128xf32>
    %48 = arith.addf %46, %47 : vector<512x128xf32>
    %cst_22 = arith.constant 1.250000e-01 : f32
    %49 = vector.broadcast %cst_22 : f32 to vector<512x128xf32>
    %50 = arith.mulf %48, %49 : vector<512x128xf32>
    %c0_23 = arith.constant 0 : index
    %c0_24 = arith.constant 0 : index
    %51 = vector.load %arg6[%c0_23, %c0_24] : memref<512x128xf32, #tpu.memory_space<vmem>>, vector<512x128xf32>
    tpu.vector_store %arg6[%c0_23, %c0_24], %50 {strides = array<i32>} : memref<512x128xf32, #tpu.memory_space<vmem>>, vector<512x128xf32>,
    %52 = arith.mulf %4, %4 : vector<512x128xf32>
    %cst_25 = arith.constant dense<0.000000e+00> : vector<512xf32>
    %53 = vector.multi_reduction <add>, %52, %cst_25 [1] : vector<512x128xf32> to vector<512xf32>
    %54 = vector.shape_cast %53 : vector<512xf32> to vector<512x1xf32>
    %cst_26 = arith.constant 1.280000e+02 : f32
    %55 = vector.broadcast %cst_26 : f32 to vector<512x1xf32>
    %56 = arith.divf %54, %55 : vector<512x1xf32>
    %cst_27 = arith.constant 9.99999997E-7 : f32
    %57 = vector.broadcast %cst_27 : f32 to vector<512x1xf32>
    %58 = arith.addf %56, %57 : vector<512x1xf32>
    %59 = math.rsqrt %58 : vector<512x1xf32>
    %60 = vector.broadcast %59 : vector<512x1xf32> to vector<512x128xf32>
    %61 = arith.mulf %4, %60 : vector<512x128xf32>
    %62 = vector.broadcast %7 : vector<1x128xf32> to vector<512x128xf32>
    %63 = arith.mulf %61, %62 : vector<512x128xf32>
    %c127_i32_28 = arith.constant 127 : i32
    %64 = tpu.dynamic_rotate %63 by %c127_i32_28 dim 1 : vector<512x128xf32>, i32 -> vector<512x128xf32>
    %c1_i32_29 = arith.constant 1 : i32
    %65 = tpu.dynamic_rotate %63 by %c1_i32_29 dim 1 : vector<512x128xf32>, i32 -> vector<512x128xf32>
    %66 = tpu.iota {dimensions = array<i32: 1>} : vector<512x128xi32>
    %c2_i32_30 = arith.constant 2 : i32
    %c0_i32_31 = arith.constant 0 : i32
    %67 = arith.cmpi eq, %c2_i32_30, %c0_i32_31 : i32
    %c1_i32_32 = arith.constant 1 : i32
    %68 = arith.select %67, %c1_i32_32, %c2_i32_30 : i32
    %69 = vector.broadcast %68 : i32 to vector<512x128xi32>
    %70 = arith.remsi %66, %69 : vector<512x128xi32>
    %c0_i32_33 = arith.constant 0 : i32
    %71 = vector.broadcast %c0_i32_33 : i32 to vector<512x128xi32>
    %72 = arith.cmpi ne, %70, %71 : vector<512x128xi32>
    %c0_i32_34 = arith.constant 0 : i32
    %73 = vector.broadcast %c0_i32_34 : i32 to vector<512x128xi32>
    %74 = arith.cmpi slt, %70, %73 : vector<512x128xi32>
    %c0_i32_35 = arith.constant 0 : i32
    %75 = arith.cmpi slt, %68, %c0_i32_35 : i32
    %76 = vector.broadcast %75 : i1 to vector<512x128xi1>
    %77 = vector.broadcast %76 : vector<512x128xi1> to vector<512x128xi1>
    %78 = arith.xori %74, %77 : vector<512x128xi1>
    %79 = arith.andi %78, %72 : vector<512x128xi1>
    %80 = vector.broadcast %68 : i32 to vector<512x128xi32>
    %81 = arith.addi %70, %80 : vector<512x128xi32>
    %82 = arith.select %79, %81, %70 : vector<512x128xi1>, vector<512x128xi32>
    %c0_i32_36 = arith.constant 0 : i32
    %83 = vector.broadcast %c0_i32_36 : i32 to vector<512x128xi32>
    %84 = arith.cmpi eq, %82, %83 : vector<512x128xi32>
    %cst_37 = arith.constant 0.000000e+00 : f32
    %85 = vector.broadcast %cst_37 : f32 to vector<512x128xf32>
    %86 = arith.subf %85, %64 : vector<512x128xf32>
    %87 = arith.select %84, %86, %65 : vector<512x128xi1>, vector<512x128xf32>
    %88 = arith.mulf %63, %8 : vector<512x128xf32>
    %89 = arith.mulf %87, %9 : vector<512x128xf32>
    %90 = arith.addf %88, %89 : vector<512x128xf32>
    %c0_38 = arith.constant 0 : index
    %c0_39 = arith.constant 0 : index
    %91 = vector.load %arg7[%c0_38, %c0_39] : memref<512x128xf32, #tpu.memory_space<vmem>>, vector<512x128xf32>
    tpu.vector_store %arg7[%c0_38, %c0_39], %90 {strides = array<i32>} : memref<512x128xf32, #tpu.memory_space<vmem>>, vector<512x128xf32>,
    %c0_40 = arith.constant 0 : index
    %c0_41 = arith.constant 0 : index
    %92 = vector.load %arg8[%c0_40, %c0_41] : memref<512x128xf32, #tpu.memory_space<vmem>>, vector<512x128xf32>
    tpu.vector_store %arg8[%c0_40, %c0_41], %6 {strides = array<i32>} : memref<512x128xf32, #tpu.memory_space<vmem>>, vector<512x128xf32>,
    return
  }
  func.func @transform_0(%arg0: i32) -> (i32, i32) {
    %c0_i32 = arith.constant 0 : i32
    %c0_i32_0 = arith.constant 0 : i32
    return %arg0, %c0_i32 : i32, i32
  }
  func.func @transform_1(%arg0: i32) -> (i32, i32) {
    %c0_i32 = arith.constant 0 : i32
    %c0_i32_0 = arith.constant 0 : i32
    %c0_i32_1 = arith.constant 0 : i32
    return %c0_i32, %c0_i32_0 : i32, i32
  }
  func.func @transform_2(%arg0: i32) -> (i32, i32) {
    %c0_i32 = arith.constant 0 : i32
    %c0_i32_0 = arith.constant 0 : i32
    %c0_i32_1 = arith.constant 0 : i32
    return %c0_i32, %c0_i32_0 : i32, i32
  }
  func.func @transform_3(%arg0: i32) -> (i32, i32) {
    %c0_i32 = arith.constant 0 : i32
    %c0_i32_0 = arith.constant 0 : i32
    %c0_i32_1 = arith.constant 0 : i32
    return %c0_i32, %c0_i32_0 : i32, i32
  }
  func.func @transform_4(%arg0: i32) -> (i32, i32) {
    %c0_i32 = arith.constant 0 : i32
    %c0_i32_0 = arith.constant 0 : i32
    %c0_i32_1 = arith.constant 0 : i32
    return %c0_i32, %c0_i32_0 : i32, i32
  }
  func.func @transform_5(%arg0: i32) -> (i32, i32) {
    %c0_i32 = arith.constant 0 : i32
    %c0_i32_0 = arith.constant 0 : i32
    return %arg0, %c0_i32 : i32, i32
  }
  func.func @transform_6(%arg0: i32) -> (i32, i32) {
    %c0_i32 = arith.constant 0 : i32
    %c0_i32_0 = arith.constant 0 : i32
    return %arg0, %c0_i32 : i32, i32
  }
  func.func @transform_7(%arg0: i32) -> (i32, i32) {
    %c0_i32 = arith.constant 0 : i32
    %c0_i32_0 = arith.constant 0 : i32
    return %arg0, %c0_i32 : i32, i32
  }
}

</mosaic_0001>

<llo_original>
// kernel: tpu_custom_call.1
$region0: #{tpu_custom_call.1}
  #allocation0 [shape = 'u32[]', space=smem, size = 0x4, offset = 0x4, fixed_abs, tag = 'smem constant byte address 0x4 - core index']
  #allocation1 [shape = 'u32[144,128]{1,0:T(1,128)}', space=vmem, size = 0x12000, scoped, tag = 'internal scratch']
  %s0 = inlined_call_operand.hbm [shape: f32[1024,128], index: 0, kind: input, shape index: {}]
  %s1 = inlined_call_operand.hbm [shape: f32[128,384], index: 1, kind: input, shape index: {}]
  %s2 = inlined_call_operand.vmem [shape: f32[1,128], index: 2, kind: input, shape index: {}]
  %s3 = inlined_call_operand.hbm [shape: f32[512,128], index: 3, kind: input, shape index: {}]
  %s4 = inlined_call_operand.hbm [shape: f32[512,128], index: 4, kind: input, shape index: {}]
  %s5 = inlined_call_operand.hbm [shape: f32[1024,128], index: 5, kind: output, shape index: {0}]
  %s6 = inlined_call_operand.hbm [shape: f32[1024,128], index: 6, kind: output, shape index: {1}]
  %s7 = inlined_call_operand.hbm [shape: f32[1024,128], index: 7, kind: output, shape index: {2}]
  %8 = xla_tuple %s5, %s6, %s7
  %s9 = sld [smem:[#allocation0]]
  $region85: #{tpu_custom_call.1} parent=0
    _
  %s11 = ssub.s32 1, %s9
  %s12 = scalar_select 0, %s11, %s9
  $region1: #{tpu_custom_call.1} parent=0
    #allocation2 [shape = 'u8[524288]{0}', space=vmem, size = 0x80000, scoped, tag = 'input window, operand 0']
    #allocation3 [shape = 's32[2]{0}', space=sflag, size = 0x8, scoped, tag = 'scoped memory for tpu_custom_call.1']
    #allocation4 [shape = 's32[2]{0}', space=sflag, size = 0x8, scoped, tag = 'scoped memory for tpu_custom_call.1']
    #allocation5 [shape = 'u8[196608]{0}', space=vmem, size = 0x30000, scoped, tag = 'input window, operand 1, single buffered']
    #allocation6 [shape = 's32[1]{0}', space=sflag, size = 0x4, scoped, tag = 'scoped memory for tpu_custom_call.1']
    #allocation7 [shape = 'u8[262144]{0}', space=vmem, size = 0x40000, scoped, tag = 'input window, operand 3, single buffered']
    #allocation8 [shape = 'u8[262144]{0}', space=vmem, size = 0x40000, scoped, tag = 'input window, operand 4, single buffered']
    #allocation9 [shape = 's32[1]{0}', space=sflag, size = 0x4, scoped, tag = 'scoped memory for tpu_custom_call.1']
    #allocation10 [shape = 'u8[524288]{0}', space=vmem, size = 0x80000, scoped, tag = 'output window, operand 0']
    #allocation11 [shape = 'u8[524288]{0}', space=vmem, size = 0x80000, scoped, tag = 'output window, operand 1']
    #allocation12 [shape = 's32[2]{0}', space=sflag, size = 0x8, scoped, tag = 'scoped memory for tpu_custom_call.1']
    #allocation13 [shape = 'u8[524288]{0}', space=vmem, size = 0x80000, scoped, tag = 'output window, operand 2']
    %13 = vsyncpa [#allocation3], 0
    %s14 = scalar_lea.sflag [#allocation3], 1
    %15 = vsyncpa %s14, 0
    %16 = vsyncpa [#allocation6], 0
    %17 = vsyncpa [#allocation9], 0
    %18 = vsyncpa [#allocation4], 0
    %s19 = scalar_lea.sflag [#allocation4], 1
    %20 = vsyncpa %s19, 0
    %21 = vsyncpa [#allocation12], 0
    %s22 = scalar_lea.sflag [#allocation12], 1
    %23 = vsyncpa %s22, 0
    loop: start=0, step=1, limit=4
    $region2: #{tpu_custom_call.1} parent=1 // loop_pre_header
      _
    $region3: #{tpu_custom_call.1} parent=1 // loop_header
      %s25 = sphi 0, %s29
      %p26 = scmp.ge.s32.totalorder %s25, 4
      %s35 = sphi 0, %s37
      %s38 = sphi 0, %s35
      %s39 = sphi 0, %s38
      %s55 = sphi 0, %s39
      %s59 = sphi 0, %s59
      %s61 = sphi 0, %s59
      %s62 = sphi 0, %s61
      %s76 = sphi 0, %s62
      %s80 = sphi 0, %s80
      %s82 = sphi 0, %s80
      %s83 = sphi 0, %s82
      %s97 = sphi 0, %s83
      %s101 = sphi 0, %s101
      %s103 = sphi 0, %s101
      %s104 = sphi 0, %s103
      %s118 = sphi 0, %s104
      %s122 = sphi 0, %s122
      %s124 = sphi 0, %s122
      %s125 = sphi 0, %s124
      %s139 = sphi 0, %s125
      %s145 = sphi 0, %s147
      %s148 = sphi 0, %s145
      %s149 = sphi 0, %s148
      %s165 = sphi 0, %s149
      %s171 = sphi 0, %s173
      %s174 = sphi 0, %s171
      %s175 = sphi 0, %s174
      %s191 = sphi 0, %s175
      %s197 = sphi 0, %s199
      %s200 = sphi 0, %s197
      %s201 = sphi 0, %s200
      %s217 = sphi 0, %s201
    $region4: #{tpu_custom_call.1} parent=1 // loop_header_branch
      %28 = sbr.rel (%p26) target = $region8
    $region5: #{tpu_custom_call.1} parent=1 // loop_body
      %s30 = ssub.s32 %s25, 1
      %s31 = ssub.s32 %s25, 2
      %s32 = sadd.s32 %s25, 1
      %s33 = ssub.s32 %s25, %s32
      %p34 = scmp.eq.s32.totalorder %s33, 0
      %s36 = sadd.s32 %s35, 1
      %s37 = scalar_select %p34, %s35, %s36
      %p40 = pneg %p34
      %p41 = scmp.eq.s32.totalorder %s25, 1
      %p42 = por %p40, %p41
      %p43 = scmp.ne.s32.totalorder %s35, %s38
      %p44 = scmp.eq.s32.totalorder %s25, 0
      %p45 = por %p43, %p44
      %p46 = scmp.ne.s32.totalorder %s35, %s38
      %p47 = scmp.eq.s32.totalorder %s30, 1
      %p48 = por %p46, %p47
      %p49 = scmp.ne.s32.totalorder %s38, %s39
      %p50 = scmp.eq.s32.totalorder %s30, 0
      %p51 = por %p49, %p50
      %p52 = scmp.ne.s32.totalorder %s38, %s39
      %p53 = scmp.eq.s32.totalorder %s31, 1
      %p54 = por %p52, %p53
      %p56 = scmp.ne.s32.totalorder %s39, %s55
      %p57 = scmp.eq.s32.totalorder %s31, 0
      %p58 = por %p56, %p57
      %s60 = sadd.s32 %s59, 1
      %p63 = scmp.eq.s32.totalorder %s25, 1
      %p64 = scmp.ne.s32.totalorder %s59, %s61
      %p65 = scmp.eq.s32.totalorder %s25, 0
      %p66 = por %p64, %p65
      %p67 = scmp.ne.s32.totalorder %s59, %s61
      %p68 = scmp.eq.s32.totalorder %s30, 1
      %p69 = por %p67, %p68
      %p70 = scmp.ne.s32.totalorder %s61, %s62
      %p71 = scmp.eq.s32.totalorder %s30, 0
      %p72 = por %p70, %p71
      %p73 = scmp.ne.s32.totalorder %s61, %s62
      %p74 = scmp.eq.s32.totalorder %s31, 1
      %p75 = por %p73, %p74
      %p77 = scmp.ne.s32.totalorder %s62, %s76
      %p78 = scmp.eq.s32.totalorder %s31, 0
      %p79 = por %p77, %p78
      %s81 = sadd.s32 %s80, 1
      %p84 = scmp.eq.s32.totalorder %s25, 1
      %p85 = scmp.ne.s32.totalorder %s80, %s82
      %p86 = scmp.eq.s32.totalorder %s25, 0
      %p87 = por %p85, %p86
      %p88 = scmp.ne.s32.totalorder %s80, %s82
      %p89 = scmp.eq.s32.totalorder %s30, 1
      %p90 = por %p88, %p89
      %p91 = scmp.ne.s32.totalorder %s82, %s83
      %p92 = scmp.eq.s32.totalorder %s30, 0
      %p93 = por %p91, %p92
      %p94 = scmp.ne.s32.totalorder %s82, %s83
      %p95 = scmp.eq.s32.totalorder %s31, 1
      %p96 = por %p94, %p95
      %p98 = scmp.ne.s32.totalorder %s83, %s97
      %p99 = scmp.eq.s32.totalorder %s31, 0
      %p100 = por %p98, %p99
      %s102 = sadd.s32 %s101, 1
      %p105 = scmp.eq.s32.totalorder %s25, 1
      %p106 = scmp.ne.s32.totalorder %s101, %s103
      %p107 = scmp.eq.s32.totalorder %s25, 0
      %p108 = por %p106, %p107
      %p109 = scmp.ne.s32.totalorder %s101, %s103
      %p110 = scmp.eq.s32.totalorder %s30, 1
      %p111 = por %p109, %p110
      %p112 = scmp.ne.s32.totalorder %s103, %s104
      %p113 = scmp.eq.s32.totalorder %s30, 0
      %p114 = por %p112, %p113
      %p115 = scmp.ne.s32.totalorder %s103, %s104
      %p116 = scmp.eq.s32.totalorder %s31, 1
      %p117 = por %p115, %p116
      %p119 = scmp.ne.s32.totalorder %s104, %s118
      %p120 = scmp.eq.s32.totalorder %s31, 0
      %p121 = por %p119, %p120
      %s123 = sadd.s32 %s122, 1
      %p126 = scmp.eq.s32.totalorder %s25, 1
      %p127 = scmp.ne.s32.totalorder %s122, %s124
      %p128 = scmp.eq.s32.totalorder %s25, 0
      %p129 = por %p127, %p128
      %p130 = scmp.ne.s32.totalorder %s122, %s124
      %p131 = scmp.eq.s32.totalorder %s30, 1
      %p132 = por %p130, %p131
      %p133 = scmp.ne.s32.totalorder %s124, %s125
      %p134 = scmp.eq.s32.totalorder %s30, 0
      %p135 = por %p133, %p134
      %p136 = scmp.ne.s32.totalorder %s124, %s125
      %p137 = scmp.eq.s32.totalorder %s31, 1
      %p138 = por %p136, %p137
      %p140 = scmp.ne.s32.totalorder %s125, %s139
      %p141 = scmp.eq.s32.totalorder %s31, 0
      %p142 = por %p140, %p141
      %s143 = ssub.s32 %s25, %s32
      %p144 = scmp.eq.s32.totalorder %s143, 0
      %s146 = sadd.s32 %s145, 1
      %s147 = scalar_select %p144, %s145, %s146
      %p150 = pneg %p144
      %p151 = scmp.eq.s32.totalorder %s25, 1
      %p152 = por %p150, %p151
      %p153 = scmp.ne.s32.totalorder %s145, %s148
      %p154 = scmp.eq.s32.totalorder %s25, 0
      %p155 = por %p153, %p154
      %p156 = scmp.ne.s32.totalorder %s145, %s148
      %p157 = scmp.eq.s32.totalorder %s30, 1
      %p158 = por %p156, %p157
      %p159 = scmp.ne.s32.totalorder %s148, %s149
      %p160 = scmp.eq.s32.totalorder %s30, 0
      %p161 = por %p159, %p160
      %p162 = scmp.ne.s32.totalorder %s148, %s149
      %p163 = scmp.eq.s32.totalorder %s31, 1
      %p164 = por %p162, %p163
      %p166 = scmp.ne.s32.totalorder %s149, %s165
      %p167 = scmp.eq.s32.totalorder %s31, 0
      %p168 = por %p166, %p167
      %s169 = ssub.s32 %s25, %s32
      %p170 = scmp.eq.s32.totalorder %s169, 0
      %s172 = sadd.s32 %s171, 1
      %s173 = scalar_select %p170, %s171, %s172
      %p176 = pneg %p170
      %p177 = scmp.eq.s32.totalorder %s25, 1
      %p178 = por %p176, %p177
      %p179 = scmp.ne.s32.totalorder %s171, %s174
      %p180 = scmp.eq.s32.totalorder %s25, 0
      %p181 = por %p179, %p180
      %p182 = scmp.ne.s32.totalorder %s171, %s174
      %p183 = scmp.eq.s32.totalorder %s30, 1
      %p184 = por %p182, %p183
      %p185 = scmp.ne.s32.totalorder %s174, %s175
      %p186 = scmp.eq.s32.totalorder %s30, 0
      %p187 = por %p185, %p186
      %p188 = scmp.ne.s32.totalorder %s174, %s175
      %p189 = scmp.eq.s32.totalorder %s31, 1
      %p190 = por %p188, %p189
      %p192 = scmp.ne.s32.totalorder %s175, %s191
      %p193 = scmp.eq.s32.totalorder %s31, 0
      %p194 = por %p192, %p193
      %s195 = ssub.s32 %s25, %s32
      %p196 = scmp.eq.s32.totalorder %s195, 0
      %s198 = sadd.s32 %s197, 1
      %s199 = scalar_select %p196, %s197, %s198
      %p202 = pneg %p196
      %p203 = scmp.eq.s32.totalorder %s25, 1
      %p204 = por %p202, %p203
      %p205 = scmp.ne.s32.totalorder %s197, %s200
      %p206 = scmp.eq.s32.totalorder %s25, 0
      %p207 = por %p205, %p206
      %p208 = scmp.ne.s32.totalorder %s197, %s200
      %p209 = scmp.eq.s32.totalorder %s30, 1
      %p210 = por %p208, %p209
      %p211 = scmp.ne.s32.totalorder %s200, %s201
      %p212 = scmp.eq.s32.totalorder %s30, 0
      %p213 = por %p211, %p212
      %p214 = scmp.ne.s32.totalorder %s200, %s201
      %p215 = scmp.eq.s32.totalorder %s31, 1
      %p216 = por %p214, %p215
      %p218 = scmp.ne.s32.totalorder %s201, %s217
      %p219 = scmp.eq.s32.totalorder %s31, 0
      %p220 = por %p218, %p219
      %p221 = scmp.le.s32.totalorder 1, %s25
      %p222 = scmp.lt.s32.totalorder %s25, 3
      %p223 = pnand %p221, %p222
      %p224 = pneg %p223
      // Predicated region
      $region9: #{tpu_custom_call.1} parent=5 // pred_check
        _
      $region10: #{tpu_custom_call.1} parent=5 // pred_check_branch
        %226 = sbr.rel (%p223) target = $region12
      $region11: #{tpu_custom_call.1} parent=5 // pred_region
        %s227 = ssub.s32 %s25, 1
        // Predicated region
        $region13: #{tpu_custom_call.1} parent=11 // pred_check
          %p228 = pneg %p72
        $region14: #{tpu_custom_call.1} parent=11 // pred_check_branch
          %230 = sbr.rel (%p228) target = $region16
        $region15: #{tpu_custom_call.1} parent=11 // pred_region
          %s232 = ssub.s32 6144, 6144
          %233 = vsyncadd [#allocation6], %s232
          %s234 = sshll.u32 [#allocation5], 4
          %s235 = int_to_ptr.vmem [resolvable:$true] %s234
          %240 = dma.hbm_to_vmem [thread:$0]  %s1, 6144, %s235, [#allocation6], 384, 384, 24
        $region16: #{tpu_custom_call.1} parent=11 // pred_fallthru
          _
        // Predicated region
        $region17: #{tpu_custom_call.1} parent=11 // pred_check
          %p241 = pneg %p93
        $region18: #{tpu_custom_call.1} parent=11 // pred_check_branch
          %243 = sbr.rel (%p241) target = $region20
        $region19: #{tpu_custom_call.1} parent=11 // pred_region
          _
        $region20: #{tpu_custom_call.1} parent=11 // pred_fallthru
          _
        // Predicated region
        $region21: #{tpu_custom_call.1} parent=11 // pred_check
          %p244 = pneg %p114
        $region22: #{tpu_custom_call.1} parent=11 // pred_check_branch
          %246 = sbr.rel (%p244) target = $region24
        $region23: #{tpu_custom_call.1} parent=11 // pred_region
          %s248 = ssub.s32 8192, 8192
          %249 = vsyncadd [#allocation6], %s248
          %s250 = sshll.u32 [#allocation7], 4
          %s251 = int_to_ptr.vmem [resolvable:$true] %s250
          %256 = dma.hbm_to_vmem [thread:$0]  %s3, 8192, %s251, [#allocation6], 128, 128, 8
        $region24: #{tpu_custom_call.1} parent=11 // pred_fallthru
          _
        // Predicated region
        $region25: #{tpu_custom_call.1} parent=11 // pred_check
          %p257 = pneg %p135
        $region26: #{tpu_custom_call.1} parent=11 // pred_check_branch
          %259 = sbr.rel (%p257) target = $region28
        $region27: #{tpu_custom_call.1} parent=11 // pred_region
          %s261 = ssub.s32 8192, 8192
          %262 = vsyncadd [#allocation9], %s261
          %s263 = sshll.u32 [#allocation8], 4
          %s264 = int_to_ptr.vmem [resolvable:$true] %s263
          %269 = dma.hbm_to_vmem [thread:$0]  %s4, 8192, %s264, [#allocation9], 128, 128, 8
        $region28: #{tpu_custom_call.1} parent=11 // pred_fallthru
          _
      $region12: #{tpu_custom_call.1} parent=5 // pred_fallthru
        _
      %p270 = scmp.lt.s32.totalorder %s25, 2
      // Predicated region
      $region29: #{tpu_custom_call.1} parent=5 // pred_check
        %p271 = pneg %p270
      $region30: #{tpu_custom_call.1} parent=5 // pred_check_branch
        %273 = sbr.rel (%p271) target = $region32
      $region31: #{tpu_custom_call.1} parent=5 // pred_region
        // Predicated region
        $region33: #{tpu_custom_call.1} parent=31 // pred_check
          %p274 = pneg %p45
        $region34: #{tpu_custom_call.1} parent=31 // pred_check_branch
          %276 = sbr.rel (%p274) target = $region36
        $region35: #{tpu_custom_call.1} parent=31 // pred_region
          %s277 = sand.u32 %s35, 1
          %s278 = scalar_lea.sflag [#allocation3], %s277
          %s279 = sand.u32 %s35, 1
          %s280 = smul.addr %s279, 512
          %s281 = scalar_lea.vmem [#allocation2], %s280
          %s282 = smul.u32 64, %s25
          %s284 = ssub.s32 8192, 8192
          %285 = vsyncadd %s278, %s284
          %s286 = smul.addr %s282, 128
          %s287 = scalar_lea.hbm %s0, %s286
          %s288 = sshll.u32 %s281, 4
          %s289 = int_to_ptr.vmem [resolvable:$true] %s288
          %294 = dma.hbm_to_vmem [thread:$0]  %s287, 8192, %s289, %s278, 128, 128, 8
        $region36: #{tpu_custom_call.1} parent=31 // pred_fallthru
          _
      $region32: #{tpu_custom_call.1} parent=5 // pred_fallthru
        _
      %p295 = scmp.le.s32.totalorder 1, %s25
      %p296 = scmp.lt.s32.totalorder %s25, 3
      %p297 = pnand %p295, %p296
      %p298 = pneg %p297
      // Predicated region
      $region37: #{tpu_custom_call.1} parent=5 // pred_check
        _
      $region38: #{tpu_custom_call.1} parent=5 // pred_check_branch
        %300 = sbr.rel (%p297) target = $region40
      $region39: #{tpu_custom_call.1} parent=5 // pred_region
        %s301 = ssub.s32 %s25, 1
        %s302 = sand.u32 %s38, 1
        %s303 = scalar_lea.sflag [#allocation3], %s302
        %s304 = sand.u32 %s38, 1
        %s305 = smul.addr %s304, 512
        %s306 = scalar_lea.vmem [#allocation2], %s305
        // Predicated region
        $region41: #{tpu_custom_call.1} parent=39 // pred_check
          %p307 = pneg %p51
        $region42: #{tpu_custom_call.1} parent=39 // pred_check_branch
          %309 = sbr.rel (%p307) target = $region44
        $region43: #{tpu_custom_call.1} parent=39 // pred_region
          %310 = dma.done %s303, 8192
        $region44: #{tpu_custom_call.1} parent=39 // pred_fallthru
          _
        // Predicated region
        $region45: #{tpu_custom_call.1} parent=39 // pred_check
          %p311 = pneg %p72
        $region46: #{tpu_custom_call.1} parent=39 // pred_check_branch
          %313 = sbr.rel (%p311) target = $region48
        $region47: #{tpu_custom_call.1} parent=39 // pred_region
          %314 = dma.done [#allocation6], 6144
        $region48: #{tpu_custom_call.1} parent=39 // pred_fallthru
          _
        // Predicated region
        $region49: #{tpu_custom_call.1} parent=39 // pred_check
          %p315 = pneg %p114
        $region50: #{tpu_custom_call.1} parent=39 // pred_check_branch
          %317 = sbr.rel (%p315) target = $region52
        $region51: #{tpu_custom_call.1} parent=39 // pred_region
          %318 = dma.done [#allocation6], 8192
        $region52: #{tpu_custom_call.1} parent=39 // pred_fallthru
          _
        // Predicated region
        $region53: #{tpu_custom_call.1} parent=39 // pred_check
          %p319 = pneg %p135
        $region54: #{tpu_custom_call.1} parent=39 // pred_check_branch
          %321 = sbr.rel (%p319) target = $region56
        $region55: #{tpu_custom_call.1} parent=39 // pred_region
          %322 = dma.done [#allocation9], 8192
        $region56: #{tpu_custom_call.1} parent=39 // pred_fallthru
          _
        %s323 = sand.u32 %s38, 1
        %s324 = scalar_lea.sflag [#allocation3], %s323
        %s325 = sand.u32 %s38, 1
        %s326 = smul.addr %s325, 512
        %s327 = scalar_lea.vmem [#allocation2], %s326
        %p328 = pneg %p51
        %p329 = pneg %p48
        %p330 = pneg %p72
        %p331 = pneg %p69
        %p332 = pneg %p93
        %p333 = pneg %p90
        %p334 = pneg %p114
        %p335 = pneg %p111
        %p336 = pneg %p135
        %p337 = pneg %p132
        %p338 = pneg %p161
        %p339 = pneg %p158
        %s340 = sand.u32 %s148, 1
        %s341 = scalar_lea.sflag [#allocation4], %s340
        %s342 = sand.u32 %s148, 1
        %s343 = smul.addr %s342, 512
        %s344 = scalar_lea.vmem [#allocation10], %s343
        %p345 = pneg %p187
        %p346 = pneg %p184
        %s347 = sand.u32 %s30, 1
        %s348 = scalar_lea.sflag [#allocation12], %s347
        %s349 = sand.u32 %s174, 1
        %s350 = smul.addr %s349, 512
        %s351 = scalar_lea.vmem [#allocation11], %s350
        %p352 = pneg %p213
        %p353 = pneg %p210
        %s354 = sand.u32 %s30, 1
        %s355 = scalar_lea.sflag [#allocation12], %s354
        %s356 = sand.u32 %s200, 1
        %s357 = smul.addr %s356, 512
        %s358 = scalar_lea.vmem [#allocation13], %s357
        %s359 = smul.u32 64, %s30
        %s360 = smul.u32 64, %s30
        %s361 = smul.u32 64, %s30
        %s362 = smul.u32 64, %s30
        %v363 = vld [vmem:[%s306] sm:$0xff]
        %v364 = vld [vmem:[%s306 + $0x8] sm:$0xff]
        %v365 = vld [vmem:[%s306 + $0x10] sm:$0xff]
        %v366 = vld [vmem:[%s306 + $0x18] sm:$0xff]
        %v367 = vld [vmem:[%s306 + $0x20] sm:$0xff]
        %v368 = vld [vmem:[%s306 + $0x28] sm:$0xff]
        %v369 = vld [vmem:[%s306 + $0x30] sm:$0xff]
        %v370 = vld [vmem:[%s306 + $0x38] sm:$0xff]
        %v371 = vld [vmem:[%s306 + $0x40] sm:$0xff]
        %v372 = vld [vmem:[%s306 + $0x48] sm:$0xff]
        %v373 = vld [vmem:[%s306 + $0x50] sm:$0xff]
        %v374 = vld [vmem:[%s306 + $0x58] sm:$0xff]
        %v375 = vld [vmem:[%s306 + $0x60] sm:$0xff]
        %v376 = vld [vmem:[%s306 + $0x68] sm:$0xff]
        %v377 = vld [vmem:[%s306 + $0x70] sm:$0xff]
        %v378 = vld [vmem:[%s306 + $0x78] sm:$0xff]
        %v379 = vld [vmem:[%s306 + $0x80] sm:$0xff]
        %v380 = vld [vmem:[%s306 + $0x88] sm:$0xff]
        %v381 = vld [vmem:[%s306 + $0x90] sm:$0xff]
        %v382 = vld [vmem:[%s306 + $0x98] sm:$0xff]
        %v383 = vld [vmem:[%s306 + $0xa0] sm:$0xff]
        %v384 = vld [vmem:[%s306 + $0xa8] sm:$0xff]
        %v385 = vld [vmem:[%s306 + $0xb0] sm:$0xff]
        %v386 = vld [vmem:[%s306 + $0xb8] sm:$0xff]
        %v387 = vld [vmem:[%s306 + $0xc0] sm:$0xff]
        %v388 = vld [vmem:[%s306 + $0xc8] sm:$0xff]
        %v389 = vld [vmem:[%s306 + $0xd0] sm:$0xff]
        %v390 = vld [vmem:[%s306 + $0xd8] sm:$0xff]
        %v391 = vld [vmem:[%s306 + $0xe0] sm:$0xff]
        %v392 = vld [vmem:[%s306 + $0xe8] sm:$0xff]
        %v393 = vld [vmem:[%s306 + $0xf0] sm:$0xff]
        %v394 = vld [vmem:[%s306 + $0xf8] sm:$0xff]
        %v395 = vld [vmem:[%s306 + $0x100] sm:$0xff]
        %v396 = vld [vmem:[%s306 + $0x108] sm:$0xff]
        %v397 = vld [vmem:[%s306 + $0x110] sm:$0xff]
        %v398 = vld [vmem:[%s306 + $0x118] sm:$0xff]
        %v399 = vld [vmem:[%s306 + $0x120] sm:$0xff]
        %v400 = vld [vmem:[%s306 + $0x128] sm:$0xff]
        %v401 = vld [vmem:[%s306 + $0x130] sm:$0xff]
        %v402 = vld [vmem:[%s306 + $0x138] sm:$0xff]
        %v403 = vld [vmem:[%s306 + $0x140] sm:$0xff]
        %v404 = vld [vmem:[%s306 + $0x148] sm:$0xff]
        %v405 = vld [vmem:[%s306 + $0x150] sm:$0xff]
        %v406 = vld [vmem:[%s306 + $0x158] sm:$0xff]
        %v407 = vld [vmem:[%s306 + $0x160] sm:$0xff]
        %v408 = vld [vmem:[%s306 + $0x168] sm:$0xff]
        %v409 = vld [vmem:[%s306 + $0x170] sm:$0xff]
        %v410 = vld [vmem:[%s306 + $0x178] sm:$0xff]
        %v411 = vld [vmem:[%s306 + $0x180] sm:$0xff]
        %v412 = vld [vmem:[%s306 + $0x188] sm:$0xff]
        %v413 = vld [vmem:[%s306 + $0x190] sm:$0xff]
        %v414 = vld [vmem:[%s306 + $0x198] sm:$0xff]
        %v415 = vld [vmem:[%s306 + $0x1a0] sm:$0xff]
        %v416 = vld [vmem:[%s306 + $0x1a8] sm:$0xff]
        %v417 = vld [vmem:[%s306 + $0x1b0] sm:$0xff]
        %v418 = vld [vmem:[%s306 + $0x1b8] sm:$0xff]
        %v419 = vld [vmem:[%s306 + $0x1c0] sm:$0xff]
        %v420 = vld [vmem:[%s306 + $0x1c8] sm:$0xff]
        %v421 = vld [vmem:[%s306 + $0x1d0] sm:$0xff]
        %v422 = vld [vmem:[%s306 + $0x1d8] sm:$0xff]
        %v423 = vld [vmem:[%s306 + $0x1e0] sm:$0xff]
        %v424 = vld [vmem:[%s306 + $0x1e8] sm:$0xff]
        %v425 = vld [vmem:[%s306 + $0x1f0] sm:$0xff]
        %v426 = vld [vmem:[%s306 + $0x1f8] sm:$0xff]
        %v427 = vld [vmem:[#allocation5] sm:$0xff]
        %v428 = vld [vmem:[#allocation5 + $0x18] sm:$0xff]
        %v429 = vld [vmem:[#allocation5 + $0x30] sm:$0xff]
        %v430 = vld [vmem:[#allocation5 + $0x48] sm:$0xff]
        %v431 = vld [vmem:[#allocation5 + $0x60] sm:$0xff]
        %v432 = vld [vmem:[#allocation5 + $0x78] sm:$0xff]
        %v433 = vld [vmem:[#allocation5 + $0x90] sm:$0xff]
        %v434 = vld [vmem:[#allocation5 + $0xa8] sm:$0xff]
        %v435 = vld [vmem:[#allocation5 + $0xc0] sm:$0xff]
        %v436 = vld [vmem:[#allocation5 + $0xd8] sm:$0xff]
        %v437 = vld [vmem:[#allocation5 + $0xf0] sm:$0xff]
        %v438 = vld [vmem:[#allocation5 + $0x108] sm:$0xff]
        %v439 = vld [vmem:[#allocation5 + $0x120] sm:$0xff]
        %v440 = vld [vmem:[#allocation5 + $0x138] sm:$0xff]
        %v441 = vld [vmem:[#allocation5 + $0x150] sm:$0xff]
        %v442 = vld [vmem:[#allocation5 + $0x168] sm:$0xff]
        %443 = vmatprep.subr.mxu0 0.0
        %444 = vmatpush1.msra.mxu0 %v442
        %445 = vmatprep.subr.mxu0 0.0
        %446 = vmatpush1.msra.mxu0 %v441
        %447 = vmatprep.subr.mxu0 0.0
        %448 = vmatpush1.msra.mxu0 %v440
        %449 = vmatprep.subr.mxu0 0.0
        %450 = vmatpush1.msra.mxu0 %v439
        %451 = vmatprep.subr.mxu0 0.0
        %452 = vmatpush1.msra.mxu0 %v438
        %453 = vmatprep.subr.mxu0 0.0
        %454 = vmatpush1.msra.mxu0 %v437
        %455 = vmatprep.subr.mxu0 0.0
        %456 = vmatpush1.msra.mxu0 %v436
        %457 = vmatprep.subr.mxu0 0.0
        %458 = vmatpush1.msra.mxu0 %v435
        %459 = vmatprep.subr.mxu0 0.0
        %460 = vmatpush1.msra.mxu0 %v434
        %461 = vmatprep.subr.mxu0 0.0
        %462 = vmatpush1.msra.mxu0 %v433
        %463 = vmatprep.subr.mxu0 0.0
        %464 = vmatpush1.msra.mxu0 %v432
        %465 = vmatprep.subr.mxu0 0.0
        %466 = vmatpush1.msra.mxu0 %v431
        %467 = vmatprep.subr.mxu0 0.0
        %468 = vmatpush1.msra.mxu0 %v430
        %469 = vmatprep.subr.mxu0 0.0
        %470 = vmatpush1.msra.mxu0 %v429
        %471 = vmatprep.subr.mxu0 0.0
        %472 = vmatpush1.msra.mxu0 %v428
        %473 = vmatprep.subr.mxu0 0.0
        %474 = vmatpush1.msra.mxu0 %v427
        %475 = vmatprep.subr.mxu0 0.0
        %476 = vmatpush2.msra.mxu0 0.0
        %477 = vmatprep.subr.mxu0 0.0
        %478 = vmatpush2.msra.mxu0 0.0
        %479 = vmatprep.subr.mxu0 0.0
        %480 = vmatpush2.msra.mxu0 0.0
        %481 = vmatprep.subr.mxu0 0.0
        %482 = vmatpush2.msra.mxu0 0.0
        %483 = vmatprep.subr.mxu0 0.0
        %484 = vmatpush2.msra.mxu0 0.0
        %485 = vmatprep.subr.mxu0 0.0
        %486 = vmatpush2.msra.mxu0 0.0
        %487 = vmatprep.subr.mxu0 0.0
        %488 = vmatpush2.msra.mxu0 0.0
        %489 = vmatprep.subr.mxu0 0.0
        %490 = vmatpush2.msra.mxu0 0.0
        %491 = vmatprep.subr.mxu0 0.0
        %492 = vmatpush2.msra.mxu0 0.0
        %493 = vmatprep.subr.mxu0 0.0
        %494 = vmatpush2.msra.mxu0 0.0
        %495 = vmatprep.subr.mxu0 0.0
        %496 = vmatpush2.msra.mxu0 0.0
        %497 = vmatprep.subr.mxu0 0.0
        %498 = vmatpush2.msra.mxu0 0.0
        %499 = vmatprep.subr.mxu0 0.0
        %500 = vmatpush2.msra.mxu0 0.0
        %501 = vmatprep.subr.mxu0 0.0
        %502 = vmatpush2.msra.mxu0 0.0
        %503 = vmatprep.subr.mxu0 0.0
        %504 = vmatpush2.msra.mxu0 0.0
        %505 = vmatprep.subr.mxu0 0.0
        %506 = vmatpush2.msra.mxu0 0.0
        %507 = vmatprep.mubr.f32.mxu0 0.0
        %508 = vmatmul.mubr.f32.gmra.mxu0 %v363
        %v509 = vpop.f32.mrf.mxu0
        %v510 = vadd.f32 0.0, %v509
        %v511 = vpop.f32.mrf.mxu0
        %512 = vmatprep.mubr.f32.mxu0 0.0
        %513 = vmatmul.mubr.f32.gmra.mxu0 %v364
        %v514 = vpop.f32.mrf.mxu0
        %v515 = vadd.f32 0.0, %v514
        %v516 = vpop.f32.mrf.mxu0
        %517 = vmatprep.mubr.f32.mxu0 0.0
        %518 = vmatmul.mubr.f32.gmra.mxu0 %v365
        %v519 = vpop.f32.mrf.mxu0
        %v520 = vadd.f32 0.0, %v519
        %v521 = vpop.f32.mrf.mxu0
        %522 = vmatprep.mubr.f32.mxu0 0.0
        %523 = vmatmul.mubr.f32.gmra.mxu0 %v366
        %v524 = vpop.f32.mrf.mxu0
        %v525 = vadd.f32 0.0, %v524
        %v526 = vpop.f32.mrf.mxu0
        %527 = vmatprep.mubr.f32.mxu0 0.0
        %528 = vmatmul.mubr.f32.gmra.mxu0 %v367
        %v529 = vpop.f32.mrf.mxu0
        %v530 = vadd.f32 0.0, %v529
        %v531 = vpop.f32.mrf.mxu0
        %532 = vmatprep.mubr.f32.mxu0 0.0
        %533 = vmatmul.mubr.f32.gmra.mxu0 %v368
        %v534 = vpop.f32.mrf.mxu0
        %v535 = vadd.f32 0.0, %v534
        %v536 = vpop.f32.mrf.mxu0
        %537 = vmatprep.mubr.f32.mxu0 0.0
        %538 = vmatmul.mubr.f32.gmra.mxu0 %v369
        %v539 = vpop.f32.mrf.mxu0
        %v540 = vadd.f32 0.0, %v539
        %v541 = vpop.f32.mrf.mxu0
        %542 = vmatprep.mubr.f32.mxu0 0.0
        %543 = vmatmul.mubr.f32.gmra.mxu0 %v370
        %v544 = vpop.f32.mrf.mxu0
        %v545 = vadd.f32 0.0, %v544
        %v546 = vpop.f32.mrf.mxu0
        %547 = vmatprep.mubr.f32.mxu0 0.0
        %548 = vmatmul.mubr.f32.gmra.mxu0 %v371
        %v549 = vpop.f32.mrf.mxu0
        %v550 = vadd.f32 0.0, %v549
        %v551 = vpop.f32.mrf.mxu0
        %552 = vmatprep.mubr.f32.mxu0 0.0
        %553 = vmatmul.mubr.f32.gmra.mxu0 %v372
        %v554 = vpop.f32.mrf.mxu0
        %v555 = vadd.f32 0.0, %v554
        %v556 = vpop.f32.mrf.mxu0
        %557 = vmatprep.mubr.f32.mxu0 0.0
        %558 = vmatmul.mubr.f32.gmra.mxu0 %v373
        %v559 = vpop.f32.mrf.mxu0
        %v560 = vadd.f32 0.0, %v559
        %v561 = vpop.f32.mrf.mxu0
        %562 = vmatprep.mubr.f32.mxu0 0.0
        %563 = vmatmul.mubr.f32.gmra.mxu0 %v374
        %v564 = vpop.f32.mrf.mxu0
        %v565 = vadd.f32 0.0, %v564
        %v566 = vpop.f32.mrf.mxu0
        %567 = vmatprep.mubr.f32.mxu0 0.0
        %568 = vmatmul.mubr.f32.gmra.mxu0 %v375
        %v569 = vpop.f32.mrf.mxu0
        %v570 = vadd.f32 0.0, %v569
        %v571 = vpop.f32.mrf.mxu0
        %572 = vmatprep.mubr.f32.mxu0 0.0
        %573 = vmatmul.mubr.f32.gmra.mxu0 %v376
        %v574 = vpop.f32.mrf.mxu0
        %v575 = vadd.f32 0.0, %v574
        %v576 = vpop.f32.mrf.mxu0
        %577 = vmatprep.mubr.f32.mxu0 0.0
        %578 = vmatmul.mubr.f32.gmra.mxu0 %v377
        %v579 = vpop.f32.mrf.mxu0
        %v580 = vadd.f32 0.0, %v579
        %v581 = vpop.f32.mrf.mxu0
        %582 = vmatprep.mubr.f32.mxu0 0.0
        %583 = vmatmul.mubr.f32.gmra.mxu0 %v378
        %v584 = vpop.f32.mrf.mxu0
        %v585 = vadd.f32 0.0, %v584
        %v586 = vpop.f32.mrf.mxu0
        %587 = vmatprep.mubr.f32.mxu0 0.0
        %588 = vmatmul.mubr.f32.gmra.mxu0 %v379
        %v589 = vpop.f32.mrf.mxu0
        %v590 = vadd.f32 0.0, %v589
        %v591 = vpop.f32.mrf.mxu0
        %592 = vmatprep.mubr.f32.mxu0 0.0
        %593 = vmatmul.mubr.f32.gmra.mxu0 %v380
        %v594 = vpop.f32.mrf.mxu0
        %v595 = vadd.f32 0.0, %v594
        %v596 = vpop.f32.mrf.mxu0
        %597 = vmatprep.mubr.f32.mxu0 0.0
        %598 = vmatmul.mubr.f32.gmra.mxu0 %v381
        %v599 = vpop.f32.mrf.mxu0
        %v600 = vadd.f32 0.0, %v599
        %v601 = vpop.f32.mrf.mxu0
        %602 = vmatprep.mubr.f32.mxu0 0.0
        %603 = vmatmul.mubr.f32.gmra.mxu0 %v382
        %v604 = vpop.f32.mrf.mxu0
        %v605 = vadd.f32 0.0, %v604
        %v606 = vpop.f32.mrf.mxu0
        %607 = vmatprep.mubr.f32.mxu0 0.0
        %608 = vmatmul.mubr.f32.gmra.mxu0 %v383
        %v609 = vpop.f32.mrf.mxu0
        %v610 = vadd.f32 0.0, %v609
        %v611 = vpop.f32.mrf.mxu0
        %612 = vmatprep.mubr.f32.mxu0 0.0
        %613 = vmatmul.mubr.f32.gmra.mxu0 %v384
        %v614 = vpop.f32.mrf.mxu0
        %v615 = vadd.f32 0.0, %v614
        %v616 = vpop.f32.mrf.mxu0
        %617 = vmatprep.mubr.f32.mxu0 0.0
        %618 = vmatmul.mubr.f32.gmra.mxu0 %v385
        %v619 = vpop.f32.mrf.mxu0
        %v620 = vadd.f32 0.0, %v619
        %v621 = vpop.f32.mrf.mxu0
        %622 = vmatprep.mubr.f32.mxu0 0.0
        %623 = vmatmul.mubr.f32.gmra.mxu0 %v386
        %v624 = vpop.f32.mrf.mxu0
        %v625 = vadd.f32 0.0, %v624
        %v626 = vpop.f32.mrf.mxu0
        %627 = vmatprep.mubr.f32.mxu0 0.0
        %628 = vmatmul.mubr.f32.gmra.mxu0 %v387
        %v629 = vpop.f32.mrf.mxu0
        %v630 = vadd.f32 0.0, %v629
        %v631 = vpop.f32.mrf.mxu0
        %632 = vmatprep.mubr.f32.mxu0 0.0
        %633 = vmatmul.mubr.f32.gmra.mxu0 %v388
        %v634 = vpop.f32.mrf.mxu0
        %v635 = vadd.f32 0.0, %v634
        %v636 = vpop.f32.mrf.mxu0
        %637 = vmatprep.mubr.f32.mxu0 0.0
        %638 = vmatmul.mubr.f32.gmra.mxu0 %v389
        %v639 = vpop.f32.mrf.mxu0
        %v640 = vadd.f32 0.0, %v639
        %v641 = vpop.f32.mrf.mxu0
        %642 = vmatprep.mubr.f32.mxu0 0.0
        %643 = vmatmul.mubr.f32.gmra.mxu0 %v390
        %v644 = vpop.f32.mrf.mxu0
        %v645 = vadd.f32 0.0, %v644
        %v646 = vpop.f32.mrf.mxu0
        %647 = vmatprep.mubr.f32.mxu0 0.0
        %648 = vmatmul.mubr.f32.gmra.mxu0 %v391
        %v649 = vpop.f32.mrf.mxu0
        %v650 = vadd.f32 0.0, %v649
        %v651 = vpop.f32.mrf.mxu0
        %652 = vmatprep.mubr.f32.mxu0 0.0
        %653 = vmatmul.mubr.f32.gmra.mxu0 %v392
        %v654 = vpop.f32.mrf.mxu0
        %v655 = vadd.f32 0.0, %v654
        %v656 = vpop.f32.mrf.mxu0
        %657 = vmatprep.mubr.f32.mxu0 0.0
        %658 = vmatmul.mubr.f32.gmra.mxu0 %v393
        %v659 = vpop.f32.mrf.mxu0
        %v660 = vadd.f32 0.0, %v659
        %v661 = vpop.f32.mrf.mxu0
        %662 = vmatprep.mubr.f32.mxu0 0.0
        %663 = vmatmul.mubr.f32.gmra.mxu0 %v394
        %v664 = vpop.f32.mrf.mxu0
        %v665 = vadd.f32 0.0, %v664
        %v666 = vpop.f32.mrf.mxu0
        %667 = vmatprep.mubr.f32.mxu0 0.0
        %668 = vmatmul.mubr.f32.gmra.mxu0 %v395
        %v669 = vpop.f32.mrf.mxu0
        %v670 = vadd.f32 0.0, %v669
        %v671 = vpop.f32.mrf.mxu0
        %672 = vmatprep.mubr.f32.mxu0 0.0
        %673 = vmatmul.mubr.f32.gmra.mxu0 %v396
        %v674 = vpop.f32.mrf.mxu0
        %v675 = vadd.f32 0.0, %v674
        %v676 = vpop.f32.mrf.mxu0
        %677 = vmatprep.mubr.f32.mxu0 0.0
        %678 = vmatmul.mubr.f32.gmra.mxu0 %v397
        %v679 = vpop.f32.mrf.mxu0
        %v680 = vadd.f32 0.0, %v679
        %v681 = vpop.f32.mrf.mxu0
        %682 = vmatprep.mubr.f32.mxu0 0.0
        %683 = vmatmul.mubr.f32.gmra.mxu0 %v398
        %v684 = vpop.f32.mrf.mxu0
        %v685 = vadd.f32 0.0, %v684
        %v686 = vpop.f32.mrf.mxu0
        %687 = vmatprep.mubr.f32.mxu0 0.0
        %688 = vmatmul.mubr.f32.gmra.mxu0 %v399
        %v689 = vpop.f32.mrf.mxu0
        %v690 = vadd.f32 0.0, %v689
        %v691 = vpop.f32.mrf.mxu0
        %692 = vmatprep.mubr.f32.mxu0 0.0
        %693 = vmatmul.mubr.f32.gmra.mxu0 %v400
        %v694 = vpop.f32.mrf.mxu0
        %v695 = vadd.f32 0.0, %v694
        %v696 = vpop.f32.mrf.mxu0
        %697 = vmatprep.mubr.f32.mxu0 0.0
        %698 = vmatmul.mubr.f32.gmra.mxu0 %v401
        %v699 = vpop.f32.mrf.mxu0
        %v700 = vadd.f32 0.0, %v699
        %v701 = vpop.f32.mrf.mxu0
        %702 = vmatprep.mubr.f32.mxu0 0.0
        %703 = vmatmul.mubr.f32.gmra.mxu0 %v402
        %v704 = vpop.f32.mrf.mxu0
        %v705 = vadd.f32 0.0, %v704
        %v706 = vpop.f32.mrf.mxu0
        %707 = vmatprep.mubr.f32.mxu0 0.0
        %708 = vmatmul.mubr.f32.gmra.mxu0 %v403
        %v709 = vpop.f32.mrf.mxu0
        %v710 = vadd.f32 0.0, %v709
        %v711 = vpop.f32.mrf.mxu0
        %712 = vmatprep.mubr.f32.mxu0 0.0
        %713 = vmatmul.mubr.f32.gmra.mxu0 %v404
        %v714 = vpop.f32.mrf.mxu0
        %v715 = vadd.f32 0.0, %v714
        %v716 = vpop.f32.mrf.mxu0
        %717 = vmatprep.mubr.f32.mxu0 0.0
        %718 = vmatmul.mubr.f32.gmra.mxu0 %v405
        %v719 = vpop.f32.mrf.mxu0
        %v720 = vadd.f32 0.0, %v719
        %v721 = vpop.f32.mrf.mxu0
        %722 = vmatprep.mubr.f32.mxu0 0.0
        %723 = vmatmul.mubr.f32.gmra.mxu0 %v406
        %v724 = vpop.f32.mrf.mxu0
        %v725 = vadd.f32 0.0, %v724
        %v726 = vpop.f32.mrf.mxu0
        %727 = vmatprep.mubr.f32.mxu0 0.0
        %728 = vmatmul.mubr.f32.gmra.mxu0 %v407
        %v729 = vpop.f32.mrf.mxu0
        %v730 = vadd.f32 0.0, %v729
        %v731 = vpop.f32.mrf.mxu0
        %732 = vmatprep.mubr.f32.mxu0 0.0
        %733 = vmatmul.mubr.f32.gmra.mxu0 %v408
        %v734 = vpop.f32.mrf.mxu0
        %v735 = vadd.f32 0.0, %v734
        %v736 = vpop.f32.mrf.mxu0
        %737 = vmatprep.mubr.f32.mxu0 0.0
        %738 = vmatmul.mubr.f32.gmra.mxu0 %v409
        %v739 = vpop.f32.mrf.mxu0
        %v740 = vadd.f32 0.0, %v739
        %v741 = vpop.f32.mrf.mxu0
        %742 = vmatprep.mubr.f32.mxu0 0.0
        %743 = vmatmul.mubr.f32.gmra.mxu0 %v410
        %v744 = vpop.f32.mrf.mxu0
        %v745 = vadd.f32 0.0, %v744
        %v746 = vpop.f32.mrf.mxu0
        %747 = vmatprep.mubr.f32.mxu0 0.0
        %748 = vmatmul.mubr.f32.gmra.mxu0 %v411
        %v749 = vpop.f32.mrf.mxu0
        %v750 = vadd.f32 0.0, %v749
        %v751 = vpop.f32.mrf.mxu0
        %752 = vmatprep.mubr.f32.mxu0 0.0
        %753 = vmatmul.mubr.f32.gmra.mxu0 %v412
        %v754 = vpop.f32.mrf.mxu0
        %v755 = vadd.f32 0.0, %v754
        %v756 = vpop.f32.mrf.mxu0
        %757 = vmatprep.mubr.f32.mxu0 0.0
        %758 = vmatmul.mubr.f32.gmra.mxu0 %v413
        %v759 = vpop.f32.mrf.mxu0
        %v760 = vadd.f32 0.0, %v759
        %v761 = vpop.f32.mrf.mxu0
        %762 = vmatprep.mubr.f32.mxu0 0.0
        %763 = vmatmul.mubr.f32.gmra.mxu0 %v414
        %v764 = vpop.f32.mrf.mxu0
        %v765 = vadd.f32 0.0, %v764
        %v766 = vpop.f32.mrf.mxu0
        %767 = vmatprep.mubr.f32.mxu0 0.0
        %768 = vmatmul.mubr.f32.gmra.mxu0 %v415
        %v769 = vpop.f32.mrf.mxu0
        %v770 = vadd.f32 0.0, %v769
        %v771 = vpop.f32.mrf.mxu0
        %772 = vmatprep.mubr.f32.mxu0 0.0
        %773 = vmatmul.mubr.f32.gmra.mxu0 %v416
        %v774 = vpop.f32.mrf.mxu0
        %v775 = vadd.f32 0.0, %v774
        %v776 = vpop.f32.mrf.mxu0
        %777 = vmatprep.mubr.f32.mxu0 0.0
        %778 = vmatmul.mubr.f32.gmra.mxu0 %v417
        %v779 = vpop.f32.mrf.mxu0
        %v780 = vadd.f32 0.0, %v779
        %v781 = vpop.f32.mrf.mxu0
        %782 = vmatprep.mubr.f32.mxu0 0.0
        %783 = vmatmul.mubr.f32.gmra.mxu0 %v418
        %v784 = vpop.f32.mrf.mxu0
        %v785 = vadd.f32 0.0, %v784
        %v786 = vpop.f32.mrf.mxu0
        %787 = vmatprep.mubr.f32.mxu0 0.0
        %788 = vmatmul.mubr.f32.gmra.mxu0 %v419
        %v789 = vpop.f32.mrf.mxu0
        %v790 = vadd.f32 0.0, %v789
        %v791 = vpop.f32.mrf.mxu0
        %792 = vmatprep.mubr.f32.mxu0 0.0
        %793 = vmatmul.mubr.f32.gmra.mxu0 %v420
        %v794 = vpop.f32.mrf.mxu0
        %v795 = vadd.f32 0.0, %v794
        %v796 = vpop.f32.mrf.mxu0
        %797 = vmatprep.mubr.f32.mxu0 0.0
        %798 = vmatmul.mubr.f32.gmra.mxu0 %v421
        %v799 = vpop.f32.mrf.mxu0
        %v800 = vadd.f32 0.0, %v799
        %v801 = vpop.f32.mrf.mxu0
        %802 = vmatprep.mubr.f32.mxu0 0.0
        %803 = vmatmul.mubr.f32.gmra.mxu0 %v422
        %v804 = vpop.f32.mrf.mxu0
        %v805 = vadd.f32 0.0, %v804
        %v806 = vpop.f32.mrf.mxu0
        %807 = vmatprep.mubr.f32.mxu0 0.0
        %808 = vmatmul.mubr.f32.gmra.mxu0 %v423
        %v809 = vpop.f32.mrf.mxu0
        %v810 = vadd.f32 0.0, %v809
        %v811 = vpop.f32.mrf.mxu0
        %812 = vmatprep.mubr.f32.mxu0 0.0
        %813 = vmatmul.mubr.f32.gmra.mxu0 %v424
        %v814 = vpop.f32.mrf.mxu0
        %v815 = vadd.f32 0.0, %v814
        %v816 = vpop.f32.mrf.mxu0
        %817 = vmatprep.mubr.f32.mxu0 0.0
        %818 = vmatmul.mubr.f32.gmra.mxu0 %v425
        %v819 = vpop.f32.mrf.mxu0
        %v820 = vadd.f32 0.0, %v819
        %v821 = vpop.f32.mrf.mxu0
        %822 = vmatprep.mubr.f32.mxu0 0.0
        %823 = vmatmul.mubr.f32.gmra.mxu0 %v426
        %v824 = vpop.f32.mrf.mxu0
        %v825 = vadd.f32 0.0, %v824
        %v826 = vpop.f32.mrf.mxu0
        %827 = vdwg.mxu0
        %v828 = vld [vmem:[#allocation5 + $0x8] sm:$0xff]
        %v829 = vld [vmem:[#allocation5 + $0x20] sm:$0xff]
        %v830 = vld [vmem:[#allocation5 + $0x38] sm:$0xff]
        %v831 = vld [vmem:[#allocation5 + $0x50] sm:$0xff]
        %v832 = vld [vmem:[#allocation5 + $0x68] sm:$0xff]
        %v833 = vld [vmem:[#allocation5 + $0x80] sm:$0xff]
        %v834 = vld [vmem:[#allocation5 + $0x98] sm:$0xff]
        %v835 = vld [vmem:[#allocation5 + $0xb0] sm:$0xff]
        %v836 = vld [vmem:[#allocation5 + $0xc8] sm:$0xff]
        %v837 = vld [vmem:[#allocation5 + $0xe0] sm:$0xff]
        %v838 = vld [vmem:[#allocation5 + $0xf8] sm:$0xff]
        %v839 = vld [vmem:[#allocation5 + $0x110] sm:$0xff]
        %v840 = vld [vmem:[#allocation5 + $0x128] sm:$0xff]
        %v841 = vld [vmem:[#allocation5 + $0x140] sm:$0xff]
        %v842 = vld [vmem:[#allocation5 + $0x158] sm:$0xff]
        %v843 = vld [vmem:[#allocation5 + $0x170] sm:$0xff]
        %844 = vmatprep.subr.mxu0 0.0
        %845 = vmatpush1.msra.mxu0 %v843
        %846 = vmatprep.subr.mxu0 0.0
        %847 = vmatpush1.msra.mxu0 %v842
        %848 = vmatprep.subr.mxu0 0.0
        %849 = vmatpush1.msra.mxu0 %v841
        %850 = vmatprep.subr.mxu0 0.0
        %851 = vmatpush1.msra.mxu0 %v840
        %852 = vmatprep.subr.mxu0 0.0
        %853 = vmatpush1.msra.mxu0 %v839
        %854 = vmatprep.subr.mxu0 0.0
        %855 = vmatpush1.msra.mxu0 %v838
        %856 = vmatprep.subr.mxu0 0.0
        %857 = vmatpush1.msra.mxu0 %v837
        %858 = vmatprep.subr.mxu0 0.0
        %859 = vmatpush1.msra.mxu0 %v836
        %860 = vmatprep.subr.mxu0 0.0
        %861 = vmatpush1.msra.mxu0 %v835
        %862 = vmatprep.subr.mxu0 0.0
        %863 = vmatpush1.msra.mxu0 %v834
        %864 = vmatprep.subr.mxu0 0.0
        %865 = vmatpush1.msra.mxu0 %v833
        %866 = vmatprep.subr.mxu0 0.0
        %867 = vmatpush1.msra.mxu0 %v832
        %868 = vmatprep.subr.mxu0 0.0
        %869 = vmatpush1.msra.mxu0 %v831
        %870 = vmatprep.subr.mxu0 0.0
        %871 = vmatpush1.msra.mxu0 %v830
        %872 = vmatprep.subr.mxu0 0.0
        %873 = vmatpush1.msra.mxu0 %v829
        %874 = vmatprep.subr.mxu0 0.0
        %875 = vmatpush1.msra.mxu0 %v828
        %876 = vmatprep.subr.mxu0 0.0
        %877 = vmatpush2.msra.mxu0 0.0
        %878 = vmatprep.subr.mxu0 0.0
        %879 = vmatpush2.msra.mxu0 0.0
        %880 = vmatprep.subr.mxu0 0.0
        %881 = vmatpush2.msra.mxu0 0.0
        %882 = vmatprep.subr.mxu0 0.0
        %883 = vmatpush2.msra.mxu0 0.0
        %884 = vmatprep.subr.mxu0 0.0
        %885 = vmatpush2.msra.mxu0 0.0
        %886 = vmatprep.subr.mxu0 0.0
        %887 = vmatpush2.msra.mxu0 0.0
        %888 = vmatprep.subr.mxu0 0.0
        %889 = vmatpush2.msra.mxu0 0.0
        %890 = vmatprep.subr.mxu0 0.0
        %891 = vmatpush2.msra.mxu0 0.0
        %892 = vmatprep.subr.mxu0 0.0
        %893 = vmatpush2.msra.mxu0 0.0
        %894 = vmatprep.subr.mxu0 0.0
        %895 = vmatpush2.msra.mxu0 0.0
        %896 = vmatprep.subr.mxu0 0.0
        %897 = vmatpush2.msra.mxu0 0.0
        %898 = vmatprep.subr.mxu0 0.0
        %899 = vmatpush2.msra.mxu0 0.0
        %900 = vmatprep.subr.mxu0 0.0
        %901 = vmatpush2.msra.mxu0 0.0
        %902 = vmatprep.subr.mxu0 0.0
        %903 = vmatpush2.msra.mxu0 0.0
        %904 = vmatprep.subr.mxu0 0.0
        %905 = vmatpush2.msra.mxu0 0.0
        %906 = vmatprep.subr.mxu0 0.0
        %907 = vmatpush2.msra.mxu0 0.0
        %908 = vmatprep.mubr.f32.mxu0 0.0
        %909 = vmatmul.mubr.f32.gmra.mxu0 %v363
        %v910 = vpop.f32.mrf.mxu0
        %v911 = vadd.f32 0.0, %v910
        %v912 = vpop.f32.mrf.mxu0
        %913 = vmatprep.mubr.f32.mxu0 0.0
        %914 = vmatmul.mubr.f32.gmra.mxu0 %v364
        %v915 = vpop.f32.mrf.mxu0
        %v916 = vadd.f32 0.0, %v915
        %v917 = vpop.f32.mrf.mxu0
        %918 = vmatprep.mubr.f32.mxu0 0.0
        %919 = vmatmul.mubr.f32.gmra.mxu0 %v365
        %v920 = vpop.f32.mrf.mxu0
        %v921 = vadd.f32 0.0, %v920
        %v922 = vpop.f32.mrf.mxu0
        %923 = vmatprep.mubr.f32.mxu0 0.0
        %924 = vmatmul.mubr.f32.gmra.mxu0 %v366
        %v925 = vpop.f32.mrf.mxu0
        %v926 = vadd.f32 0.0, %v925
        %v927 = vpop.f32.mrf.mxu0
        %928 = vmatprep.mubr.f32.mxu0 0.0
        %929 = vmatmul.mubr.f32.gmra.mxu0 %v367
        %v930 = vpop.f32.mrf.mxu0
        %v931 = vadd.f32 0.0, %v930
        %v932 = vpop.f32.mrf.mxu0
        %933 = vmatprep.mubr.f32.mxu0 0.0
        %934 = vmatmul.mubr.f32.gmra.mxu0 %v368
        %v935 = vpop.f32.mrf.mxu0
        %v936 = vadd.f32 0.0, %v935
        %v937 = vpop.f32.mrf.mxu0
        %938 = vmatprep.mubr.f32.mxu0 0.0
        %939 = vmatmul.mubr.f32.gmra.mxu0 %v369
        %v940 = vpop.f32.mrf.mxu0
        %v941 = vadd.f32 0.0, %v940
        %v942 = vpop.f32.mrf.mxu0
        %943 = vmatprep.mubr.f32.mxu0 0.0
        %944 = vmatmul.mubr.f32.gmra.mxu0 %v370
        %v945 = vpop.f32.mrf.mxu0
        %v946 = vadd.f32 0.0, %v945
        %v947 = vpop.f32.mrf.mxu0
        %948 = vmatprep.mubr.f32.mxu0 0.0
        %949 = vmatmul.mubr.f32.gmra.mxu0 %v371
        %v950 = vpop.f32.mrf.mxu0
        %v951 = vadd.f32 0.0, %v950
        %v952 = vpop.f32.mrf.mxu0
        %953 = vmatprep.mubr.f32.mxu0 0.0
        %954 = vmatmul.mubr.f32.gmra.mxu0 %v372
        %v955 = vpop.f32.mrf.mxu0
        %v956 = vadd.f32 0.0, %v955
        %v957 = vpop.f32.mrf.mxu0
        %958 = vmatprep.mubr.f32.mxu0 0.0
        %959 = vmatmul.mubr.f32.gmra.mxu0 %v373
        %v960 = vpop.f32.mrf.mxu0
        %v961 = vadd.f32 0.0, %v960
        %v962 = vpop.f32.mrf.mxu0
        %963 = vmatprep.mubr.f32.mxu0 0.0
        %964 = vmatmul.mubr.f32.gmra.mxu0 %v374
        %v965 = vpop.f32.mrf.mxu0
        %v966 = vadd.f32 0.0, %v965
        %v967 = vpop.f32.mrf.mxu0
        %968 = vmatprep.mubr.f32.mxu0 0.0
        %969 = vmatmul.mubr.f32.gmra.mxu0 %v375
        %v970 = vpop.f32.mrf.mxu0
        %v971 = vadd.f32 0.0, %v970
        %v972 = vpop.f32.mrf.mxu0
        %973 = vmatprep.mubr.f32.mxu0 0.0
        %974 = vmatmul.mubr.f32.gmra.mxu0 %v376
        %v975 = vpop.f32.mrf.mxu0
        %v976 = vadd.f32 0.0, %v975
        %v977 = vpop.f32.mrf.mxu0
        %978 = vmatprep.mubr.f32.mxu0 0.0
        %979 = vmatmul.mubr.f32.gmra.mxu0 %v377
        %v980 = vpop.f32.mrf.mxu0
        %v981 = vadd.f32 0.0, %v980
        %v982 = vpop.f32.mrf.mxu0
        %983 = vmatprep.mubr.f32.mxu0 0.0
        %984 = vmatmul.mubr.f32.gmra.mxu0 %v378
        %v985 = vpop.f32.mrf.mxu0
        %v986 = vadd.f32 0.0, %v985
        %v987 = vpop.f32.mrf.mxu0
        %988 = vmatprep.mubr.f32.mxu0 0.0
        %989 = vmatmul.mubr.f32.gmra.mxu0 %v379
        %v990 = vpop.f32.mrf.mxu0
        %v991 = vadd.f32 0.0, %v990
        %v992 = vpop.f32.mrf.mxu0
        %993 = vmatprep.mubr.f32.mxu0 0.0
        %994 = vmatmul.mubr.f32.gmra.mxu0 %v380
        %v995 = vpop.f32.mrf.mxu0
        %v996 = vadd.f32 0.0, %v995
        %v997 = vpop.f32.mrf.mxu0
        %998 = vmatprep.mubr.f32.mxu0 0.0
        %999 = vmatmul.mubr.f32.gmra.mxu0 %v381
        %v1000 = vpop.f32.mrf.mxu0
        %v1001 = vadd.f32 0.0, %v1000
        %v1002 = vpop.f32.mrf.mxu0
        %1003 = vmatprep.mubr.f32.mxu0 0.0
        %1004 = vmatmul.mubr.f32.gmra.mxu0 %v382
        %v1005 = vpop.f32.mrf.mxu0
        %v1006 = vadd.f32 0.0, %v1005
        %v1007 = vpop.f32.mrf.mxu0
        %1008 = vmatprep.mubr.f32.mxu0 0.0
        %1009 = vmatmul.mubr.f32.gmra.mxu0 %v383
        %v1010 = vpop.f32.mrf.mxu0
        %v1011 = vadd.f32 0.0, %v1010
        %v1012 = vpop.f32.mrf.mxu0
        %1013 = vmatprep.mubr.f32.mxu0 0.0
        %1014 = vmatmul.mubr.f32.gmra.mxu0 %v384
        %v1015 = vpop.f32.mrf.mxu0
        %v1016 = vadd.f32 0.0, %v1015
        %v1017 = vpop.f32.mrf.mxu0
        %1018 = vmatprep.mubr.f32.mxu0 0.0
        %1019 = vmatmul.mubr.f32.gmra.mxu0 %v385
        %v1020 = vpop.f32.mrf.mxu0
        %v1021 = vadd.f32 0.0, %v1020
        %v1022 = vpop.f32.mrf.mxu0
        %1023 = vmatprep.mubr.f32.mxu0 0.0
        %1024 = vmatmul.mubr.f32.gmra.mxu0 %v386
        %v1025 = vpop.f32.mrf.mxu0
        %v1026 = vadd.f32 0.0, %v1025
        %v1027 = vpop.f32.mrf.mxu0
        %1028 = vmatprep.mubr.f32.mxu0 0.0
        %1029 = vmatmul.mubr.f32.gmra.mxu0 %v387
        %v1030 = vpop.f32.mrf.mxu0
        %v1031 = vadd.f32 0.0, %v1030
        %v1032 = vpop.f32.mrf.mxu0
        %1033 = vmatprep.mubr.f32.mxu0 0.0
        %1034 = vmatmul.mubr.f32.gmra.mxu0 %v388
        %v1035 = vpop.f32.mrf.mxu0
        %v1036 = vadd.f32 0.0, %v1035
        %v1037 = vpop.f32.mrf.mxu0
        %1038 = vmatprep.mubr.f32.mxu0 0.0
        %1039 = vmatmul.mubr.f32.gmra.mxu0 %v389
        %v1040 = vpop.f32.mrf.mxu0
        %v1041 = vadd.f32 0.0, %v1040
        %v1042 = vpop.f32.mrf.mxu0
        %1043 = vmatprep.mubr.f32.mxu0 0.0
        %1044 = vmatmul.mubr.f32.gmra.mxu0 %v390
        %v1045 = vpop.f32.mrf.mxu0
        %v1046 = vadd.f32 0.0, %v1045
        %v1047 = vpop.f32.mrf.mxu0
        %1048 = vmatprep.mubr.f32.mxu0 0.0
        %1049 = vmatmul.mubr.f32.gmra.mxu0 %v391
        %v1050 = vpop.f32.mrf.mxu0
        %v1051 = vadd.f32 0.0, %v1050
        %v1052 = vpop.f32.mrf.mxu0
        %1053 = vmatprep.mubr.f32.mxu0 0.0
        %1054 = vmatmul.mubr.f32.gmra.mxu0 %v392
        %v1055 = vpop.f32.mrf.mxu0
        %v1056 = vadd.f32 0.0, %v1055
        %v1057 = vpop.f32.mrf.mxu0
        %1058 = vmatprep.mubr.f32.mxu0 0.0
        %1059 = vmatmul.mubr.f32.gmra.mxu0 %v393
        %v1060 = vpop.f32.mrf.mxu0
        %v1061 = vadd.f32 0.0, %v1060
        %v1062 = vpop.f32.mrf.mxu0
        %1063 = vmatprep.mubr.f32.mxu0 0.0
        %1064 = vmatmul.mubr.f32.gmra.mxu0 %v394
        %v1065 = vpop.f32.mrf.mxu0
        %v1066 = vadd.f32 0.0, %v1065
        %v1067 = vpop.f32.mrf.mxu0
        %1068 = vmatprep.mubr.f32.mxu0 0.0
        %1069 = vmatmul.mubr.f32.gmra.mxu0 %v395
        %v1070 = vpop.f32.mrf.mxu0
        %v1071 = vadd.f32 0.0, %v1070
        %v1072 = vpop.f32.mrf.mxu0
        %1073 = vmatprep.mubr.f32.mxu0 0.0
        %1074 = vmatmul.mubr.f32.gmra.mxu0 %v396
        %v1075 = vpop.f32.mrf.mxu0
        %v1076 = vadd.f32 0.0, %v1075
        %v1077 = vpop.f32.mrf.mxu0
        %1078 = vmatprep.mubr.f32.mxu0 0.0
        %1079 = vmatmul.mubr.f32.gmra.mxu0 %v397
        %v1080 = vpop.f32.mrf.mxu0
        %v1081 = vadd.f32 0.0, %v1080
        %v1082 = vpop.f32.mrf.mxu0
        %1083 = vmatprep.mubr.f32.mxu0 0.0
        %1084 = vmatmul.mubr.f32.gmra.mxu0 %v398
        %v1085 = vpop.f32.mrf.mxu0
        %v1086 = vadd.f32 0.0, %v1085
        %v1087 = vpop.f32.mrf.mxu0
        %1088 = vmatprep.mubr.f32.mxu0 0.0
        %1089 = vmatmul.mubr.f32.gmra.mxu0 %v399
        %v1090 = vpop.f32.mrf.mxu0
        %v1091 = vadd.f32 0.0, %v1090
        %v1092 = vpop.f32.mrf.mxu0
        %1093 = vmatprep.mubr.f32.mxu0 0.0
        %1094 = vmatmul.mubr.f32.gmra.mxu0 %v400
        %v1095 = vpop.f32.mrf.mxu0
        %v1096 = vadd.f32 0.0, %v1095
        %v1097 = vpop.f32.mrf.mxu0
        %1098 = vmatprep.mubr.f32.mxu0 0.0
        %1099 = vmatmul.mubr.f32.gmra.mxu0 %v401
        %v1100 = vpop.f32.mrf.mxu0
        %v1101 = vadd.f32 0.0, %v1100
        %v1102 = vpop.f32.mrf.mxu0
        %1103 = vmatprep.mubr.f32.mxu0 0.0
        %1104 = vmatmul.mubr.f32.gmra.mxu0 %v402
        %v1105 = vpop.f32.mrf.mxu0
        %v1106 = vadd.f32 0.0, %v1105
        %v1107 = vpop.f32.mrf.mxu0
        %1108 = vmatprep.mubr.f32.mxu0 0.0
        %1109 = vmatmul.mubr.f32.gmra.mxu0 %v403
        %v1110 = vpop.f32.mrf.mxu0
        %v1111 = vadd.f32 0.0, %v1110
        %v1112 = vpop.f32.mrf.mxu0
        %1113 = vmatprep.mubr.f32.mxu0 0.0
        %1114 = vmatmul.mubr.f32.gmra.mxu0 %v404
        %v1115 = vpop.f32.mrf.mxu0
        %v1116 = vadd.f32 0.0, %v1115
        %v1117 = vpop.f32.mrf.mxu0
        %1118 = vmatprep.mubr.f32.mxu0 0.0
        %1119 = vmatmul.mubr.f32.gmra.mxu0 %v405
        %v1120 = vpop.f32.mrf.mxu0
        %v1121 = vadd.f32 0.0, %v1120
        %v1122 = vpop.f32.mrf.mxu0
        %1123 = vmatprep.mubr.f32.mxu0 0.0
        %1124 = vmatmul.mubr.f32.gmra.mxu0 %v406
        %v1125 = vpop.f32.mrf.mxu0
        %v1126 = vadd.f32 0.0, %v1125
        %v1127 = vpop.f32.mrf.mxu0
        %1128 = vmatprep.mubr.f32.mxu0 0.0
        %1129 = vmatmul.mubr.f32.gmra.mxu0 %v407
        %v1130 = vpop.f32.mrf.mxu0
        %v1131 = vadd.f32 0.0, %v1130
        %v1132 = vpop.f32.mrf.mxu0
        %1133 = vmatprep.mubr.f32.mxu0 0.0
        %1134 = vmatmul.mubr.f32.gmra.mxu0 %v408
        %v1135 = vpop.f32.mrf.mxu0
        %v1136 = vadd.f32 0.0, %v1135
        %v1137 = vpop.f32.mrf.mxu0
        %1138 = vmatprep.mubr.f32.mxu0 0.0
        %1139 = vmatmul.mubr.f32.gmra.mxu0 %v409
        %v1140 = vpop.f32.mrf.mxu0
        %v1141 = vadd.f32 0.0, %v1140
        %v1142 = vpop.f32.mrf.mxu0
        %1143 = vmatprep.mubr.f32.mxu0 0.0
        %1144 = vmatmul.mubr.f32.gmra.mxu0 %v410
        %v1145 = vpop.f32.mrf.mxu0
        %v1146 = vadd.f32 0.0, %v1145
        %v1147 = vpop.f32.mrf.mxu0
        %1148 = vmatprep.mubr.f32.mxu0 0.0
        %1149 = vmatmul.mubr.f32.gmra.mxu0 %v411
        %v1150 = vpop.f32.mrf.mxu0
        %v1151 = vadd.f32 0.0, %v1150
        %v1152 = vpop.f32.mrf.mxu0
        %1153 = vmatprep.mubr.f32.mxu0 0.0
        %1154 = vmatmul.mubr.f32.gmra.mxu0 %v412
        %v1155 = vpop.f32.mrf.mxu0
        %v1156 = vadd.f32 0.0, %v1155
        %v1157 = vpop.f32.mrf.mxu0
        %1158 = vmatprep.mubr.f32.mxu0 0.0
        %1159 = vmatmul.mubr.f32.gmra.mxu0 %v413
        %v1160 = vpop.f32.mrf.mxu0
        %v1161 = vadd.f32 0.0, %v1160
        %v1162 = vpop.f32.mrf.mxu0
        %1163 = vmatprep.mubr.f32.mxu0 0.0
        %1164 = vmatmul.mubr.f32.gmra.mxu0 %v414
        %v1165 = vpop.f32.mrf.mxu0
        %v1166 = vadd.f32 0.0, %v1165
        %v1167 = vpop.f32.mrf.mxu0
        %1168 = vmatprep.mubr.f32.mxu0 0.0
        %1169 = vmatmul.mubr.f32.gmra.mxu0 %v415
        %v1170 = vpop.f32.mrf.mxu0
        %v1171 = vadd.f32 0.0, %v1170
        %v1172 = vpop.f32.mrf.mxu0
        %1173 = vmatprep.mubr.f32.mxu0 0.0
        %1174 = vmatmul.mubr.f32.gmra.mxu0 %v416
        %v1175 = vpop.f32.mrf.mxu0
        %v1176 = vadd.f32 0.0, %v1175
        %v1177 = vpop.f32.mrf.mxu0
        %1178 = vmatprep.mubr.f32.mxu0 0.0
        %1179 = vmatmul.mubr.f32.gmra.mxu0 %v417
        %v1180 = vpop.f32.mrf.mxu0
        %v1181 = vadd.f32 0.0, %v1180
        %v1182 = vpop.f32.mrf.mxu0
        %1183 = vmatprep.mubr.f32.mxu0 0.0
        %1184 = vmatmul.mubr.f32.gmra.mxu0 %v418
        %v1185 = vpop.f32.mrf.mxu0
        %v1186 = vadd.f32 0.0, %v1185
        %v1187 = vpop.f32.mrf.mxu0
        %1188 = vmatprep.mubr.f32.mxu0 0.0
        %1189 = vmatmul.mubr.f32.gmra.mxu0 %v419
        %v1190 = vpop.f32.mrf.mxu0
        %v1191 = vadd.f32 0.0, %v1190
        %v1192 = vpop.f32.mrf.mxu0
        %1193 = vmatprep.mubr.f32.mxu0 0.0
        %1194 = vmatmul.mubr.f32.gmra.mxu0 %v420
        %v1195 = vpop.f32.mrf.mxu0
        %v1196 = vadd.f32 0.0, %v1195
        %v1197 = vpop.f32.mrf.mxu0
        %1198 = vmatprep.mubr.f32.mxu0 0.0
        %1199 = vmatmul.mubr.f32.gmra.mxu0 %v421
        %v1200 = vpop.f32.mrf.mxu0
        %v1201 = vadd.f32 0.0, %v1200
        %v1202 = vpop.f32.mrf.mxu0
        %1203 = vmatprep.mubr.f32.mxu0 0.0
        %1204 = vmatmul.mubr.f32.gmra.mxu0 %v422
        %v1205 = vpop.f32.mrf.mxu0
        %v1206 = vadd.f32 0.0, %v1205
        %v1207 = vpop.f32.mrf.mxu0
        %1208 = vmatprep.mubr.f32.mxu0 0.0
        %1209 = vmatmul.mubr.f32.gmra.mxu0 %v423
        %v1210 = vpop.f32.mrf.mxu0
        %v1211 = vadd.f32 0.0, %v1210
        %v1212 = vpop.f32.mrf.mxu0
        %1213 = vmatprep.mubr.f32.mxu0 0.0
        %1214 = vmatmul.mubr.f32.gmra.mxu0 %v424
        %v1215 = vpop.f32.mrf.mxu0
        %v1216 = vadd.f32 0.0, %v1215
        %v1217 = vpop.f32.mrf.mxu0
        %1218 = vmatprep.mubr.f32.mxu0 0.0
        %1219 = vmatmul.mubr.f32.gmra.mxu0 %v425
        %v1220 = vpop.f32.mrf.mxu0
        %v1221 = vadd.f32 0.0, %v1220
        %v1222 = vpop.f32.mrf.mxu0
        %1223 = vmatprep.mubr.f32.mxu0 0.0
        %1224 = vmatmul.mubr.f32.gmra.mxu0 %v426
        %v1225 = vpop.f32.mrf.mxu0
        %v1226 = vadd.f32 0.0, %v1225
        %v1227 = vpop.f32.mrf.mxu0
        %1228 = vdwg.mxu0
        %v1229 = vld [vmem:[#allocation5 + $0x10] sm:$0xff]
        %v1230 = vld [vmem:[#allocation5 + $0x28] sm:$0xff]
        %v1231 = vld [vmem:[#allocation5 + $0x40] sm:$0xff]
        %v1232 = vld [vmem:[#allocation5 + $0x58] sm:$0xff]
        %v1233 = vld [vmem:[#allocation5 + $0x70] sm:$0xff]
        %v1234 = vld [vmem:[#allocation5 + $0x88] sm:$0xff]
        %v1235 = vld [vmem:[#allocation5 + $0xa0] sm:$0xff]
        %v1236 = vld [vmem:[#allocation5 + $0xb8] sm:$0xff]
        %v1237 = vld [vmem:[#allocation5 + $0xd0] sm:$0xff]
        %v1238 = vld [vmem:[#allocation5 + $0xe8] sm:$0xff]
        %v1239 = vld [vmem:[#allocation5 + $0x100] sm:$0xff]
        %v1240 = vld [vmem:[#allocation5 + $0x118] sm:$0xff]
        %v1241 = vld [vmem:[#allocation5 + $0x130] sm:$0xff]
        %v1242 = vld [vmem:[#allocation5 + $0x148] sm:$0xff]
        %v1243 = vld [vmem:[#allocation5 + $0x160] sm:$0xff]
        %v1244 = vld [vmem:[#allocation5 + $0x178] sm:$0xff]
        %1245 = vmatprep.subr.mxu0 0.0
        %1246 = vmatpush1.msra.mxu0 %v1244
        %1247 = vmatprep.subr.mxu0 0.0
        %1248 = vmatpush1.msra.mxu0 %v1243
        %1249 = vmatprep.subr.mxu0 0.0
        %1250 = vmatpush1.msra.mxu0 %v1242
        %1251 = vmatprep.subr.mxu0 0.0
        %1252 = vmatpush1.msra.mxu0 %v1241
        %1253 = vmatprep.subr.mxu0 0.0
        %1254 = vmatpush1.msra.mxu0 %v1240
        %1255 = vmatprep.subr.mxu0 0.0
        %1256 = vmatpush1.msra.mxu0 %v1239
        %1257 = vmatprep.subr.mxu0 0.0
        %1258 = vmatpush1.msra.mxu0 %v1238
        %1259 = vmatprep.subr.mxu0 0.0
        %1260 = vmatpush1.msra.mxu0 %v1237
        %1261 = vmatprep.subr.mxu0 0.0
        %1262 = vmatpush1.msra.mxu0 %v1236
        %1263 = vmatprep.subr.mxu0 0.0
        %1264 = vmatpush1.msra.mxu0 %v1235
        %1265 = vmatprep.subr.mxu0 0.0
        %1266 = vmatpush1.msra.mxu0 %v1234
        %1267 = vmatprep.subr.mxu0 0.0
        %1268 = vmatpush1.msra.mxu0 %v1233
        %1269 = vmatprep.subr.mxu0 0.0
        %1270 = vmatpush1.msra.mxu0 %v1232
        %1271 = vmatprep.subr.mxu0 0.0
        %1272 = vmatpush1.msra.mxu0 %v1231
        %1273 = vmatprep.subr.mxu0 0.0
        %1274 = vmatpush1.msra.mxu0 %v1230
        %1275 = vmatprep.subr.mxu0 0.0
        %1276 = vmatpush1.msra.mxu0 %v1229
        %1277 = vmatprep.subr.mxu0 0.0
        %1278 = vmatpush2.msra.mxu0 0.0
        %1279 = vmatprep.subr.mxu0 0.0
        %1280 = vmatpush2.msra.mxu0 0.0
        %1281 = vmatprep.subr.mxu0 0.0
        %1282 = vmatpush2.msra.mxu0 0.0
        %1283 = vmatprep.subr.mxu0 0.0
        %1284 = vmatpush2.msra.mxu0 0.0
        %1285 = vmatprep.subr.mxu0 0.0
        %1286 = vmatpush2.msra.mxu0 0.0
        %1287 = vmatprep.subr.mxu0 0.0
        %1288 = vmatpush2.msra.mxu0 0.0
        %1289 = vmatprep.subr.mxu0 0.0
        %1290 = vmatpush2.msra.mxu0 0.0
        %1291 = vmatprep.subr.mxu0 0.0
        %1292 = vmatpush2.msra.mxu0 0.0
        %1293 = vmatprep.subr.mxu0 0.0
        %1294 = vmatpush2.msra.mxu0 0.0
        %1295 = vmatprep.subr.mxu0 0.0
        %1296 = vmatpush2.msra.mxu0 0.0
        %1297 = vmatprep.subr.mxu0 0.0
        %1298 = vmatpush2.msra.mxu0 0.0
        %1299 = vmatprep.subr.mxu0 0.0
        %1300 = vmatpush2.msra.mxu0 0.0
        %1301 = vmatprep.subr.mxu0 0.0
        %1302 = vmatpush2.msra.mxu0 0.0
        %1303 = vmatprep.subr.mxu0 0.0
        %1304 = vmatpush2.msra.mxu0 0.0
        %1305 = vmatprep.subr.mxu0 0.0
        %1306 = vmatpush2.msra.mxu0 0.0
        %1307 = vmatprep.subr.mxu0 0.0
        %1308 = vmatpush2.msra.mxu0 0.0
        %1309 = vmatprep.mubr.f32.mxu0 0.0
        %1310 = vmatmul.mubr.f32.gmra.mxu0 %v363
        %v1311 = vpop.f32.mrf.mxu0
        %v1312 = vadd.f32 0.0, %v1311
        %v1313 = vpop.f32.mrf.mxu0
        %1314 = vmatprep.mubr.f32.mxu0 0.0
        %1315 = vmatmul.mubr.f32.gmra.mxu0 %v364
        %v1316 = vpop.f32.mrf.mxu0
        %v1317 = vadd.f32 0.0, %v1316
        %v1318 = vpop.f32.mrf.mxu0
        %1319 = vmatprep.mubr.f32.mxu0 0.0
        %1320 = vmatmul.mubr.f32.gmra.mxu0 %v365
        %v1321 = vpop.f32.mrf.mxu0
        %v1322 = vadd.f32 0.0, %v1321
        %v1323 = vpop.f32.mrf.mxu0
        %1324 = vmatprep.mubr.f32.mxu0 0.0
        %1325 = vmatmul.mubr.f32.gmra.mxu0 %v366
        %v1326 = vpop.f32.mrf.mxu0
        %v1327 = vadd.f32 0.0, %v1326
        %v1328 = vpop.f32.mrf.mxu0
        %1329 = vmatprep.mubr.f32.mxu0 0.0
        %1330 = vmatmul.mubr.f32.gmra.mxu0 %v367
        %v1331 = vpop.f32.mrf.mxu0
        %v1332 = vadd.f32 0.0, %v1331
        %v1333 = vpop.f32.mrf.mxu0
        %1334 = vmatprep.mubr.f32.mxu0 0.0
        %1335 = vmatmul.mubr.f32.gmra.mxu0 %v368
        %v1336 = vpop.f32.mrf.mxu0
        %v1337 = vadd.f32 0.0, %v1336
        %v1338 = vpop.f32.mrf.mxu0
        %1339 = vmatprep.mubr.f32.mxu0 0.0
        %1340 = vmatmul.mubr.f32.gmra.mxu0 %v369
        %v1341 = vpop.f32.mrf.mxu0
        %v1342 = vadd.f32 0.0, %v1341
        %v1343 = vpop.f32.mrf.mxu0
        %1344 = vmatprep.mubr.f32.mxu0 0.0
        %1345 = vmatmul.mubr.f32.gmra.mxu0 %v370
        %v1346 = vpop.f32.mrf.mxu0
        %v1347 = vadd.f32 0.0, %v1346
        %v1348 = vpop.f32.mrf.mxu0
        %1349 = vmatprep.mubr.f32.mxu0 0.0
        %1350 = vmatmul.mubr.f32.gmra.mxu0 %v371
        %v1351 = vpop.f32.mrf.mxu0
        %v1352 = vadd.f32 0.0, %v1351
        %v1353 = vpop.f32.mrf.mxu0
        %1354 = vmatprep.mubr.f32.mxu0 0.0
        %1355 = vmatmul.mubr.f32.gmra.mxu0 %v372
        %v1356 = vpop.f32.mrf.mxu0
        %v1357 = vadd.f32 0.0, %v1356
        %v1358 = vpop.f32.mrf.mxu0
        %1359 = vmatprep.mubr.f32.mxu0 0.0
        %1360 = vmatmul.mubr.f32.gmra.mxu0 %v373
        %v1361 = vpop.f32.mrf.mxu0
        %v1362 = vadd.f32 0.0, %v1361
        %v1363 = vpop.f32.mrf.mxu0
        %1364 = vmatprep.mubr.f32.mxu0 0.0
        %1365 = vmatmul.mubr.f32.gmra.mxu0 %v374
        %v1366 = vpop.f32.mrf.mxu0
        %v1367 = vadd.f32 0.0, %v1366
        %v1368 = vpop.f32.mrf.mxu0
        %1369 = vmatprep.mubr.f32.mxu0 0.0
        %1370 = vmatmul.mubr.f32.gmra.mxu0 %v375
        %v1371 = vpop.f32.mrf.mxu0
        %v1372 = vadd.f32 0.0, %v1371
        %v1373 = vpop.f32.mrf.mxu0
        %1374 = vmatprep.mubr.f32.mxu0 0.0
        %1375 = vmatmul.mubr.f32.gmra.mxu0 %v376
        %v1376 = vpop.f32.mrf.mxu0
        %v1377 = vadd.f32 0.0, %v1376
        %v1378 = vpop.f32.mrf.mxu0
        %1379 = vmatprep.mubr.f32.mxu0 0.0
        %1380 = vmatmul.mubr.f32.gmra.mxu0 %v377
        %v1381 = vpop.f32.mrf.mxu0
        %v1382 = vadd.f32 0.0, %v1381
        %v1383 = vpop.f32.mrf.mxu0
        %1384 = vmatprep.mubr.f32.mxu0 0.0
        %1385 = vmatmul.mubr.f32.gmra.mxu0 %v378
        %v1386 = vpop.f32.mrf.mxu0
        %v1387 = vadd.f32 0.0, %v1386
        %v1388 = vpop.f32.mrf.mxu0
        %1389 = vmatprep.mubr.f32.mxu0 0.0
        %1390 = vmatmul.mubr.f32.gmra.mxu0 %v379
        %v1391 = vpop.f32.mrf.mxu0
        %v1392 = vadd.f32 0.0, %v1391
        %v1393 = vpop.f32.mrf.mxu0
        %1394 = vmatprep.mubr.f32.mxu0 0.0
        %1395 = vmatmul.mubr.f32.gmra.mxu0 %v380
        %v1396 = vpop.f32.mrf.mxu0
        %v1397 = vadd.f32 0.0, %v1396
        %v1398 = vpop.f32.mrf.mxu0
        %1399 = vmatprep.mubr.f32.mxu0 0.0
        %1400 = vmatmul.mubr.f32.gmra.mxu0 %v381
        %v1401 = vpop.f32.mrf.mxu0
        %v1402 = vadd.f32 0.0, %v1401
        %v1403 = vpop.f32.mrf.mxu0
        %1404 = vmatprep.mubr.f32.mxu0 0.0
        %1405 = vmatmul.mubr.f32.gmra.mxu0 %v382
        %v1406 = vpop.f32.mrf.mxu0
        %v1407 = vadd.f32 0.0, %v1406
        %v1408 = vpop.f32.mrf.mxu0
        %1409 = vmatprep.mubr.f32.mxu0 0.0
        %1410 = vmatmul.mubr.f32.gmra.mxu0 %v383
        %v1411 = vpop.f32.mrf.mxu0
        %v1412 = vadd.f32 0.0, %v1411
        %v1413 = vpop.f32.mrf.mxu0
        %1414 = vmatprep.mubr.f32.mxu0 0.0
        %1415 = vmatmul.mubr.f32.gmra.mxu0 %v384
        %v1416 = vpop.f32.mrf.mxu0
        %v1417 = vadd.f32 0.0, %v1416
        %v1418 = vpop.f32.mrf.mxu0
        %1419 = vmatprep.mubr.f32.mxu0 0.0
        %1420 = vmatmul.mubr.f32.gmra.mxu0 %v385
        %v1421 = vpop.f32.mrf.mxu0
        %v1422 = vadd.f32 0.0, %v1421
        %v1423 = vpop.f32.mrf.mxu0
        %1424 = vmatprep.mubr.f32.mxu0 0.0
        %1425 = vmatmul.mubr.f32.gmra.mxu0 %v386
        %v1426 = vpop.f32.mrf.mxu0
        %v1427 = vadd.f32 0.0, %v1426
        %v1428 = vpop.f32.mrf.mxu0
        %1429 = vmatprep.mubr.f32.mxu0 0.0
        %1430 = vmatmul.mubr.f32.gmra.mxu0 %v387
        %v1431 = vpop.f32.mrf.mxu0
        %v1432 = vadd.f32 0.0, %v1431
        %v1433 = vpop.f32.mrf.mxu0
        %1434 = vmatprep.mubr.f32.mxu0 0.0
        %1435 = vmatmul.mubr.f32.gmra.mxu0 %v388
        %v1436 = vpop.f32.mrf.mxu0
        %v1437 = vadd.f32 0.0, %v1436
        %v1438 = vpop.f32.mrf.mxu0
        %1439 = vmatprep.mubr.f32.mxu0 0.0
        %1440 = vmatmul.mubr.f32.gmra.mxu0 %v389
        %v1441 = vpop.f32.mrf.mxu0
        %v1442 = vadd.f32 0.0, %v1441
        %v1443 = vpop.f32.mrf.mxu0
        %1444 = vmatprep.mubr.f32.mxu0 0.0
        %1445 = vmatmul.mubr.f32.gmra.mxu0 %v390
        %v1446 = vpop.f32.mrf.mxu0
        %v1447 = vadd.f32 0.0, %v1446
        %v1448 = vpop.f32.mrf.mxu0
        %1449 = vmatprep.mubr.f32.mxu0 0.0
        %1450 = vmatmul.mubr.f32.gmra.mxu0 %v391
        %v1451 = vpop.f32.mrf.mxu0
        %v1452 = vadd.f32 0.0, %v1451
        %v1453 = vpop.f32.mrf.mxu0
        %1454 = vmatprep.mubr.f32.mxu0 0.0
        %1455 = vmatmul.mubr.f32.gmra.mxu0 %v392
        %v1456 = vpop.f32.mrf.mxu0
        %v1457 = vadd.f32 0.0, %v1456
        %v1458 = vpop.f32.mrf.mxu0
        %1459 = vmatprep.mubr.f32.mxu0 0.0
        %1460 = vmatmul.mubr.f32.gmra.mxu0 %v393
        %v1461 = vpop.f32.mrf.mxu0
        %v1462 = vadd.f32 0.0, %v1461
        %v1463 = vpop.f32.mrf.mxu0
        %1464 = vmatprep.mubr.f32.mxu0 0.0
        %1465 = vmatmul.mubr.f32.gmra.mxu0 %v394
        %v1466 = vpop.f32.mrf.mxu0
        %v1467 = vadd.f32 0.0, %v1466
        %v1468 = vpop.f32.mrf.mxu0
        %1469 = vmatprep.mubr.f32.mxu0 0.0
        %1470 = vmatmul.mubr.f32.gmra.mxu0 %v395
        %v1471 = vpop.f32.mrf.mxu0
        %v1472 = vadd.f32 0.0, %v1471
        %v1473 = vpop.f32.mrf.mxu0
        %1474 = vmatprep.mubr.f32.mxu0 0.0
        %1475 = vmatmul.mubr.f32.gmra.mxu0 %v396
        %v1476 = vpop.f32.mrf.mxu0
        %v1477 = vadd.f32 0.0, %v1476
        %v1478 = vpop.f32.mrf.mxu0
        %1479 = vmatprep.mubr.f32.mxu0 0.0
        %1480 = vmatmul.mubr.f32.gmra.mxu0 %v397
        %v1481 = vpop.f32.mrf.mxu0
        %v1482 = vadd.f32 0.0, %v1481
        %v1483 = vpop.f32.mrf.mxu0
        %1484 = vmatprep.mubr.f32.mxu0 0.0
        %1485 = vmatmul.mubr.f32.gmra.mxu0 %v398
        %v1486 = vpop.f32.mrf.mxu0
        %v1487 = vadd.f32 0.0, %v1486
        %v1488 = vpop.f32.mrf.mxu0
        %1489 = vmatprep.mubr.f32.mxu0 0.0
        %1490 = vmatmul.mubr.f32.gmra.mxu0 %v399
        %v1491 = vpop.f32.mrf.mxu0
        %v1492 = vadd.f32 0.0, %v1491
        %v1493 = vpop.f32.mrf.mxu0
        %1494 = vmatprep.mubr.f32.mxu0 0.0
        %1495 = vmatmul.mubr.f32.gmra.mxu0 %v400
        %v1496 = vpop.f32.mrf.mxu0
        %v1497 = vadd.f32 0.0, %v1496
        %v1498 = vpop.f32.mrf.mxu0
        %1499 = vmatprep.mubr.f32.mxu0 0.0
        %1500 = vmatmul.mubr.f32.gmra.mxu0 %v401
        %v1501 = vpop.f32.mrf.mxu0
        %v1502 = vadd.f32 0.0, %v1501
        %v1503 = vpop.f32.mrf.mxu0
        %1504 = vmatprep.mubr.f32.mxu0 0.0
        %1505 = vmatmul.mubr.f32.gmra.mxu0 %v402
        %v1506 = vpop.f32.mrf.mxu0
        %v1507 = vadd.f32 0.0, %v1506
        %v1508 = vpop.f32.mrf.mxu0
        %1509 = vmatprep.mubr.f32.mxu0 0.0
        %1510 = vmatmul.mubr.f32.gmra.mxu0 %v403
        %v1511 = vpop.f32.mrf.mxu0
        %v1512 = vadd.f32 0.0, %v1511
        %v1513 = vpop.f32.mrf.mxu0
        %1514 = vmatprep.mubr.f32.mxu0 0.0
        %1515 = vmatmul.mubr.f32.gmra.mxu0 %v404
        %v1516 = vpop.f32.mrf.mxu0
        %v1517 = vadd.f32 0.0, %v1516
        %v1518 = vpop.f32.mrf.mxu0
        %1519 = vmatprep.mubr.f32.mxu0 0.0
        %1520 = vmatmul.mubr.f32.gmra.mxu0 %v405
        %v1521 = vpop.f32.mrf.mxu0
        %v1522 = vadd.f32 0.0, %v1521
        %v1523 = vpop.f32.mrf.mxu0
        %1524 = vmatprep.mubr.f32.mxu0 0.0
        %1525 = vmatmul.mubr.f32.gmra.mxu0 %v406
        %v1526 = vpop.f32.mrf.mxu0
        %v1527 = vadd.f32 0.0, %v1526
        %v1528 = vpop.f32.mrf.mxu0
        %1529 = vmatprep.mubr.f32.mxu0 0.0
        %1530 = vmatmul.mubr.f32.gmra.mxu0 %v407
        %v1531 = vpop.f32.mrf.mxu0
        %v1532 = vadd.f32 0.0, %v1531
        %v1533 = vpop.f32.mrf.mxu0
        %1534 = vmatprep.mubr.f32.mxu0 0.0
        %1535 = vmatmul.mubr.f32.gmra.mxu0 %v408
        %v1536 = vpop.f32.mrf.mxu0
        %v1537 = vadd.f32 0.0, %v1536
        %v1538 = vpop.f32.mrf.mxu0
        %1539 = vmatprep.mubr.f32.mxu0 0.0
        %1540 = vmatmul.mubr.f32.gmra.mxu0 %v409
        %v1541 = vpop.f32.mrf.mxu0
        %v1542 = vadd.f32 0.0, %v1541
        %v1543 = vpop.f32.mrf.mxu0
        %1544 = vmatprep.mubr.f32.mxu0 0.0
        %1545 = vmatmul.mubr.f32.gmra.mxu0 %v410
        %v1546 = vpop.f32.mrf.mxu0
        %v1547 = vadd.f32 0.0, %v1546
        %v1548 = vpop.f32.mrf.mxu0
        %1549 = vmatprep.mubr.f32.mxu0 0.0
        %1550 = vmatmul.mubr.f32.gmra.mxu0 %v411
        %v1551 = vpop.f32.mrf.mxu0
        %v1552 = vadd.f32 0.0, %v1551
        %v1553 = vpop.f32.mrf.mxu0
        %1554 = vmatprep.mubr.f32.mxu0 0.0
        %1555 = vmatmul.mubr.f32.gmra.mxu0 %v412
        %v1556 = vpop.f32.mrf.mxu0
        %v1557 = vadd.f32 0.0, %v1556
        %v1558 = vpop.f32.mrf.mxu0
        %1559 = vmatprep.mubr.f32.mxu0 0.0
        %1560 = vmatmul.mubr.f32.gmra.mxu0 %v413
        %v1561 = vpop.f32.mrf.mxu0
        %v1562 = vadd.f32 0.0, %v1561
        %v1563 = vpop.f32.mrf.mxu0
        %1564 = vmatprep.mubr.f32.mxu0 0.0
        %1565 = vmatmul.mubr.f32.gmra.mxu0 %v414
        %v1566 = vpop.f32.mrf.mxu0
        %v1567 = vadd.f32 0.0, %v1566
        %v1568 = vpop.f32.mrf.mxu0
        %1569 = vmatprep.mubr.f32.mxu0 0.0
        %1570 = vmatmul.mubr.f32.gmra.mxu0 %v415
        %v1571 = vpop.f32.mrf.mxu0
        %v1572 = vadd.f32 0.0, %v1571
        %v1573 = vpop.f32.mrf.mxu0
        %1574 = vmatprep.mubr.f32.mxu0 0.0
        %1575 = vmatmul.mubr.f32.gmra.mxu0 %v416
        %v1576 = vpop.f32.mrf.mxu0
        %v1577 = vadd.f32 0.0, %v1576
        %v1578 = vpop.f32.mrf.mxu0
        %1579 = vmatprep.mubr.f32.mxu0 0.0
        %1580 = vmatmul.mubr.f32.gmra.mxu0 %v417
        %v1581 = vpop.f32.mrf.mxu0
        %v1582 = vadd.f32 0.0, %v1581
        %v1583 = vpop.f32.mrf.mxu0
        %1584 = vmatprep.mubr.f32.mxu0 0.0
        %1585 = vmatmul.mubr.f32.gmra.mxu0 %v418
        %v1586 = vpop.f32.mrf.mxu0
        %v1587 = vadd.f32 0.0, %v1586
        %v1588 = vpop.f32.mrf.mxu0
        %1589 = vmatprep.mubr.f32.mxu0 0.0
        %1590 = vmatmul.mubr.f32.gmra.mxu0 %v419
        %v1591 = vpop.f32.mrf.mxu0
        %v1592 = vadd.f32 0.0, %v1591
        %v1593 = vpop.f32.mrf.mxu0
        %1594 = vmatprep.mubr.f32.mxu0 0.0
        %1595 = vmatmul.mubr.f32.gmra.mxu0 %v420
        %v1596 = vpop.f32.mrf.mxu0
        %v1597 = vadd.f32 0.0, %v1596
        %v1598 = vpop.f32.mrf.mxu0
        %1599 = vmatprep.mubr.f32.mxu0 0.0
        %1600 = vmatmul.mubr.f32.gmra.mxu0 %v421
        %v1601 = vpop.f32.mrf.mxu0
        %v1602 = vadd.f32 0.0, %v1601
        %v1603 = vpop.f32.mrf.mxu0
        %1604 = vmatprep.mubr.f32.mxu0 0.0
        %1605 = vmatmul.mubr.f32.gmra.mxu0 %v422
        %v1606 = vpop.f32.mrf.mxu0
        %v1607 = vadd.f32 0.0, %v1606
        %v1608 = vpop.f32.mrf.mxu0
        %1609 = vmatprep.mubr.f32.mxu0 0.0
        %1610 = vmatmul.mubr.f32.gmra.mxu0 %v423
        %v1611 = vpop.f32.mrf.mxu0
        %v1612 = vadd.f32 0.0, %v1611
        %v1613 = vpop.f32.mrf.mxu0
        %1614 = vmatprep.mubr.f32.mxu0 0.0
        %1615 = vmatmul.mubr.f32.gmra.mxu0 %v424
        %v1616 = vpop.f32.mrf.mxu0
        %v1617 = vadd.f32 0.0, %v1616
        %v1618 = vpop.f32.mrf.mxu0
        %1619 = vmatprep.mubr.f32.mxu0 0.0
        %1620 = vmatmul.mubr.f32.gmra.mxu0 %v425
        %v1621 = vpop.f32.mrf.mxu0
        %v1622 = vadd.f32 0.0, %v1621
        %v1623 = vpop.f32.mrf.mxu0
        %1624 = vmatprep.mubr.f32.mxu0 0.0
        %1625 = vmatmul.mubr.f32.gmra.mxu0 %v426
        %v1626 = vpop.f32.mrf.mxu0
        %v1627 = vadd.f32 0.0, %v1626
        %v1628 = vpop.f32.mrf.mxu0
        %1629 = vdwg.mxu0
        %v1630 = vld [vmem:[%s2] sm:$0x1]
        %v1631 = vld [vmem:[#allocation7] sm:$0xff]
        %v1632 = vld [vmem:[#allocation7 + $0x8] sm:$0xff]
        %v1633 = vld [vmem:[#allocation7 + $0x10] sm:$0xff]
        %v1634 = vld [vmem:[#allocation7 + $0x18] sm:$0xff]
        %v1635 = vld [vmem:[#allocation7 + $0x20] sm:$0xff]
        %v1636 = vld [vmem:[#allocation7 + $0x28] sm:$0xff]
        %v1637 = vld [vmem:[#allocation7 + $0x30] sm:$0xff]
        %v1638 = vld [vmem:[#allocation7 + $0x38] sm:$0xff]
        %v1639 = vld [vmem:[#allocation7 + $0x40] sm:$0xff]
        %v1640 = vld [vmem:[#allocation7 + $0x48] sm:$0xff]
        %v1641 = vld [vmem:[#allocation7 + $0x50] sm:$0xff]
        %v1642 = vld [vmem:[#allocation7 + $0x58] sm:$0xff]
        %v1643 = vld [vmem:[#allocation7 + $0x60] sm:$0xff]
        %v1644 = vld [vmem:[#allocation7 + $0x68] sm:$0xff]
        %v1645 = vld [vmem:[#allocation7 + $0x70] sm:$0xff]
        %v1646 = vld [vmem:[#allocation7 + $0x78] sm:$0xff]
        %v1647 = vld [vmem:[#allocation7 + $0x80] sm:$0xff]
        %v1648 = vld [vmem:[#allocation7 + $0x88] sm:$0xff]
        %v1649 = vld [vmem:[#allocation7 + $0x90] sm:$0xff]
        %v1650 = vld [vmem:[#allocation7 + $0x98] sm:$0xff]
        %v1651 = vld [vmem:[#allocation7 + $0xa0] sm:$0xff]
        %v1652 = vld [vmem:[#allocation7 + $0xa8] sm:$0xff]
        %v1653 = vld [vmem:[#allocation7 + $0xb0] sm:$0xff]
        %v1654 = vld [vmem:[#allocation7 + $0xb8] sm:$0xff]
        %v1655 = vld [vmem:[#allocation7 + $0xc0] sm:$0xff]
        %v1656 = vld [vmem:[#allocation7 + $0xc8] sm:$0xff]
        %v1657 = vld [vmem:[#allocation7 + $0xd0] sm:$0xff]
        %v1658 = vld [vmem:[#allocation7 + $0xd8] sm:$0xff]
        %v1659 = vld [vmem:[#allocation7 + $0xe0] sm:$0xff]
        %v1660 = vld [vmem:[#allocation7 + $0xe8] sm:$0xff]
        %v1661 = vld [vmem:[#allocation7 + $0xf0] sm:$0xff]
        %v1662 = vld [vmem:[#allocation7 + $0xf8] sm:$0xff]
        %v1663 = vld [vmem:[#allocation7 + $0x100] sm:$0xff]
        %v1664 = vld [vmem:[#allocation7 + $0x108] sm:$0xff]
        %v1665 = vld [vmem:[#allocation7 + $0x110] sm:$0xff]
        %v1666 = vld [vmem:[#allocation7 + $0x118] sm:$0xff]
        %v1667 = vld [vmem:[#allocation7 + $0x120] sm:$0xff]
        %v1668 = vld [vmem:[#allocation7 + $0x128] sm:$0xff]
        %v1669 = vld [vmem:[#allocation7 + $0x130] sm:$0xff]
        %v1670 = vld [vmem:[#allocation7 + $0x138] sm:$0xff]
        %v1671 = vld [vmem:[#allocation7 + $0x140] sm:$0xff]
        %v1672 = vld [vmem:[#allocation7 + $0x148] sm:$0xff]
        %v1673 = vld [vmem:[#allocation7 + $0x150] sm:$0xff]
        %v1674 = vld [vmem:[#allocation7 + $0x158] sm:$0xff]
        %v1675 = vld [vmem:[#allocation7 + $0x160] sm:$0xff]
        %v1676 = vld [vmem:[#allocation7 + $0x168] sm:$0xff]
        %v1677 = vld [vmem:[#allocation7 + $0x170] sm:$0xff]
        %v1678 = vld [vmem:[#allocation7 + $0x178] sm:$0xff]
        %v1679 = vld [vmem:[#allocation7 + $0x180] sm:$0xff]
        %v1680 = vld [vmem:[#allocation7 + $0x188] sm:$0xff]
        %v1681 = vld [vmem:[#allocation7 + $0x190] sm:$0xff]
        %v1682 = vld [vmem:[#allocation7 + $0x198] sm:$0xff]
        %v1683 = vld [vmem:[#allocation7 + $0x1a0] sm:$0xff]
        %v1684 = vld [vmem:[#allocation7 + $0x1a8] sm:$0xff]
        %v1685 = vld [vmem:[#allocation7 + $0x1b0] sm:$0xff]
        %v1686 = vld [vmem:[#allocation7 + $0x1b8] sm:$0xff]
        %v1687 = vld [vmem:[#allocation7 + $0x1c0] sm:$0xff]
        %v1688 = vld [vmem:[#allocation7 + $0x1c8] sm:$0xff]
        %v1689 = vld [vmem:[#allocation7 + $0x1d0] sm:$0xff]
        %v1690 = vld [vmem:[#allocation7 + $0x1d8] sm:$0xff]
        %v1691 = vld [vmem:[#allocation7 + $0x1e0] sm:$0xff]
        %v1692 = vld [vmem:[#allocation7 + $0x1e8] sm:$0xff]
        %v1693 = vld [vmem:[#allocation7 + $0x1f0] sm:$0xff]
        %v1694 = vld [vmem:[#allocation7 + $0x1f8] sm:$0xff]
        %v1695 = vld [vmem:[#allocation8] sm:$0xff]
        %v1696 = vld [vmem:[#allocation8 + $0x8] sm:$0xff]
        %v1697 = vld [vmem:[#allocation8 + $0x10] sm:$0xff]
        %v1698 = vld [vmem:[#allocation8 + $0x18] sm:$0xff]
        %v1699 = vld [vmem:[#allocation8 + $0x20] sm:$0xff]
        %v1700 = vld [vmem:[#allocation8 + $0x28] sm:$0xff]
        %v1701 = vld [vmem:[#allocation8 + $0x30] sm:$0xff]
        %v1702 = vld [vmem:[#allocation8 + $0x38] sm:$0xff]
        %v1703 = vld [vmem:[#allocation8 + $0x40] sm:$0xff]
        %v1704 = vld [vmem:[#allocation8 + $0x48] sm:$0xff]
        %v1705 = vld [vmem:[#allocation8 + $0x50] sm:$0xff]
        %v1706 = vld [vmem:[#allocation8 + $0x58] sm:$0xff]
        %v1707 = vld [vmem:[#allocation8 + $0x60] sm:$0xff]
        %v1708 = vld [vmem:[#allocation8 + $0x68] sm:$0xff]
        %v1709 = vld [vmem:[#allocation8 + $0x70] sm:$0xff]
        %v1710 = vld [vmem:[#allocation8 + $0x78] sm:$0xff]
        %v1711 = vld [vmem:[#allocation8 + $0x80] sm:$0xff]
        %v1712 = vld [vmem:[#allocation8 + $0x88] sm:$0xff]
        %v1713 = vld [vmem:[#allocation8 + $0x90] sm:$0xff]
        %v1714 = vld [vmem:[#allocation8 + $0x98] sm:$0xff]
        %v1715 = vld [vmem:[#allocation8 + $0xa0] sm:$0xff]
        %v1716 = vld [vmem:[#allocation8 + $0xa8] sm:$0xff]
        %v1717 = vld [vmem:[#allocation8 + $0xb0] sm:$0xff]
        %v1718 = vld [vmem:[#allocation8 + $0xb8] sm:$0xff]
        %v1719 = vld [vmem:[#allocation8 + $0xc0] sm:$0xff]
        %v1720 = vld [vmem:[#allocation8 + $0xc8] sm:$0xff]
        %v1721 = vld [vmem:[#allocation8 + $0xd0] sm:$0xff]
        %v1722 = vld [vmem:[#allocation8 + $0xd8] sm:$0xff]
        %v1723 = vld [vmem:[#allocation8 + $0xe0] sm:$0xff]
        %v1724 = vld [vmem:[#allocation8 + $0xe8] sm:$0xff]
        %v1725 = vld [vmem:[#allocation8 + $0xf0] sm:$0xff]
        %v1726 = vld [vmem:[#allocation8 + $0xf8] sm:$0xff]
        %v1727 = vld [vmem:[#allocation8 + $0x100] sm:$0xff]
        %v1728 = vld [vmem:[#allocation8 + $0x108] sm:$0xff]
        %v1729 = vld [vmem:[#allocation8 + $0x110] sm:$0xff]
        %v1730 = vld [vmem:[#allocation8 + $0x118] sm:$0xff]
        %v1731 = vld [vmem:[#allocation8 + $0x120] sm:$0xff]
        %v1732 = vld [vmem:[#allocation8 + $0x128] sm:$0xff]
        %v1733 = vld [vmem:[#allocation8 + $0x130] sm:$0xff]
        %v1734 = vld [vmem:[#allocation8 + $0x138] sm:$0xff]
        %v1735 = vld [vmem:[#allocation8 + $0x140] sm:$0xff]
        %v1736 = vld [vmem:[#allocation8 + $0x148] sm:$0xff]
        %v1737 = vld [vmem:[#allocation8 + $0x150] sm:$0xff]
        %v1738 = vld [vmem:[#allocation8 + $0x158] sm:$0xff]
        %v1739 = vld [vmem:[#allocation8 + $0x160] sm:$0xff]
        %v1740 = vld [vmem:[#allocation8 + $0x168] sm:$0xff]
        %v1741 = vld [vmem:[#allocation8 + $0x170] sm:$0xff]
        %v1742 = vld [vmem:[#allocation8 + $0x178] sm:$0xff]
        %v1743 = vld [vmem:[#allocation8 + $0x180] sm:$0xff]
        %v1744 = vld [vmem:[#allocation8 + $0x188] sm:$0xff]
        %v1745 = vld [vmem:[#allocation8 + $0x190] sm:$0xff]
        %v1746 = vld [vmem:[#allocation8 + $0x198] sm:$0xff]
        %v1747 = vld [vmem:[#allocation8 + $0x1a0] sm:$0xff]
        %v1748 = vld [vmem:[#allocation8 + $0x1a8] sm:$0xff]
        %v1749 = vld [vmem:[#allocation8 + $0x1b0] sm:$0xff]
        %v1750 = vld [vmem:[#allocation8 + $0x1b8] sm:$0xff]
        %v1751 = vld [vmem:[#allocation8 + $0x1c0] sm:$0xff]
        %v1752 = vld [vmem:[#allocation8 + $0x1c8] sm:$0xff]
        %v1753 = vld [vmem:[#allocation8 + $0x1d0] sm:$0xff]
        %v1754 = vld [vmem:[#allocation8 + $0x1d8] sm:$0xff]
        %v1755 = vld [vmem:[#allocation8 + $0x1e0] sm:$0xff]
        %v1756 = vld [vmem:[#allocation8 + $0x1e8] sm:$0xff]
        %v1757 = vld [vmem:[#allocation8 + $0x1f0] sm:$0xff]
        %v1758 = vld [vmem:[#allocation8 + $0x1f8] sm:$0xff]
        %v1759 = vmul.f32 %v510, %v510
        %v1760 = vmul.f32 %v515, %v515
        %v1761 = vmul.f32 %v520, %v520
        %v1762 = vmul.f32 %v525, %v525
        %v1763 = vmul.f32 %v530, %v530
        %v1764 = vmul.f32 %v535, %v535
        %v1765 = vmul.f32 %v540, %v540
        %v1766 = vmul.f32 %v545, %v545
        %v1767 = vmul.f32 %v550, %v550
        %v1768 = vmul.f32 %v555, %v555
        %v1769 = vmul.f32 %v560, %v560
        %v1770 = vmul.f32 %v565, %v565
        %v1771 = vmul.f32 %v570, %v570
        %v1772 = vmul.f32 %v575, %v575
        %v1773 = vmul.f32 %v580, %v580
        %v1774 = vmul.f32 %v585, %v585
        %v1775 = vmul.f32 %v590, %v590
        %v1776 = vmul.f32 %v595, %v595
        %v1777 = vmul.f32 %v600, %v600
        %v1778 = vmul.f32 %v605, %v605
        %v1779 = vmul.f32 %v610, %v610
        %v1780 = vmul.f32 %v615, %v615
        %v1781 = vmul.f32 %v620, %v620
        %v1782 = vmul.f32 %v625, %v625
        %v1783 = vmul.f32 %v630, %v630
        %v1784 = vmul.f32 %v635, %v635
        %v1785 = vmul.f32 %v640, %v640
        %v1786 = vmul.f32 %v645, %v645
        %v1787 = vmul.f32 %v650, %v650
        %v1788 = vmul.f32 %v655, %v655
        %v1789 = vmul.f32 %v660, %v660
        %v1790 = vmul.f32 %v665, %v665
        %v1791 = vmul.f32 %v670, %v670
        %v1792 = vmul.f32 %v675, %v675
        %v1793 = vmul.f32 %v680, %v680
        %v1794 = vmul.f32 %v685, %v685
        %v1795 = vmul.f32 %v690, %v690
        %v1796 = vmul.f32 %v695, %v695
        %v1797 = vmul.f32 %v700, %v700
        %v1798 = vmul.f32 %v705, %v705
        %v1799 = vmul.f32 %v710, %v710
        %v1800 = vmul.f32 %v715, %v715
        %v1801 = vmul.f32 %v720, %v720
        %v1802 = vmul.f32 %v725, %v725
        %v1803 = vmul.f32 %v730, %v730
        %v1804 = vmul.f32 %v735, %v735
        %v1805 = vmul.f32 %v740, %v740
        %v1806 = vmul.f32 %v745, %v745
        %v1807 = vmul.f32 %v750, %v750
        %v1808 = vmul.f32 %v755, %v755
        %v1809 = vmul.f32 %v760, %v760
        %v1810 = vmul.f32 %v765, %v765
        %v1811 = vmul.f32 %v770, %v770
        %v1812 = vmul.f32 %v775, %v775
        %v1813 = vmul.f32 %v780, %v780
        %v1814 = vmul.f32 %v785, %v785
        %v1815 = vmul.f32 %v790, %v790
        %v1816 = vmul.f32 %v795, %v795
        %v1817 = vmul.f32 %v800, %v800
        %v1818 = vmul.f32 %v805, %v805
        %v1819 = vmul.f32 %v810, %v810
        %v1820 = vmul.f32 %v815, %v815
        %v1821 = vmul.f32 %v820, %v820
        %v1822 = vmul.f32 %v825, %v825
        %1823 = vadd.xlane.f32.xlu0 %v1759
        %v1824 = vpop.xlane.xlu0 %1823
        %1825 = vadd.xlane.f32.xlu0 %v1760
        %v1826 = vpop.xlane.xlu0 %1825
        %1827 = vadd.xlane.f32.xlu0 %v1761
        %v1828 = vpop.xlane.xlu0 %1827
        %1829 = vadd.xlane.f32.xlu0 %v1762
        %v1830 = vpop.xlane.xlu0 %1829
        %1831 = vadd.xlane.f32.xlu0 %v1763
        %v1832 = vpop.xlane.xlu0 %1831
        %1833 = vadd.xlane.f32.xlu0 %v1764
        %v1834 = vpop.xlane.xlu0 %1833
        %1835 = vadd.xlane.f32.xlu0 %v1765
        %v1836 = vpop.xlane.xlu0 %1835
        %1837 = vadd.xlane.f32.xlu0 %v1766
        %v1838 = vpop.xlane.xlu0 %1837
        %1839 = vadd.xlane.f32.xlu0 %v1767
        %v1840 = vpop.xlane.xlu0 %1839
        %1841 = vadd.xlane.f32.xlu0 %v1768
        %v1842 = vpop.xlane.xlu0 %1841
        %1843 = vadd.xlane.f32.xlu0 %v1769
        %v1844 = vpop.xlane.xlu0 %1843
        %1845 = vadd.xlane.f32.xlu0 %v1770
        %v1846 = vpop.xlane.xlu0 %1845
        %1847 = vadd.xlane.f32.xlu0 %v1771
        %v1848 = vpop.xlane.xlu0 %1847
        %1849 = vadd.xlane.f32.xlu0 %v1772
        %v1850 = vpop.xlane.xlu0 %1849
        %1851 = vadd.xlane.f32.xlu0 %v1773
        %v1852 = vpop.xlane.xlu0 %1851
        %1853 = vadd.xlane.f32.xlu0 %v1774
        %v1854 = vpop.xlane.xlu0 %1853
        %1855 = vadd.xlane.f32.xlu0 %v1775
        %v1856 = vpop.xlane.xlu0 %1855
        %1857 = vadd.xlane.f32.xlu0 %v1776
        %v1858 = vpop.xlane.xlu0 %1857
        %1859 = vadd.xlane.f32.xlu0 %v1777
        %v1860 = vpop.xlane.xlu0 %1859
        %1861 = vadd.xlane.f32.xlu0 %v1778
        %v1862 = vpop.xlane.xlu0 %1861
        %1863 = vadd.xlane.f32.xlu0 %v1779
        %v1864 = vpop.xlane.xlu0 %1863
        %1865 = vadd.xlane.f32.xlu0 %v1780
        %v1866 = vpop.xlane.xlu0 %1865
        %1867 = vadd.xlane.f32.xlu0 %v1781
        %v1868 = vpop.xlane.xlu0 %1867
        %1869 = vadd.xlane.f32.xlu0 %v1782
        %v1870 = vpop.xlane.xlu0 %1869
        %1871 = vadd.xlane.f32.xlu0 %v1783
        %v1872 = vpop.xlane.xlu0 %1871
        %1873 = vadd.xlane.f32.xlu0 %v1784
        %v1874 = vpop.xlane.xlu0 %1873
        %1875 = vadd.xlane.f32.xlu0 %v1785
        %v1876 = vpop.xlane.xlu0 %1875
        %1877 = vadd.xlane.f32.xlu0 %v1786
        %v1878 = vpop.xlane.xlu0 %1877
        %1879 = vadd.xlane.f32.xlu0 %v1787
        %v1880 = vpop.xlane.xlu0 %1879
        %1881 = vadd.xlane.f32.xlu0 %v1788
        %v1882 = vpop.xlane.xlu0 %1881
        %1883 = vadd.xlane.f32.xlu0 %v1789
        %v1884 = vpop.xlane.xlu0 %1883
        %1885 = vadd.xlane.f32.xlu0 %v1790
        %v1886 = vpop.xlane.xlu0 %1885
        %1887 = vadd.xlane.f32.xlu0 %v1791
        %v1888 = vpop.xlane.xlu0 %1887
        %1889 = vadd.xlane.f32.xlu0 %v1792
        %v1890 = vpop.xlane.xlu0 %1889
        %1891 = vadd.xlane.f32.xlu0 %v1793
        %v1892 = vpop.xlane.xlu0 %1891
        %1893 = vadd.xlane.f32.xlu0 %v1794
        %v1894 = vpop.xlane.xlu0 %1893
        %1895 = vadd.xlane.f32.xlu0 %v1795
        %v1896 = vpop.xlane.xlu0 %1895
        %1897 = vadd.xlane.f32.xlu0 %v1796
        %v1898 = vpop.xlane.xlu0 %1897
        %1899 = vadd.xlane.f32.xlu0 %v1797
        %v1900 = vpop.xlane.xlu0 %1899
        %1901 = vadd.xlane.f32.xlu0 %v1798
        %v1902 = vpop.xlane.xlu0 %1901
        %1903 = vadd.xlane.f32.xlu0 %v1799
        %v1904 = vpop.xlane.xlu0 %1903
        %1905 = vadd.xlane.f32.xlu0 %v1800
        %v1906 = vpop.xlane.xlu0 %1905
        %1907 = vadd.xlane.f32.xlu0 %v1801
        %v1908 = vpop.xlane.xlu0 %1907
        %1909 = vadd.xlane.f32.xlu0 %v1802
        %v1910 = vpop.xlane.xlu0 %1909
        %1911 = vadd.xlane.f32.xlu0 %v1803
        %v1912 = vpop.xlane.xlu0 %1911
        %1913 = vadd.xlane.f32.xlu0 %v1804
        %v1914 = vpop.xlane.xlu0 %1913
        %1915 = vadd.xlane.f32.xlu0 %v1805
        %v1916 = vpop.xlane.xlu0 %1915
        %1917 = vadd.xlane.f32.xlu0 %v1806
        %v1918 = vpop.xlane.xlu0 %1917
        %1919 = vadd.xlane.f32.xlu0 %v1807
        %v1920 = vpop.xlane.xlu0 %1919
        %1921 = vadd.xlane.f32.xlu0 %v1808
        %v1922 = vpop.xlane.xlu0 %1921
        %1923 = vadd.xlane.f32.xlu0 %v1809
        %v1924 = vpop.xlane.xlu0 %1923
        %1925 = vadd.xlane.f32.xlu0 %v1810
        %v1926 = vpop.xlane.xlu0 %1925
        %1927 = vadd.xlane.f32.xlu0 %v1811
        %v1928 = vpop.xlane.xlu0 %1927
        %1929 = vadd.xlane.f32.xlu0 %v1812
        %v1930 = vpop.xlane.xlu0 %1929
        %1931 = vadd.xlane.f32.xlu0 %v1813
        %v1932 = vpop.xlane.xlu0 %1931
        %1933 = vadd.xlane.f32.xlu0 %v1814
        %v1934 = vpop.xlane.xlu0 %1933
        %1935 = vadd.xlane.f32.xlu0 %v1815
        %v1936 = vpop.xlane.xlu0 %1935
        %1937 = vadd.xlane.f32.xlu0 %v1816
        %v1938 = vpop.xlane.xlu0 %1937
        %1939 = vadd.xlane.f32.xlu0 %v1817
        %v1940 = vpop.xlane.xlu0 %1939
        %1941 = vadd.xlane.f32.xlu0 %v1818
        %v1942 = vpop.xlane.xlu0 %1941
        %1943 = vadd.xlane.f32.xlu0 %v1819
        %v1944 = vpop.xlane.xlu0 %1943
        %1945 = vadd.xlane.f32.xlu0 %v1820
        %v1946 = vpop.xlane.xlu0 %1945
        %1947 = vadd.xlane.f32.xlu0 %v1821
        %v1948 = vpop.xlane.xlu0 %1947
        %1949 = vadd.xlane.f32.xlu0 %v1822
        %v1950 = vpop.xlane.xlu0 %1949
        %v1951 = vrcp.pop 128.0
        %v1952 = vmul.f32 %v1824, %v1951
        %v1953 = vmul.f32 %v1826, %v1951
        %v1954 = vmul.f32 %v1828, %v1951
        %v1955 = vmul.f32 %v1830, %v1951
        %v1956 = vmul.f32 %v1832, %v1951
        %v1957 = vmul.f32 %v1834, %v1951
        %v1958 = vmul.f32 %v1836, %v1951
        %v1959 = vmul.f32 %v1838, %v1951
        %v1960 = vmul.f32 %v1840, %v1951
        %v1961 = vmul.f32 %v1842, %v1951
        %v1962 = vmul.f32 %v1844, %v1951
        %v1963 = vmul.f32 %v1846, %v1951
        %v1964 = vmul.f32 %v1848, %v1951
        %v1965 = vmul.f32 %v1850, %v1951
        %v1966 = vmul.f32 %v1852, %v1951
        %v1967 = vmul.f32 %v1854, %v1951
        %v1968 = vmul.f32 %v1856, %v1951
        %v1969 = vmul.f32 %v1858, %v1951
        %v1970 = vmul.f32 %v1860, %v1951
        %v1971 = vmul.f32 %v1862, %v1951
        %v1972 = vmul.f32 %v1864, %v1951
        %v1973 = vmul.f32 %v1866, %v1951
        %v1974 = vmul.f32 %v1868, %v1951
        %v1975 = vmul.f32 %v1870, %v1951
        %v1976 = vmul.f32 %v1872, %v1951
        %v1977 = vmul.f32 %v1874, %v1951
        %v1978 = vmul.f32 %v1876, %v1951
        %v1979 = vmul.f32 %v1878, %v1951
        %v1980 = vmul.f32 %v1880, %v1951
        %v1981 = vmul.f32 %v1882, %v1951
        %v1982 = vmul.f32 %v1884, %v1951
        %v1983 = vmul.f32 %v1886, %v1951
        %v1984 = vmul.f32 %v1888, %v1951
        %v1985 = vmul.f32 %v1890, %v1951
        %v1986 = vmul.f32 %v1892, %v1951
        %v1987 = vmul.f32 %v1894, %v1951
        %v1988 = vmul.f32 %v1896, %v1951
        %v1989 = vmul.f32 %v1898, %v1951
        %v1990 = vmul.f32 %v1900, %v1951
        %v1991 = vmul.f32 %v1902, %v1951
        %v1992 = vmul.f32 %v1904, %v1951
        %v1993 = vmul.f32 %v1906, %v1951
        %v1994 = vmul.f32 %v1908, %v1951
        %v1995 = vmul.f32 %v1910, %v1951
        %v1996 = vmul.f32 %v1912, %v1951
        %v1997 = vmul.f32 %v1914, %v1951
        %v1998 = vmul.f32 %v1916, %v1951
        %v1999 = vmul.f32 %v1918, %v1951
        %v2000 = vmul.f32 %v1920, %v1951
        %v2001 = vmul.f32 %v1922, %v1951
        %v2002 = vmul.f32 %v1924, %v1951
        %v2003 = vmul.f32 %v1926, %v1951
        %v2004 = vmul.f32 %v1928, %v1951
        %v2005 = vmul.f32 %v1930, %v1951
        %v2006 = vmul.f32 %v1932, %v1951
        %v2007 = vmul.f32 %v1934, %v1951
        %v2008 = vmul.f32 %v1936, %v1951
        %v2009 = vmul.f32 %v1938, %v1951
        %v2010 = vmul.f32 %v1940, %v1951
        %v2011 = vmul.f32 %v1942, %v1951
        %v2012 = vmul.f32 %v1944, %v1951
        %v2013 = vmul.f32 %v1946, %v1951
        %v2014 = vmul.f32 %v1948, %v1951
        %v2015 = vmul.f32 %v1950, %v1951
        %v2016 = vadd.f32 %v1952, 1e-06
        %v2017 = vadd.f32 %v1953, 1e-06
        %v2018 = vadd.f32 %v1954, 1e-06
        %v2019 = vadd.f32 %v1955, 1e-06
        %v2020 = vadd.f32 %v1956, 1e-06
        %v2021 = vadd.f32 %v1957, 1e-06
        %v2022 = vadd.f32 %v1958, 1e-06
        %v2023 = vadd.f32 %v1959, 1e-06
        %v2024 = vadd.f32 %v1960, 1e-06
        %v2025 = vadd.f32 %v1961, 1e-06
        %v2026 = vadd.f32 %v1962, 1e-06
        %v2027 = vadd.f32 %v1963, 1e-06
        %v2028 = vadd.f32 %v1964, 1e-06
        %v2029 = vadd.f32 %v1965, 1e-06
        %v2030 = vadd.f32 %v1966, 1e-06
        %v2031 = vadd.f32 %v1967, 1e-06
        %v2032 = vadd.f32 %v1968, 1e-06
        %v2033 = vadd.f32 %v1969, 1e-06
        %v2034 = vadd.f32 %v1970, 1e-06
        %v2035 = vadd.f32 %v1971, 1e-06
        %v2036 = vadd.f32 %v1972, 1e-06
        %v2037 = vadd.f32 %v1973, 1e-06
        %v2038 = vadd.f32 %v1974, 1e-06
        %v2039 = vadd.f32 %v1975, 1e-06
        %v2040 = vadd.f32 %v1976, 1e-06
        %v2041 = vadd.f32 %v1977, 1e-06
        %v2042 = vadd.f32 %v1978, 1e-06
        %v2043 = vadd.f32 %v1979, 1e-06
        %v2044 = vadd.f32 %v1980, 1e-06
        %v2045 = vadd.f32 %v1981, 1e-06
        %v2046 = vadd.f32 %v1982, 1e-06
        %v2047 = vadd.f32 %v1983, 1e-06
        %v2048 = vadd.f32 %v1984, 1e-06
        %v2049 = vadd.f32 %v1985, 1e-06
        %v2050 = vadd.f32 %v1986, 1e-06
        %v2051 = vadd.f32 %v1987, 1e-06
        %v2052 = vadd.f32 %v1988, 1e-06
        %v2053 = vadd.f32 %v1989, 1e-06
        %v2054 = vadd.f32 %v1990, 1e-06
        %v2055 = vadd.f32 %v1991, 1e-06
        %v2056 = vadd.f32 %v1992, 1e-06
        %v2057 = vadd.f32 %v1993, 1e-06
        %v2058 = vadd.f32 %v1994, 1e-06
        %v2059 = vadd.f32 %v1995, 1e-06
        %v2060 = vadd.f32 %v1996, 1e-06
        %v2061 = vadd.f32 %v1997, 1e-06
        %v2062 = vadd.f32 %v1998, 1e-06
        %v2063 = vadd.f32 %v1999, 1e-06
        %v2064 = vadd.f32 %v2000, 1e-06
        %v2065 = vadd.f32 %v2001, 1e-06
        %v2066 = vadd.f32 %v2002, 1e-06
        %v2067 = vadd.f32 %v2003, 1e-06
        %v2068 = vadd.f32 %v2004, 1e-06
        %v2069 = vadd.f32 %v2005, 1e-06
        %v2070 = vadd.f32 %v2006, 1e-06
        %v2071 = vadd.f32 %v2007, 1e-06
        %v2072 = vadd.f32 %v2008, 1e-06
        %v2073 = vadd.f32 %v2009, 1e-06
        %v2074 = vadd.f32 %v2010, 1e-06
        %v2075 = vadd.f32 %v2011, 1e-06
        %v2076 = vadd.f32 %v2012, 1e-06
        %v2077 = vadd.f32 %v2013, 1e-06
        %v2078 = vadd.f32 %v2014, 1e-06
        %v2079 = vadd.f32 %v2015, 1e-06
        %v2080 = vrsqrt.pop %v2016
        %v2081 = vrsqrt.pop %v2017
        %v2082 = vrsqrt.pop %v2018
        %v2083 = vrsqrt.pop %v2019
        %v2084 = vrsqrt.pop %v2020
        %v2085 = vrsqrt.pop %v2021
        %v2086 = vrsqrt.pop %v2022
        %v2087 = vrsqrt.pop %v2023
        %v2088 = vrsqrt.pop %v2024
        %v2089 = vrsqrt.pop %v2025
        %v2090 = vrsqrt.pop %v2026
        %v2091 = vrsqrt.pop %v2027
        %v2092 = vrsqrt.pop %v2028
        %v2093 = vrsqrt.pop %v2029
        %v2094 = vrsqrt.pop %v2030
        %v2095 = vrsqrt.pop %v2031
        %v2096 = vrsqrt.pop %v2032
        %v2097 = vrsqrt.pop %v2033
        %v2098 = vrsqrt.pop %v2034
        %v2099 = vrsqrt.pop %v2035
        %v2100 = vrsqrt.pop %v2036
        %v2101 = vrsqrt.pop %v2037
        %v2102 = vrsqrt.pop %v2038
        %v2103 = vrsqrt.pop %v2039
        %v2104 = vrsqrt.pop %v2040
        %v2105 = vrsqrt.pop %v2041
        %v2106 = vrsqrt.pop %v2042
        %v2107 = vrsqrt.pop %v2043
        %v2108 = vrsqrt.pop %v2044
        %v2109 = vrsqrt.pop %v2045
        %v2110 = vrsqrt.pop %v2046
        %v2111 = vrsqrt.pop %v2047
        %v2112 = vrsqrt.pop %v2048
        %v2113 = vrsqrt.pop %v2049
        %v2114 = vrsqrt.pop %v2050
        %v2115 = vrsqrt.pop %v2051
        %v2116 = vrsqrt.pop %v2052
        %v2117 = vrsqrt.pop %v2053
        %v2118 = vrsqrt.pop %v2054
        %v2119 = vrsqrt.pop %v2055
        %v2120 = vrsqrt.pop %v2056
        %v2121 = vrsqrt.pop %v2057
        %v2122 = vrsqrt.pop %v2058
        %v2123 = vrsqrt.pop %v2059
        %v2124 = vrsqrt.pop %v2060
        %v2125 = vrsqrt.pop %v2061
        %v2126 = vrsqrt.pop %v2062
        %v2127 = vrsqrt.pop %v2063
        %v2128 = vrsqrt.pop %v2064
        %v2129 = vrsqrt.pop %v2065
        %v2130 = vrsqrt.pop %v2066
        %v2131 = vrsqrt.pop %v2067
        %v2132 = vrsqrt.pop %v2068
        %v2133 = vrsqrt.pop %v2069
        %v2134 = vrsqrt.pop %v2070
        %v2135 = vrsqrt.pop %v2071
        %v2136 = vrsqrt.pop %v2072
        %v2137 = vrsqrt.pop %v2073
        %v2138 = vrsqrt.pop %v2074
        %v2139 = vrsqrt.pop %v2075
        %v2140 = vrsqrt.pop %v2076
        %v2141 = vrsqrt.pop %v2077
        %v2142 = vrsqrt.pop %v2078
        %v2143 = vrsqrt.pop %v2079
        %v2144 = vmul.f32 %v510, %v2080
        %v2145 = vmul.f32 %v515, %v2081
        %v2146 = vmul.f32 %v520, %v2082
        %v2147 = vmul.f32 %v525, %v2083
        %v2148 = vmul.f32 %v530, %v2084
        %v2149 = vmul.f32 %v535, %v2085
        %v2150 = vmul.f32 %v540, %v2086
        %v2151 = vmul.f32 %v545, %v2087
        %v2152 = vmul.f32 %v550, %v2088
        %v2153 = vmul.f32 %v555, %v2089
        %v2154 = vmul.f32 %v560, %v2090
        %v2155 = vmul.f32 %v565, %v2091
        %v2156 = vmul.f32 %v570, %v2092
        %v2157 = vmul.f32 %v575, %v2093
        %v2158 = vmul.f32 %v580, %v2094
        %v2159 = vmul.f32 %v585, %v2095
        %v2160 = vmul.f32 %v590, %v2096
        %v2161 = vmul.f32 %v595, %v2097
        %v2162 = vmul.f32 %v600, %v2098
        %v2163 = vmul.f32 %v605, %v2099
        %v2164 = vmul.f32 %v610, %v2100
        %v2165 = vmul.f32 %v615, %v2101
        %v2166 = vmul.f32 %v620, %v2102
        %v2167 = vmul.f32 %v625, %v2103
        %v2168 = vmul.f32 %v630, %v2104
        %v2169 = vmul.f32 %v635, %v2105
        %v2170 = vmul.f32 %v640, %v2106
        %v2171 = vmul.f32 %v645, %v2107
        %v2172 = vmul.f32 %v650, %v2108
        %v2173 = vmul.f32 %v655, %v2109
        %v2174 = vmul.f32 %v660, %v2110
        %v2175 = vmul.f32 %v665, %v2111
        %v2176 = vmul.f32 %v670, %v2112
        %v2177 = vmul.f32 %v675, %v2113
        %v2178 = vmul.f32 %v680, %v2114
        %v2179 = vmul.f32 %v685, %v2115
        %v2180 = vmul.f32 %v690, %v2116
        %v2181 = vmul.f32 %v695, %v2117
        %v2182 = vmul.f32 %v700, %v2118
        %v2183 = vmul.f32 %v705, %v2119
        %v2184 = vmul.f32 %v710, %v2120
        %v2185 = vmul.f32 %v715, %v2121
        %v2186 = vmul.f32 %v720, %v2122
        %v2187 = vmul.f32 %v725, %v2123
        %v2188 = vmul.f32 %v730, %v2124
        %v2189 = vmul.f32 %v735, %v2125
        %v2190 = vmul.f32 %v740, %v2126
        %v2191 = vmul.f32 %v745, %v2127
        %v2192 = vmul.f32 %v750, %v2128
        %v2193 = vmul.f32 %v755, %v2129
        %v2194 = vmul.f32 %v760, %v2130
        %v2195 = vmul.f32 %v765, %v2131
        %v2196 = vmul.f32 %v770, %v2132
        %v2197 = vmul.f32 %v775, %v2133
        %v2198 = vmul.f32 %v780, %v2134
        %v2199 = vmul.f32 %v785, %v2135
        %v2200 = vmul.f32 %v790, %v2136
        %v2201 = vmul.f32 %v795, %v2137
        %v2202 = vmul.f32 %v800, %v2138
        %v2203 = vmul.f32 %v805, %v2139
        %v2204 = vmul.f32 %v810, %v2140
        %v2205 = vmul.f32 %v815, %v2141
        %v2206 = vmul.f32 %v820, %v2142
        %v2207 = vmul.f32 %v825, %v2143
        %v2209 = vlaneseq
        %v2210 = vshrl.u32 %v2209, 7
        %v2211 = vsub.s32 0, %v2210
        %v2212 = vrot.slane %v1630, %v2211
        %v2214 = vmul.f32 %v2144, %v2212
        %v2215 = vmul.f32 %v2145, %v2212
        %v2216 = vmul.f32 %v2146, %v2212
        %v2217 = vmul.f32 %v2147, %v2212
        %v2218 = vmul.f32 %v2148, %v2212
        %v2219 = vmul.f32 %v2149, %v2212
        %v2220 = vmul.f32 %v2150, %v2212
        %v2221 = vmul.f32 %v2151, %v2212
        %v2222 = vmul.f32 %v2152, %v2212
        %v2223 = vmul.f32 %v2153, %v2212
        %v2224 = vmul.f32 %v2154, %v2212
        %v2225 = vmul.f32 %v2155, %v2212
        %v2226 = vmul.f32 %v2156, %v2212
        %v2227 = vmul.f32 %v2157, %v2212
        %v2228 = vmul.f32 %v2158, %v2212
        %v2229 = vmul.f32 %v2159, %v2212
        %v2230 = vmul.f32 %v2160, %v2212
        %v2231 = vmul.f32 %v2161, %v2212
        %v2232 = vmul.f32 %v2162, %v2212
        %v2233 = vmul.f32 %v2163, %v2212
        %v2234 = vmul.f32 %v2164, %v2212
        %v2235 = vmul.f32 %v2165, %v2212
        %v2236 = vmul.f32 %v2166, %v2212
        %v2237 = vmul.f32 %v2167, %v2212
        %v2238 = vmul.f32 %v2168, %v2212
        %v2239 = vmul.f32 %v2169, %v2212
        %v2240 = vmul.f32 %v2170, %v2212
        %v2241 = vmul.f32 %v2171, %v2212
        %v2242 = vmul.f32 %v2172, %v2212
        %v2243 = vmul.f32 %v2173, %v2212
        %v2244 = vmul.f32 %v2174, %v2212
        %v2245 = vmul.f32 %v2175, %v2212
        %v2246 = vmul.f32 %v2176, %v2212
        %v2247 = vmul.f32 %v2177, %v2212
        %v2248 = vmul.f32 %v2178, %v2212
        %v2249 = vmul.f32 %v2179, %v2212
        %v2250 = vmul.f32 %v2180, %v2212
        %v2251 = vmul.f32 %v2181, %v2212
        %v2252 = vmul.f32 %v2182, %v2212
        %v2253 = vmul.f32 %v2183, %v2212
        %v2254 = vmul.f32 %v2184, %v2212
        %v2255 = vmul.f32 %v2185, %v2212
        %v2256 = vmul.f32 %v2186, %v2212
        %v2257 = vmul.f32 %v2187, %v2212
        %v2258 = vmul.f32 %v2188, %v2212
        %v2259 = vmul.f32 %v2189, %v2212
        %v2260 = vmul.f32 %v2190, %v2212
        %v2261 = vmul.f32 %v2191, %v2212
        %v2262 = vmul.f32 %v2192, %v2212
        %v2263 = vmul.f32 %v2193, %v2212
        %v2264 = vmul.f32 %v2194, %v2212
        %v2265 = vmul.f32 %v2195, %v2212
        %v2266 = vmul.f32 %v2196, %v2212
        %v2267 = vmul.f32 %v2197, %v2212
        %v2268 = vmul.f32 %v2198, %v2212
        %v2269 = vmul.f32 %v2199, %v2212
        %v2270 = vmul.f32 %v2200, %v2212
        %v2271 = vmul.f32 %v2201, %v2212
        %v2272 = vmul.f32 %v2202, %v2212
        %v2273 = vmul.f32 %v2203, %v2212
        %v2274 = vmul.f32 %v2204, %v2212
        %v2275 = vmul.f32 %v2205, %v2212
        %v2276 = vmul.f32 %v2206, %v2212
        %v2277 = vmul.f32 %v2207, %v2212
        %2278 = vrot.lane.b32.xlu0 %v2214, 127
        %v2279 = vpop.permute.xlu0 %2278
        %2280 = vrot.lane.b32.xlu0 %v2215, 127
        %v2281 = vpop.permute.xlu0 %2280
        %2282 = vrot.lane.b32.xlu0 %v2216, 127
        %v2283 = vpop.permute.xlu0 %2282
        %2284 = vrot.lane.b32.xlu0 %v2217, 127
        %v2285 = vpop.permute.xlu0 %2284
        %2286 = vrot.lane.b32.xlu0 %v2218, 127
        %v2287 = vpop.permute.xlu0 %2286
        %2288 = vrot.lane.b32.xlu0 %v2219, 127
        %v2289 = vpop.permute.xlu0 %2288
        %2290 = vrot.lane.b32.xlu0 %v2220, 127
        %v2291 = vpop.permute.xlu0 %2290
        %2292 = vrot.lane.b32.xlu0 %v2221, 127
        %v2293 = vpop.permute.xlu0 %2292
        %2294 = vrot.lane.b32.xlu0 %v2222, 127
        %v2295 = vpop.permute.xlu0 %2294
        %2296 = vrot.lane.b32.xlu0 %v2223, 127
        %v2297 = vpop.permute.xlu0 %2296
        %2298 = vrot.lane.b32.xlu0 %v2224, 127
        %v2299 = vpop.permute.xlu0 %2298
        %2300 = vrot.lane.b32.xlu0 %v2225, 127
        %v2301 = vpop.permute.xlu0 %2300
        %2302 = vrot.lane.b32.xlu0 %v2226, 127
        %v2303 = vpop.permute.xlu0 %2302
        %2304 = vrot.lane.b32.xlu0 %v2227, 127
        %v2305 = vpop.permute.xlu0 %2304
        %2306 = vrot.lane.b32.xlu0 %v2228, 127
        %v2307 = vpop.permute.xlu0 %2306
        %2308 = vrot.lane.b32.xlu0 %v2229, 127
        %v2309 = vpop.permute.xlu0 %2308
        %2310 = vrot.lane.b32.xlu0 %v2230, 127
        %v2311 = vpop.permute.xlu0 %2310
        %2312 = vrot.lane.b32.xlu0 %v2231, 127
        %v2313 = vpop.permute.xlu0 %2312
        %2314 = vrot.lane.b32.xlu0 %v2232, 127
        %v2315 = vpop.permute.xlu0 %2314
        %2316 = vrot.lane.b32.xlu0 %v2233, 127
        %v2317 = vpop.permute.xlu0 %2316
        %2318 = vrot.lane.b32.xlu0 %v2234, 127
        %v2319 = vpop.permute.xlu0 %2318
        %2320 = vrot.lane.b32.xlu0 %v2235, 127
        %v2321 = vpop.permute.xlu0 %2320
        %2322 = vrot.lane.b32.xlu0 %v2236, 127
        %v2323 = vpop.permute.xlu0 %2322
        %2324 = vrot.lane.b32.xlu0 %v2237, 127
        %v2325 = vpop.permute.xlu0 %2324
        %2326 = vrot.lane.b32.xlu0 %v2238, 127
        %v2327 = vpop.permute.xlu0 %2326
        %2328 = vrot.lane.b32.xlu0 %v2239, 127
        %v2329 = vpop.permute.xlu0 %2328
        %2330 = vrot.lane.b32.xlu0 %v2240, 127
        %v2331 = vpop.permute.xlu0 %2330
        %2332 = vrot.lane.b32.xlu0 %v2241, 127
        %v2333 = vpop.permute.xlu0 %2332
        %2334 = vrot.lane.b32.xlu0 %v2242, 127
        %v2335 = vpop.permute.xlu0 %2334
        %2336 = vrot.lane.b32.xlu0 %v2243, 127
        %v2337 = vpop.permute.xlu0 %2336
        %2338 = vrot.lane.b32.xlu0 %v2244, 127
        %v2339 = vpop.permute.xlu0 %2338
        %2340 = vrot.lane.b32.xlu0 %v2245, 127
        %v2341 = vpop.permute.xlu0 %2340
        %2342 = vrot.lane.b32.xlu0 %v2246, 127
        %v2343 = vpop.permute.xlu0 %2342
        %2344 = vrot.lane.b32.xlu0 %v2247, 127
        %v2345 = vpop.permute.xlu0 %2344
        %2346 = vrot.lane.b32.xlu0 %v2248, 127
        %v2347 = vpop.permute.xlu0 %2346
        %2348 = vrot.lane.b32.xlu0 %v2249, 127
        %v2349 = vpop.permute.xlu0 %2348
        %2350 = vrot.lane.b32.xlu0 %v2250, 127
        %v2351 = vpop.permute.xlu0 %2350
        %2352 = vrot.lane.b32.xlu0 %v2251, 127
        %v2353 = vpop.permute.xlu0 %2352
        %2354 = vrot.lane.b32.xlu0 %v2252, 127
        %v2355 = vpop.permute.xlu0 %2354
        %2356 = vrot.lane.b32.xlu0 %v2253, 127
        %v2357 = vpop.permute.xlu0 %2356
        %2358 = vrot.lane.b32.xlu0 %v2254, 127
        %v2359 = vpop.permute.xlu0 %2358
        %2360 = vrot.lane.b32.xlu0 %v2255, 127
        %v2361 = vpop.permute.xlu0 %2360
        %2362 = vrot.lane.b32.xlu0 %v2256, 127
        %v2363 = vpop.permute.xlu0 %2362
        %2364 = vrot.lane.b32.xlu0 %v2257, 127
        %v2365 = vpop.permute.xlu0 %2364
        %2366 = vrot.lane.b32.xlu0 %v2258, 127
        %v2367 = vpop.permute.xlu0 %2366
        %2368 = vrot.lane.b32.xlu0 %v2259, 127
        %v2369 = vpop.permute.xlu0 %2368
        %2370 = vrot.lane.b32.xlu0 %v2260, 127
        %v2371 = vpop.permute.xlu0 %2370
        %2372 = vrot.lane.b32.xlu0 %v2261, 127
        %v2373 = vpop.permute.xlu0 %2372
        %2374 = vrot.lane.b32.xlu0 %v2262, 127
        %v2375 = vpop.permute.xlu0 %2374
        %2376 = vrot.lane.b32.xlu0 %v2263, 127
        %v2377 = vpop.permute.xlu0 %2376
        %2378 = vrot.lane.b32.xlu0 %v2264, 127
        %v2379 = vpop.permute.xlu0 %2378
        %2380 = vrot.lane.b32.xlu0 %v2265, 127
        %v2381 = vpop.permute.xlu0 %2380
        %2382 = vrot.lane.b32.xlu0 %v2266, 127
        %v2383 = vpop.permute.xlu0 %2382
        %2384 = vrot.lane.b32.xlu0 %v2267, 127
        %v2385 = vpop.permute.xlu0 %2384
        %2386 = vrot.lane.b32.xlu0 %v2268, 127
        %v2387 = vpop.permute.xlu0 %2386
        %2388 = vrot.lane.b32.xlu0 %v2269, 127
        %v2389 = vpop.permute.xlu0 %2388
        %2390 = vrot.lane.b32.xlu0 %v2270, 127
        %v2391 = vpop.permute.xlu0 %2390
        %2392 = vrot.lane.b32.xlu0 %v2271, 127
        %v2393 = vpop.permute.xlu0 %2392
        %2394 = vrot.lane.b32.xlu0 %v2272, 127
        %v2395 = vpop.permute.xlu0 %2394
        %2396 = vrot.lane.b32.xlu0 %v2273, 127
        %v2397 = vpop.permute.xlu0 %2396
        %2398 = vrot.lane.b32.xlu0 %v2274, 127
        %v2399 = vpop.permute.xlu0 %2398
        %2400 = vrot.lane.b32.xlu0 %v2275, 127
        %v2401 = vpop.permute.xlu0 %2400
        %2402 = vrot.lane.b32.xlu0 %v2276, 127
        %v2403 = vpop.permute.xlu0 %2402
        %2404 = vrot.lane.b32.xlu0 %v2277, 127
        %v2405 = vpop.permute.xlu0 %2404
        %2406 = vrot.lane.b32.xlu0 %v2214, 1
        %v2407 = vpop.permute.xlu0 %2406
        %2408 = vrot.lane.b32.xlu0 %v2215, 1
        %v2409 = vpop.permute.xlu0 %2408
        %2410 = vrot.lane.b32.xlu0 %v2216, 1
        %v2411 = vpop.permute.xlu0 %2410
        %2412 = vrot.lane.b32.xlu0 %v2217, 1
        %v2413 = vpop.permute.xlu0 %2412
        %2414 = vrot.lane.b32.xlu0 %v2218, 1
        %v2415 = vpop.permute.xlu0 %2414
        %2416 = vrot.lane.b32.xlu0 %v2219, 1
        %v2417 = vpop.permute.xlu0 %2416
        %2418 = vrot.lane.b32.xlu0 %v2220, 1
        %v2419 = vpop.permute.xlu0 %2418
        %2420 = vrot.lane.b32.xlu0 %v2221, 1
        %v2421 = vpop.permute.xlu0 %2420
        %2422 = vrot.lane.b32.xlu0 %v2222, 1
        %v2423 = vpop.permute.xlu0 %2422
        %2424 = vrot.lane.b32.xlu0 %v2223, 1
        %v2425 = vpop.permute.xlu0 %2424
        %2426 = vrot.lane.b32.xlu0 %v2224, 1
        %v2427 = vpop.permute.xlu0 %2426
        %2428 = vrot.lane.b32.xlu0 %v2225, 1
        %v2429 = vpop.permute.xlu0 %2428
        %2430 = vrot.lane.b32.xlu0 %v2226, 1
        %v2431 = vpop.permute.xlu0 %2430
        %2432 = vrot.lane.b32.xlu0 %v2227, 1
        %v2433 = vpop.permute.xlu0 %2432
        %2434 = vrot.lane.b32.xlu0 %v2228, 1
        %v2435 = vpop.permute.xlu0 %2434
        %2436 = vrot.lane.b32.xlu0 %v2229, 1
        %v2437 = vpop.permute.xlu0 %2436
        %2438 = vrot.lane.b32.xlu0 %v2230, 1
        %v2439 = vpop.permute.xlu0 %2438
        %2440 = vrot.lane.b32.xlu0 %v2231, 1
        %v2441 = vpop.permute.xlu0 %2440
        %2442 = vrot.lane.b32.xlu0 %v2232, 1
        %v2443 = vpop.permute.xlu0 %2442
        %2444 = vrot.lane.b32.xlu0 %v2233, 1
        %v2445 = vpop.permute.xlu0 %2444
        %2446 = vrot.lane.b32.xlu0 %v2234, 1
        %v2447 = vpop.permute.xlu0 %2446
        %2448 = vrot.lane.b32.xlu0 %v2235, 1
        %v2449 = vpop.permute.xlu0 %2448
        %2450 = vrot.lane.b32.xlu0 %v2236, 1
        %v2451 = vpop.permute.xlu0 %2450
        %2452 = vrot.lane.b32.xlu0 %v2237, 1
        %v2453 = vpop.permute.xlu0 %2452
        %2454 = vrot.lane.b32.xlu0 %v2238, 1
        %v2455 = vpop.permute.xlu0 %2454
        %2456 = vrot.lane.b32.xlu0 %v2239, 1
        %v2457 = vpop.permute.xlu0 %2456
        %2458 = vrot.lane.b32.xlu0 %v2240, 1
        %v2459 = vpop.permute.xlu0 %2458
        %2460 = vrot.lane.b32.xlu0 %v2241, 1
        %v2461 = vpop.permute.xlu0 %2460
        %2462 = vrot.lane.b32.xlu0 %v2242, 1
        %v2463 = vpop.permute.xlu0 %2462
        %2464 = vrot.lane.b32.xlu0 %v2243, 1
        %v2465 = vpop.permute.xlu0 %2464
        %2466 = vrot.lane.b32.xlu0 %v2244, 1
        %v2467 = vpop.permute.xlu0 %2466
        %2468 = vrot.lane.b32.xlu0 %v2245, 1
        %v2469 = vpop.permute.xlu0 %2468
        %2470 = vrot.lane.b32.xlu0 %v2246, 1
        %v2471 = vpop.permute.xlu0 %2470
        %2472 = vrot.lane.b32.xlu0 %v2247, 1
        %v2473 = vpop.permute.xlu0 %2472
        %2474 = vrot.lane.b32.xlu0 %v2248, 1
        %v2475 = vpop.permute.xlu0 %2474
        %2476 = vrot.lane.b32.xlu0 %v2249, 1
        %v2477 = vpop.permute.xlu0 %2476
        %2478 = vrot.lane.b32.xlu0 %v2250, 1
        %v2479 = vpop.permute.xlu0 %2478
        %2480 = vrot.lane.b32.xlu0 %v2251, 1
        %v2481 = vpop.permute.xlu0 %2480
        %2482 = vrot.lane.b32.xlu0 %v2252, 1
        %v2483 = vpop.permute.xlu0 %2482
        %2484 = vrot.lane.b32.xlu0 %v2253, 1
        %v2485 = vpop.permute.xlu0 %2484
        %2486 = vrot.lane.b32.xlu0 %v2254, 1
        %v2487 = vpop.permute.xlu0 %2486
        %2488 = vrot.lane.b32.xlu0 %v2255, 1
        %v2489 = vpop.permute.xlu0 %2488
        %2490 = vrot.lane.b32.xlu0 %v2256, 1
        %v2491 = vpop.permute.xlu0 %2490
        %2492 = vrot.lane.b32.xlu0 %v2257, 1
        %v2493 = vpop.permute.xlu0 %2492
        %2494 = vrot.lane.b32.xlu0 %v2258, 1
        %v2495 = vpop.permute.xlu0 %2494
        %2496 = vrot.lane.b32.xlu0 %v2259, 1
        %v2497 = vpop.permute.xlu0 %2496
        %2498 = vrot.lane.b32.xlu0 %v2260, 1
        %v2499 = vpop.permute.xlu0 %2498
        %2500 = vrot.lane.b32.xlu0 %v2261, 1
        %v2501 = vpop.permute.xlu0 %2500
        %2502 = vrot.lane.b32.xlu0 %v2262, 1
        %v2503 = vpop.permute.xlu0 %2502
        %2504 = vrot.lane.b32.xlu0 %v2263, 1
        %v2505 = vpop.permute.xlu0 %2504
        %2506 = vrot.lane.b32.xlu0 %v2264, 1
        %v2507 = vpop.permute.xlu0 %2506
        %2508 = vrot.lane.b32.xlu0 %v2265, 1
        %v2509 = vpop.permute.xlu0 %2508
        %2510 = vrot.lane.b32.xlu0 %v2266, 1
        %v2511 = vpop.permute.xlu0 %2510
        %2512 = vrot.lane.b32.xlu0 %v2267, 1
        %v2513 = vpop.permute.xlu0 %2512
        %2514 = vrot.lane.b32.xlu0 %v2268, 1
        %v2515 = vpop.permute.xlu0 %2514
        %2516 = vrot.lane.b32.xlu0 %v2269, 1
        %v2517 = vpop.permute.xlu0 %2516
        %2518 = vrot.lane.b32.xlu0 %v2270, 1
        %v2519 = vpop.permute.xlu0 %2518
        %2520 = vrot.lane.b32.xlu0 %v2271, 1
        %v2521 = vpop.permute.xlu0 %2520
        %2522 = vrot.lane.b32.xlu0 %v2272, 1
        %v2523 = vpop.permute.xlu0 %2522
        %2524 = vrot.lane.b32.xlu0 %v2273, 1
        %v2525 = vpop.permute.xlu0 %2524
        %2526 = vrot.lane.b32.xlu0 %v2274, 1
        %v2527 = vpop.permute.xlu0 %2526
        %2528 = vrot.lane.b32.xlu0 %v2275, 1
        %v2529 = vpop.permute.xlu0 %2528
        %2530 = vrot.lane.b32.xlu0 %v2276, 1
        %v2531 = vpop.permute.xlu0 %2530
        %2532 = vrot.lane.b32.xlu0 %v2277, 1
        %v2533 = vpop.permute.xlu0 %2532
        %v2534 = vlaneseq
        %v2535 = vand.u32 %v2534, 127
        %vm2536 = vcmp.lt.s32.totalorder %v2535, 0
        %v2537 = vsub.s32 0, %v2535
        %v2538 = vsel %vm2536, %v2537, %v2535
        %v2539 = vshrl.u32 %v2538, 1
        %v2540 = vand.u32 %v2538, 1
        %v2541 = vsub.s32 0, %v2540
        %v2542 = vsel %vm2536, %v2541, %v2540
        %vm2543 = vcmp.ne.s32.totalorder %v2542, 0
        %vm2544 = vcmp.lt.s32.totalorder %v2542, 0
        %vm2545 = vmand %vm2544, %vm2543
        %v2546 = vadd.s32 %v2542, 2
        %v2547 = vsel %vm2545, %v2546, %v2542
        %vm2548 = vcmp.eq.s32.totalorder %v2547, 0
        %v2549 = vsub.f32 0.0, %v2279
        %v2550 = vsub.f32 0.0, %v2281
        %v2551 = vsub.f32 0.0, %v2283
        %v2552 = vsub.f32 0.0, %v2285
        %v2553 = vsub.f32 0.0, %v2287
        %v2554 = vsub.f32 0.0, %v2289
        %v2555 = vsub.f32 0.0, %v2291
        %v2556 = vsub.f32 0.0, %v2293
        %v2557 = vsub.f32 0.0, %v2295
        %v2558 = vsub.f32 0.0, %v2297
        %v2559 = vsub.f32 0.0, %v2299
        %v2560 = vsub.f32 0.0, %v2301
        %v2561 = vsub.f32 0.0, %v2303
        %v2562 = vsub.f32 0.0, %v2305
        %v2563 = vsub.f32 0.0, %v2307
        %v2564 = vsub.f32 0.0, %v2309
        %v2565 = vsub.f32 0.0, %v2311
        %v2566 = vsub.f32 0.0, %v2313
        %v2567 = vsub.f32 0.0, %v2315
        %v2568 = vsub.f32 0.0, %v2317
        %v2569 = vsub.f32 0.0, %v2319
        %v2570 = vsub.f32 0.0, %v2321
        %v2571 = vsub.f32 0.0, %v2323
        %v2572 = vsub.f32 0.0, %v2325
        %v2573 = vsub.f32 0.0, %v2327
        %v2574 = vsub.f32 0.0, %v2329
        %v2575 = vsub.f32 0.0, %v2331
        %v2576 = vsub.f32 0.0, %v2333
        %v2577 = vsub.f32 0.0, %v2335
        %v2578 = vsub.f32 0.0, %v2337
        %v2579 = vsub.f32 0.0, %v2339
        %v2580 = vsub.f32 0.0, %v2341
        %v2581 = vsub.f32 0.0, %v2343
        %v2582 = vsub.f32 0.0, %v2345
        %v2583 = vsub.f32 0.0, %v2347
        %v2584 = vsub.f32 0.0, %v2349
        %v2585 = vsub.f32 0.0, %v2351
        %v2586 = vsub.f32 0.0, %v2353
        %v2587 = vsub.f32 0.0, %v2355
        %v2588 = vsub.f32 0.0, %v2357
        %v2589 = vsub.f32 0.0, %v2359
        %v2590 = vsub.f32 0.0, %v2361
        %v2591 = vsub.f32 0.0, %v2363
        %v2592 = vsub.f32 0.0, %v2365
        %v2593 = vsub.f32 0.0, %v2367
        %v2594 = vsub.f32 0.0, %v2369
        %v2595 = vsub.f32 0.0, %v2371
        %v2596 = vsub.f32 0.0, %v2373
        %v2597 = vsub.f32 0.0, %v2375
        %v2598 = vsub.f32 0.0, %v2377
        %v2599 = vsub.f32 0.0, %v2379
        %v2600 = vsub.f32 0.0, %v2381
        %v2601 = vsub.f32 0.0, %v2383
        %v2602 = vsub.f32 0.0, %v2385
        %v2603 = vsub.f32 0.0, %v2387
        %v2604 = vsub.f32 0.0, %v2389
        %v2605 = vsub.f32 0.0, %v2391
        %v2606 = vsub.f32 0.0, %v2393
        %v2607 = vsub.f32 0.0, %v2395
        %v2608 = vsub.f32 0.0, %v2397
        %v2609 = vsub.f32 0.0, %v2399
        %v2610 = vsub.f32 0.0, %v2401
        %v2611 = vsub.f32 0.0, %v2403
        %v2612 = vsub.f32 0.0, %v2405
        %v2613 = vsel %vm2548, %v2549, %v2407
        %v2614 = vsel %vm2548, %v2550, %v2409
        %v2615 = vsel %vm2548, %v2551, %v2411
        %v2616 = vsel %vm2548, %v2552, %v2413
        %v2617 = vsel %vm2548, %v2553, %v2415
        %v2618 = vsel %vm2548, %v2554, %v2417
        %v2619 = vsel %vm2548, %v2555, %v2419
        %v2620 = vsel %vm2548, %v2556, %v2421
        %v2621 = vsel %vm2548, %v2557, %v2423
        %v2622 = vsel %vm2548, %v2558, %v2425
        %v2623 = vsel %vm2548, %v2559, %v2427
        %v2624 = vsel %vm2548, %v2560, %v2429
        %v2625 = vsel %vm2548, %v2561, %v2431
        %v2626 = vsel %vm2548, %v2562, %v2433
        %v2627 = vsel %vm2548, %v2563, %v2435
        %v2628 = vsel %vm2548, %v2564, %v2437
        %v2629 = vsel %vm2548, %v2565, %v2439
        %v2630 = vsel %vm2548, %v2566, %v2441
        %v2631 = vsel %vm2548, %v2567, %v2443
        %v2632 = vsel %vm2548, %v2568, %v2445
        %v2633 = vsel %vm2548, %v2569, %v2447
        %v2634 = vsel %vm2548, %v2570, %v2449
        %v2635 = vsel %vm2548, %v2571, %v2451
        %v2636 = vsel %vm2548, %v2572, %v2453
        %v2637 = vsel %vm2548, %v2573, %v2455
        %v2638 = vsel %vm2548, %v2574, %v2457
        %v2639 = vsel %vm2548, %v2575, %v2459
        %v2640 = vsel %vm2548, %v2576, %v2461
        %v2641 = vsel %vm2548, %v2577, %v2463
        %v2642 = vsel %vm2548, %v2578, %v2465
        %v2643 = vsel %vm2548, %v2579, %v2467
        %v2644 = vsel %vm2548, %v2580, %v2469
        %v2645 = vsel %vm2548, %v2581, %v2471
        %v2646 = vsel %vm2548, %v2582, %v2473
        %v2647 = vsel %vm2548, %v2583, %v2475
        %v2648 = vsel %vm2548, %v2584, %v2477
        %v2649 = vsel %vm2548, %v2585, %v2479
        %v2650 = vsel %vm2548, %v2586, %v2481
        %v2651 = vsel %vm2548, %v2587, %v2483
        %v2652 = vsel %vm2548, %v2588, %v2485
        %v2653 = vsel %vm2548, %v2589, %v2487
        %v2654 = vsel %vm2548, %v2590, %v2489
        %v2655 = vsel %vm2548, %v2591, %v2491
        %v2656 = vsel %vm2548, %v2592, %v2493
        %v2657 = vsel %vm2548, %v2593, %v2495
        %v2658 = vsel %vm2548, %v2594, %v2497
        %v2659 = vsel %vm2548, %v2595, %v2499
        %v2660 = vsel %vm2548, %v2596, %v2501
        %v2661 = vsel %vm2548, %v2597, %v2503
        %v2662 = vsel %vm2548, %v2598, %v2505
        %v2663 = vsel %vm2548, %v2599, %v2507
        %v2664 = vsel %vm2548, %v2600, %v2509
        %v2665 = vsel %vm2548, %v2601, %v2511
        %v2666 = vsel %vm2548, %v2602, %v2513
        %v2667 = vsel %vm2548, %v2603, %v2515
        %v2668 = vsel %vm2548, %v2604, %v2517
        %v2669 = vsel %vm2548, %v2605, %v2519
        %v2670 = vsel %vm2548, %v2606, %v2521
        %v2671 = vsel %vm2548, %v2607, %v2523
        %v2672 = vsel %vm2548, %v2608, %v2525
        %v2673 = vsel %vm2548, %v2609, %v2527
        %v2674 = vsel %vm2548, %v2610, %v2529
        %v2675 = vsel %vm2548, %v2611, %v2531
        %v2676 = vsel %vm2548, %v2612, %v2533
        %v2677 = vmul.f32 %v2214, %v1631
        %v2678 = vmul.f32 %v2215, %v1632
        %v2679 = vmul.f32 %v2216, %v1633
        %v2680 = vmul.f32 %v2217, %v1634
        %v2681 = vmul.f32 %v2218, %v1635
        %v2682 = vmul.f32 %v2219, %v1636
        %v2683 = vmul.f32 %v2220, %v1637
        %v2684 = vmul.f32 %v2221, %v1638
        %v2685 = vmul.f32 %v2222, %v1639
        %v2686 = vmul.f32 %v2223, %v1640
        %v2687 = vmul.f32 %v2224, %v1641
        %v2688 = vmul.f32 %v2225, %v1642
        %v2689 = vmul.f32 %v2226, %v1643
        %v2690 = vmul.f32 %v2227, %v1644
        %v2691 = vmul.f32 %v2228, %v1645
        %v2692 = vmul.f32 %v2229, %v1646
        %v2693 = vmul.f32 %v2230, %v1647
        %v2694 = vmul.f32 %v2231, %v1648
        %v2695 = vmul.f32 %v2232, %v1649
        %v2696 = vmul.f32 %v2233, %v1650
        %v2697 = vmul.f32 %v2234, %v1651
        %v2698 = vmul.f32 %v2235, %v1652
        %v2699 = vmul.f32 %v2236, %v1653
        %v2700 = vmul.f32 %v2237, %v1654
        %v2701 = vmul.f32 %v2238, %v1655
        %v2702 = vmul.f32 %v2239, %v1656
        %v2703 = vmul.f32 %v2240, %v1657
        %v2704 = vmul.f32 %v2241, %v1658
        %v2705 = vmul.f32 %v2242, %v1659
        %v2706 = vmul.f32 %v2243, %v1660
        %v2707 = vmul.f32 %v2244, %v1661
        %v2708 = vmul.f32 %v2245, %v1662
        %v2709 = vmul.f32 %v2246, %v1663
        %v2710 = vmul.f32 %v2247, %v1664
        %v2711 = vmul.f32 %v2248, %v1665
        %v2712 = vmul.f32 %v2249, %v1666
        %v2713 = vmul.f32 %v2250, %v1667
        %v2714 = vmul.f32 %v2251, %v1668
        %v2715 = vmul.f32 %v2252, %v1669
        %v2716 = vmul.f32 %v2253, %v1670
        %v2717 = vmul.f32 %v2254, %v1671
        %v2718 = vmul.f32 %v2255, %v1672
        %v2719 = vmul.f32 %v2256, %v1673
        %v2720 = vmul.f32 %v2257, %v1674
        %v2721 = vmul.f32 %v2258, %v1675
        %v2722 = vmul.f32 %v2259, %v1676
        %v2723 = vmul.f32 %v2260, %v1677
        %v2724 = vmul.f32 %v2261, %v1678
        %v2725 = vmul.f32 %v2262, %v1679
        %v2726 = vmul.f32 %v2263, %v1680
        %v2727 = vmul.f32 %v2264, %v1681
        %v2728 = vmul.f32 %v2265, %v1682
        %v2729 = vmul.f32 %v2266, %v1683
        %v2730 = vmul.f32 %v2267, %v1684
        %v2731 = vmul.f32 %v2268, %v1685
        %v2732 = vmul.f32 %v2269, %v1686
        %v2733 = vmul.f32 %v2270, %v1687
        %v2734 = vmul.f32 %v2271, %v1688
        %v2735 = vmul.f32 %v2272, %v1689
        %v2736 = vmul.f32 %v2273, %v1690
        %v2737 = vmul.f32 %v2274, %v1691
        %v2738 = vmul.f32 %v2275, %v1692
        %v2739 = vmul.f32 %v2276, %v1693
        %v2740 = vmul.f32 %v2277, %v1694
        %v2741 = vmul.f32 %v2613, %v1695
        %v2742 = vmul.f32 %v2614, %v1696
        %v2743 = vmul.f32 %v2615, %v1697
        %v2744 = vmul.f32 %v2616, %v1698
        %v2745 = vmul.f32 %v2617, %v1699
        %v2746 = vmul.f32 %v2618, %v1700
        %v2747 = vmul.f32 %v2619, %v1701
        %v2748 = vmul.f32 %v2620, %v1702
        %v2749 = vmul.f32 %v2621, %v1703
        %v2750 = vmul.f32 %v2622, %v1704
        %v2751 = vmul.f32 %v2623, %v1705
        %v2752 = vmul.f32 %v2624, %v1706
        %v2753 = vmul.f32 %v2625, %v1707
        %v2754 = vmul.f32 %v2626, %v1708
        %v2755 = vmul.f32 %v2627, %v1709
        %v2756 = vmul.f32 %v2628, %v1710
        %v2757 = vmul.f32 %v2629, %v1711
        %v2758 = vmul.f32 %v2630, %v1712
        %v2759 = vmul.f32 %v2631, %v1713
        %v2760 = vmul.f32 %v2632, %v1714
        %v2761 = vmul.f32 %v2633, %v1715
        %v2762 = vmul.f32 %v2634, %v1716
        %v2763 = vmul.f32 %v2635, %v1717
        %v2764 = vmul.f32 %v2636, %v1718
        %v2765 = vmul.f32 %v2637, %v1719
        %v2766 = vmul.f32 %v2638, %v1720
        %v2767 = vmul.f32 %v2639, %v1721
        %v2768 = vmul.f32 %v2640, %v1722
        %v2769 = vmul.f32 %v2641, %v1723
        %v2770 = vmul.f32 %v2642, %v1724
        %v2771 = vmul.f32 %v2643, %v1725
        %v2772 = vmul.f32 %v2644, %v1726
        %v2773 = vmul.f32 %v2645, %v1727
        %v2774 = vmul.f32 %v2646, %v1728
        %v2775 = vmul.f32 %v2647, %v1729
        %v2776 = vmul.f32 %v2648, %v1730
        %v2777 = vmul.f32 %v2649, %v1731
        %v2778 = vmul.f32 %v2650, %v1732
        %v2779 = vmul.f32 %v2651, %v1733
        %v2780 = vmul.f32 %v2652, %v1734
        %v2781 = vmul.f32 %v2653, %v1735
        %v2782 = vmul.f32 %v2654, %v1736
        %v2783 = vmul.f32 %v2655, %v1737
        %v2784 = vmul.f32 %v2656, %v1738
        %v2785 = vmul.f32 %v2657, %v1739
        %v2786 = vmul.f32 %v2658, %v1740
        %v2787 = vmul.f32 %v2659, %v1741
        %v2788 = vmul.f32 %v2660, %v1742
        %v2789 = vmul.f32 %v2661, %v1743
        %v2790 = vmul.f32 %v2662, %v1744
        %v2791 = vmul.f32 %v2663, %v1745
        %v2792 = vmul.f32 %v2664, %v1746
        %v2793 = vmul.f32 %v2665, %v1747
        %v2794 = vmul.f32 %v2666, %v1748
        %v2795 = vmul.f32 %v2667, %v1749
        %v2796 = vmul.f32 %v2668, %v1750
        %v2797 = vmul.f32 %v2669, %v1751
        %v2798 = vmul.f32 %v2670, %v1752
        %v2799 = vmul.f32 %v2671, %v1753
        %v2800 = vmul.f32 %v2672, %v1754
        %v2801 = vmul.f32 %v2673, %v1755
        %v2802 = vmul.f32 %v2674, %v1756
        %v2803 = vmul.f32 %v2675, %v1757
        %v2804 = vmul.f32 %v2676, %v1758
        %v2805 = vadd.f32 %v2677, %v2741
        %v2806 = vadd.f32 %v2678, %v2742
        %v2807 = vadd.f32 %v2679, %v2743
        %v2808 = vadd.f32 %v2680, %v2744
        %v2809 = vadd.f32 %v2681, %v2745
        %v2810 = vadd.f32 %v2682, %v2746
        %v2811 = vadd.f32 %v2683, %v2747
        %v2812 = vadd.f32 %v2684, %v2748
        %v2813 = vadd.f32 %v2685, %v2749
        %v2814 = vadd.f32 %v2686, %v2750
        %v2815 = vadd.f32 %v2687, %v2751
        %v2816 = vadd.f32 %v2688, %v2752
        %v2817 = vadd.f32 %v2689, %v2753
        %v2818 = vadd.f32 %v2690, %v2754
        %v2819 = vadd.f32 %v2691, %v2755
        %v2820 = vadd.f32 %v2692, %v2756
        %v2821 = vadd.f32 %v2693, %v2757
        %v2822 = vadd.f32 %v2694, %v2758
        %v2823 = vadd.f32 %v2695, %v2759
        %v2824 = vadd.f32 %v2696, %v2760
        %v2825 = vadd.f32 %v2697, %v2761
        %v2826 = vadd.f32 %v2698, %v2762
        %v2827 = vadd.f32 %v2699, %v2763
        %v2828 = vadd.f32 %v2700, %v2764
        %v2829 = vadd.f32 %v2701, %v2765
        %v2830 = vadd.f32 %v2702, %v2766
        %v2831 = vadd.f32 %v2703, %v2767
        %v2832 = vadd.f32 %v2704, %v2768
        %v2833 = vadd.f32 %v2705, %v2769
        %v2834 = vadd.f32 %v2706, %v2770
        %v2835 = vadd.f32 %v2707, %v2771
        %v2836 = vadd.f32 %v2708, %v2772
        %v2837 = vadd.f32 %v2709, %v2773
        %v2838 = vadd.f32 %v2710, %v2774
        %v2839 = vadd.f32 %v2711, %v2775
        %v2840 = vadd.f32 %v2712, %v2776
        %v2841 = vadd.f32 %v2713, %v2777
        %v2842 = vadd.f32 %v2714, %v2778
        %v2843 = vadd.f32 %v2715, %v2779
        %v2844 = vadd.f32 %v2716, %v2780
        %v2845 = vadd.f32 %v2717, %v2781
        %v2846 = vadd.f32 %v2718, %v2782
        %v2847 = vadd.f32 %v2719, %v2783
        %v2848 = vadd.f32 %v2720, %v2784
        %v2849 = vadd.f32 %v2721, %v2785
        %v2850 = vadd.f32 %v2722, %v2786
        %v2851 = vadd.f32 %v2723, %v2787
        %v2852 = vadd.f32 %v2724, %v2788
        %v2853 = vadd.f32 %v2725, %v2789
        %v2854 = vadd.f32 %v2726, %v2790
        %v2855 = vadd.f32 %v2727, %v2791
        %v2856 = vadd.f32 %v2728, %v2792
        %v2857 = vadd.f32 %v2729, %v2793
        %v2858 = vadd.f32 %v2730, %v2794
        %v2859 = vadd.f32 %v2731, %v2795
        %v2860 = vadd.f32 %v2732, %v2796
        %v2861 = vadd.f32 %v2733, %v2797
        %v2862 = vadd.f32 %v2734, %v2798
        %v2863 = vadd.f32 %v2735, %v2799
        %v2864 = vadd.f32 %v2736, %v2800
        %v2865 = vadd.f32 %v2737, %v2801
        %v2866 = vadd.f32 %v2738, %v2802
        %v2867 = vadd.f32 %v2739, %v2803
        %v2868 = vadd.f32 %v2740, %v2804
        %v2869 = vmul.f32 %v2805, 0.125
        %v2870 = vmul.f32 %v2806, 0.125
        %v2871 = vmul.f32 %v2807, 0.125
        %v2872 = vmul.f32 %v2808, 0.125
        %v2873 = vmul.f32 %v2809, 0.125
        %v2874 = vmul.f32 %v2810, 0.125
        %v2875 = vmul.f32 %v2811, 0.125
        %v2876 = vmul.f32 %v2812, 0.125
        %v2877 = vmul.f32 %v2813, 0.125
        %v2878 = vmul.f32 %v2814, 0.125
        %v2879 = vmul.f32 %v2815, 0.125
        %v2880 = vmul.f32 %v2816, 0.125
        %v2881 = vmul.f32 %v2817, 0.125
        %v2882 = vmul.f32 %v2818, 0.125
        %v2883 = vmul.f32 %v2819, 0.125
        %v2884 = vmul.f32 %v2820, 0.125
        %v2885 = vmul.f32 %v2821, 0.125
        %v2886 = vmul.f32 %v2822, 0.125
        %v2887 = vmul.f32 %v2823, 0.125
        %v2888 = vmul.f32 %v2824, 0.125
        %v2889 = vmul.f32 %v2825, 0.125
        %v2890 = vmul.f32 %v2826, 0.125
        %v2891 = vmul.f32 %v2827, 0.125
        %v2892 = vmul.f32 %v2828, 0.125
        %v2893 = vmul.f32 %v2829, 0.125
        %v2894 = vmul.f32 %v2830, 0.125
        %v2895 = vmul.f32 %v2831, 0.125
        %v2896 = vmul.f32 %v2832, 0.125
        %v2897 = vmul.f32 %v2833, 0.125
        %v2898 = vmul.f32 %v2834, 0.125
        %v2899 = vmul.f32 %v2835, 0.125
        %v2900 = vmul.f32 %v2836, 0.125
        %v2901 = vmul.f32 %v2837, 0.125
        %v2902 = vmul.f32 %v2838, 0.125
        %v2903 = vmul.f32 %v2839, 0.125
        %v2904 = vmul.f32 %v2840, 0.125
        %v2905 = vmul.f32 %v2841, 0.125
        %v2906 = vmul.f32 %v2842, 0.125
        %v2907 = vmul.f32 %v2843, 0.125
        %v2908 = vmul.f32 %v2844, 0.125
        %v2909 = vmul.f32 %v2845, 0.125
        %v2910 = vmul.f32 %v2846, 0.125
        %v2911 = vmul.f32 %v2847, 0.125
        %v2912 = vmul.f32 %v2848, 0.125
        %v2913 = vmul.f32 %v2849, 0.125
        %v2914 = vmul.f32 %v2850, 0.125
        %v2915 = vmul.f32 %v2851, 0.125
        %v2916 = vmul.f32 %v2852, 0.125
        %v2917 = vmul.f32 %v2853, 0.125
        %v2918 = vmul.f32 %v2854, 0.125
        %v2919 = vmul.f32 %v2855, 0.125
        %v2920 = vmul.f32 %v2856, 0.125
        %v2921 = vmul.f32 %v2857, 0.125
        %v2922 = vmul.f32 %v2858, 0.125
        %v2923 = vmul.f32 %v2859, 0.125
        %v2924 = vmul.f32 %v2860, 0.125
        %v2925 = vmul.f32 %v2861, 0.125
        %v2926 = vmul.f32 %v2862, 0.125
        %v2927 = vmul.f32 %v2863, 0.125
        %v2928 = vmul.f32 %v2864, 0.125
        %v2929 = vmul.f32 %v2865, 0.125
        %v2930 = vmul.f32 %v2866, 0.125
        %v2931 = vmul.f32 %v2867, 0.125
        %v2932 = vmul.f32 %v2868, 0.125
        %2933 = vst [vmem:[%s344] sm:$0xff] %v2869
        %2934 = vst [vmem:[%s344 + $0x8] sm:$0xff] %v2870
        %2935 = vst [vmem:[%s344 + $0x10] sm:$0xff] %v2871
        %2936 = vst [vmem:[%s344 + $0x18] sm:$0xff] %v2872
        %2937 = vst [vmem:[%s344 + $0x20] sm:$0xff] %v2873
        %2938 = vst [vmem:[%s344 + $0x28] sm:$0xff] %v2874
        %2939 = vst [vmem:[%s344 + $0x30] sm:$0xff] %v2875
        %2940 = vst [vmem:[%s344 + $0x38] sm:$0xff] %v2876
        %2941 = vst [vmem:[%s344 + $0x40] sm:$0xff] %v2877
        %2942 = vst [vmem:[%s344 + $0x48] sm:$0xff] %v2878
        %2943 = vst [vmem:[%s344 + $0x50] sm:$0xff] %v2879
        %2944 = vst [vmem:[%s344 + $0x58] sm:$0xff] %v2880
        %2945 = vst [vmem:[%s344 + $0x60] sm:$0xff] %v2881
        %2946 = vst [vmem:[%s344 + $0x68] sm:$0xff] %v2882
        %2947 = vst [vmem:[%s344 + $0x70] sm:$0xff] %v2883
        %2948 = vst [vmem:[%s344 + $0x78] sm:$0xff] %v2884
        %2949 = vst [vmem:[%s344 + $0x80] sm:$0xff] %v2885
        %2950 = vst [vmem:[%s344 + $0x88] sm:$0xff] %v2886
        %2951 = vst [vmem:[%s344 + $0x90] sm:$0xff] %v2887
        %2952 = vst [vmem:[%s344 + $0x98] sm:$0xff] %v2888
        %2953 = vst [vmem:[%s344 + $0xa0] sm:$0xff] %v2889
        %2954 = vst [vmem:[%s344 + $0xa8] sm:$0xff] %v2890
        %2955 = vst [vmem:[%s344 + $0xb0] sm:$0xff] %v2891
        %2956 = vst [vmem:[%s344 + $0xb8] sm:$0xff] %v2892
        %2957 = vst [vmem:[%s344 + $0xc0] sm:$0xff] %v2893
        %2958 = vst [vmem:[%s344 + $0xc8] sm:$0xff] %v2894
        %2959 = vst [vmem:[%s344 + $0xd0] sm:$0xff] %v2895
        %2960 = vst [vmem:[%s344 + $0xd8] sm:$0xff] %v2896
        %2961 = vst [vmem:[%s344 + $0xe0] sm:$0xff] %v2897
        %2962 = vst [vmem:[%s344 + $0xe8] sm:$0xff] %v2898
        %2963 = vst [vmem:[%s344 + $0xf0] sm:$0xff] %v2899
        %2964 = vst [vmem:[%s344 + $0xf8] sm:$0xff] %v2900
        %2965 = vst [vmem:[%s344 + $0x100] sm:$0xff] %v2901
        %2966 = vst [vmem:[%s344 + $0x108] sm:$0xff] %v2902
        %2967 = vst [vmem:[%s344 + $0x110] sm:$0xff] %v2903
        %2968 = vst [vmem:[%s344 + $0x118] sm:$0xff] %v2904
        %2969 = vst [vmem:[%s344 + $0x120] sm:$0xff] %v2905
        %2970 = vst [vmem:[%s344 + $0x128] sm:$0xff] %v2906
        %2971 = vst [vmem:[%s344 + $0x130] sm:$0xff] %v2907
        %2972 = vst [vmem:[%s344 + $0x138] sm:$0xff] %v2908
        %2973 = vst [vmem:[%s344 + $0x140] sm:$0xff] %v2909
        %2974 = vst [vmem:[%s344 + $0x148] sm:$0xff] %v2910
        %2975 = vst [vmem:[%s344 + $0x150] sm:$0xff] %v2911
        %2976 = vst [vmem:[%s344 + $0x158] sm:$0xff] %v2912
        %2977 = vst [vmem:[%s344 + $0x160] sm:$0xff] %v2913
        %2978 = vst [vmem:[%s344 + $0x168] sm:$0xff] %v2914
        %2979 = vst [vmem:[%s344 + $0x170] sm:$0xff] %v2915
        %2980 = vst [vmem:[%s344 + $0x178] sm:$0xff] %v2916
        %2981 = vst [vmem:[%s344 + $0x180] sm:$0xff] %v2917
        %2982 = vst [vmem:[%s344 + $0x188] sm:$0xff] %v2918
        %2983 = vst [vmem:[%s344 + $0x190] sm:$0xff] %v2919
        %2984 = vst [vmem:[%s344 + $0x198] sm:$0xff] %v2920
        %2985 = vst [vmem:[%s344 + $0x1a0] sm:$0xff] %v2921
        %2986 = vst [vmem:[%s344 + $0x1a8] sm:$0xff] %v2922
        %2987 = vst [vmem:[%s344 + $0x1b0] sm:$0xff] %v2923
        %2988 = vst [vmem:[%s344 + $0x1b8] sm:$0xff] %v2924
        %2989 = vst [vmem:[%s344 + $0x1c0] sm:$0xff] %v2925
        %2990 = vst [vmem:[%s344 + $0x1c8] sm:$0xff] %v2926
        %2991 = vst [vmem:[%s344 + $0x1d0] sm:$0xff] %v2927
        %2992 = vst [vmem:[%s344 + $0x1d8] sm:$0xff] %v2928
        %2993 = vst [vmem:[%s344 + $0x1e0] sm:$0xff] %v2929
        %2994 = vst [vmem:[%s344 + $0x1e8] sm:$0xff] %v2930
        %2995 = vst [vmem:[%s344 + $0x1f0] sm:$0xff] %v2931
        %2996 = vst [vmem:[%s344 + $0x1f8] sm:$0xff] %v2932
        %v2997 = vmul.f32 %v911, %v911
        %v2998 = vmul.f32 %v916, %v916
        %v2999 = vmul.f32 %v921, %v921
        %v3000 = vmul.f32 %v926, %v926
        %v3001 = vmul.f32 %v931, %v931
        %v3002 = vmul.f32 %v936, %v936
        %v3003 = vmul.f32 %v941, %v941
        %v3004 = vmul.f32 %v946, %v946
        %v3005 = vmul.f32 %v951, %v951
        %v3006 = vmul.f32 %v956, %v956
        %v3007 = vmul.f32 %v961, %v961
        %v3008 = vmul.f32 %v966, %v966
        %v3009 = vmul.f32 %v971, %v971
        %v3010 = vmul.f32 %v976, %v976
        %v3011 = vmul.f32 %v981, %v981
        %v3012 = vmul.f32 %v986, %v986
        %v3013 = vmul.f32 %v991, %v991
        %v3014 = vmul.f32 %v996, %v996
        %v3015 = vmul.f32 %v1001, %v1001
        %v3016 = vmul.f32 %v1006, %v1006
        %v3017 = vmul.f32 %v1011, %v1011
        %v3018 = vmul.f32 %v1016, %v1016
        %v3019 = vmul.f32 %v1021, %v1021
        %v3020 = vmul.f32 %v1026, %v1026
        %v3021 = vmul.f32 %v1031, %v1031
        %v3022 = vmul.f32 %v1036, %v1036
        %v3023 = vmul.f32 %v1041, %v1041
        %v3024 = vmul.f32 %v1046, %v1046
        %v3025 = vmul.f32 %v1051, %v1051
        %v3026 = vmul.f32 %v1056, %v1056
        %v3027 = vmul.f32 %v1061, %v1061
        %v3028 = vmul.f32 %v1066, %v1066
        %v3029 = vmul.f32 %v1071, %v1071
        %v3030 = vmul.f32 %v1076, %v1076
        %v3031 = vmul.f32 %v1081, %v1081
        %v3032 = vmul.f32 %v1086, %v1086
        %v3033 = vmul.f32 %v1091, %v1091
        %v3034 = vmul.f32 %v1096, %v1096
        %v3035 = vmul.f32 %v1101, %v1101
        %v3036 = vmul.f32 %v1106, %v1106
        %v3037 = vmul.f32 %v1111, %v1111
        %v3038 = vmul.f32 %v1116, %v1116
        %v3039 = vmul.f32 %v1121, %v1121
        %v3040 = vmul.f32 %v1126, %v1126
        %v3041 = vmul.f32 %v1131, %v1131
        %v3042 = vmul.f32 %v1136, %v1136
        %v3043 = vmul.f32 %v1141, %v1141
        %v3044 = vmul.f32 %v1146, %v1146
        %v3045 = vmul.f32 %v1151, %v1151
        %v3046 = vmul.f32 %v1156, %v1156
        %v3047 = vmul.f32 %v1161, %v1161
        %v3048 = vmul.f32 %v1166, %v1166
        %v3049 = vmul.f32 %v1171, %v1171
        %v3050 = vmul.f32 %v1176, %v1176
        %v3051 = vmul.f32 %v1181, %v1181
        %v3052 = vmul.f32 %v1186, %v1186
        %v3053 = vmul.f32 %v1191, %v1191
        %v3054 = vmul.f32 %v1196, %v1196
        %v3055 = vmul.f32 %v1201, %v1201
        %v3056 = vmul.f32 %v1206, %v1206
        %v3057 = vmul.f32 %v1211, %v1211
        %v3058 = vmul.f32 %v1216, %v1216
        %v3059 = vmul.f32 %v1221, %v1221
        %v3060 = vmul.f32 %v1226, %v1226
        %3061 = vadd.xlane.f32.xlu0 %v2997
        %v3062 = vpop.xlane.xlu0 %3061
        %3063 = vadd.xlane.f32.xlu0 %v2998
        %v3064 = vpop.xlane.xlu0 %3063
        %3065 = vadd.xlane.f32.xlu0 %v2999
        %v3066 = vpop.xlane.xlu0 %3065
        %3067 = vadd.xlane.f32.xlu0 %v3000
        %v3068 = vpop.xlane.xlu0 %3067
        %3069 = vadd.xlane.f32.xlu0 %v3001
        %v3070 = vpop.xlane.xlu0 %3069
        %3071 = vadd.xlane.f32.xlu0 %v3002
        %v3072 = vpop.xlane.xlu0 %3071
        %3073 = vadd.xlane.f32.xlu0 %v3003
        %v3074 = vpop.xlane.xlu0 %3073
        %3075 = vadd.xlane.f32.xlu0 %v3004
        %v3076 = vpop.xlane.xlu0 %3075
        %3077 = vadd.xlane.f32.xlu0 %v3005
        %v3078 = vpop.xlane.xlu0 %3077
        %3079 = vadd.xlane.f32.xlu0 %v3006
        %v3080 = vpop.xlane.xlu0 %3079
        %3081 = vadd.xlane.f32.xlu0 %v3007
        %v3082 = vpop.xlane.xlu0 %3081
        %3083 = vadd.xlane.f32.xlu0 %v3008
        %v3084 = vpop.xlane.xlu0 %3083
        %3085 = vadd.xlane.f32.xlu0 %v3009
        %v3086 = vpop.xlane.xlu0 %3085
        %3087 = vadd.xlane.f32.xlu0 %v3010
        %v3088 = vpop.xlane.xlu0 %3087
        %3089 = vadd.xlane.f32.xlu0 %v3011
        %v3090 = vpop.xlane.xlu0 %3089
        %3091 = vadd.xlane.f32.xlu0 %v3012
        %v3092 = vpop.xlane.xlu0 %3091
        %3093 = vadd.xlane.f32.xlu0 %v3013
        %v3094 = vpop.xlane.xlu0 %3093
        %3095 = vadd.xlane.f32.xlu0 %v3014
        %v3096 = vpop.xlane.xlu0 %3095
        %3097 = vadd.xlane.f32.xlu0 %v3015
        %v3098 = vpop.xlane.xlu0 %3097
        %3099 = vadd.xlane.f32.xlu0 %v3016
        %v3100 = vpop.xlane.xlu0 %3099
        %3101 = vadd.xlane.f32.xlu0 %v3017
        %v3102 = vpop.xlane.xlu0 %3101
        %3103 = vadd.xlane.f32.xlu0 %v3018
        %v3104 = vpop.xlane.xlu0 %3103
        %3105 = vadd.xlane.f32.xlu0 %v3019
        %v3106 = vpop.xlane.xlu0 %3105
        %3107 = vadd.xlane.f32.xlu0 %v3020
        %v3108 = vpop.xlane.xlu0 %3107
        %3109 = vadd.xlane.f32.xlu0 %v3021
        %v3110 = vpop.xlane.xlu0 %3109
        %3111 = vadd.xlane.f32.xlu0 %v3022
        %v3112 = vpop.xlane.xlu0 %3111
        %3113 = vadd.xlane.f32.xlu0 %v3023
        %v3114 = vpop.xlane.xlu0 %3113
        %3115 = vadd.xlane.f32.xlu0 %v3024
        %v3116 = vpop.xlane.xlu0 %3115
        %3117 = vadd.xlane.f32.xlu0 %v3025
        %v3118 = vpop.xlane.xlu0 %3117
        %3119 = vadd.xlane.f32.xlu0 %v3026
        %v3120 = vpop.xlane.xlu0 %3119
        %3121 = vadd.xlane.f32.xlu0 %v3027
        %v3122 = vpop.xlane.xlu0 %3121
        %3123 = vadd.xlane.f32.xlu0 %v3028
        %v3124 = vpop.xlane.xlu0 %3123
        %3125 = vadd.xlane.f32.xlu0 %v3029
        %v3126 = vpop.xlane.xlu0 %3125
        %3127 = vadd.xlane.f32.xlu0 %v3030
        %v3128 = vpop.xlane.xlu0 %3127
        %3129 = vadd.xlane.f32.xlu0 %v3031
        %v3130 = vpop.xlane.xlu0 %3129
        %3131 = vadd.xlane.f32.xlu0 %v3032
        %v3132 = vpop.xlane.xlu0 %3131
        %3133 = vadd.xlane.f32.xlu0 %v3033
        %v3134 = vpop.xlane.xlu0 %3133
        %3135 = vadd.xlane.f32.xlu0 %v3034
        %v3136 = vpop.xlane.xlu0 %3135
        %3137 = vadd.xlane.f32.xlu0 %v3035
        %v3138 = vpop.xlane.xlu0 %3137
        %3139 = vadd.xlane.f32.xlu0 %v3036
        %v3140 = vpop.xlane.xlu0 %3139
        %3141 = vadd.xlane.f32.xlu0 %v3037
        %v3142 = vpop.xlane.xlu0 %3141
        %3143 = vadd.xlane.f32.xlu0 %v3038
        %v3144 = vpop.xlane.xlu0 %3143
        %3145 = vadd.xlane.f32.xlu0 %v3039
        %v3146 = vpop.xlane.xlu0 %3145
        %3147 = vadd.xlane.f32.xlu0 %v3040
        %v3148 = vpop.xlane.xlu0 %3147
        %3149 = vadd.xlane.f32.xlu0 %v3041
        %v3150 = vpop.xlane.xlu0 %3149
        %3151 = vadd.xlane.f32.xlu0 %v3042
        %v3152 = vpop.xlane.xlu0 %3151
        %3153 = vadd.xlane.f32.xlu0 %v3043
        %v3154 = vpop.xlane.xlu0 %3153
        %3155 = vadd.xlane.f32.xlu0 %v3044
        %v3156 = vpop.xlane.xlu0 %3155
        %3157 = vadd.xlane.f32.xlu0 %v3045
        %v3158 = vpop.xlane.xlu0 %3157
        %3159 = vadd.xlane.f32.xlu0 %v3046
        %v3160 = vpop.xlane.xlu0 %3159
        %3161 = vadd.xlane.f32.xlu0 %v3047
        %v3162 = vpop.xlane.xlu0 %3161
        %3163 = vadd.xlane.f32.xlu0 %v3048
        %v3164 = vpop.xlane.xlu0 %3163
        %3165 = vadd.xlane.f32.xlu0 %v3049
        %v3166 = vpop.xlane.xlu0 %3165
        %3167 = vadd.xlane.f32.xlu0 %v3050
        %v3168 = vpop.xlane.xlu0 %3167
        %3169 = vadd.xlane.f32.xlu0 %v3051
        %v3170 = vpop.xlane.xlu0 %3169
        %3171 = vadd.xlane.f32.xlu0 %v3052
        %v3172 = vpop.xlane.xlu0 %3171
        %3173 = vadd.xlane.f32.xlu0 %v3053
        %v3174 = vpop.xlane.xlu0 %3173
        %3175 = vadd.xlane.f32.xlu0 %v3054
        %v3176 = vpop.xlane.xlu0 %3175
        %3177 = vadd.xlane.f32.xlu0 %v3055
        %v3178 = vpop.xlane.xlu0 %3177
        %3179 = vadd.xlane.f32.xlu0 %v3056
        %v3180 = vpop.xlane.xlu0 %3179
        %3181 = vadd.xlane.f32.xlu0 %v3057
        %v3182 = vpop.xlane.xlu0 %3181
        %3183 = vadd.xlane.f32.xlu0 %v3058
        %v3184 = vpop.xlane.xlu0 %3183
        %3185 = vadd.xlane.f32.xlu0 %v3059
        %v3186 = vpop.xlane.xlu0 %3185
        %3187 = vadd.xlane.f32.xlu0 %v3060
        %v3188 = vpop.xlane.xlu0 %3187
        %v3189 = vmul.f32 %v3062, %v1951
        %v3190 = vmul.f32 %v3064, %v1951
        %v3191 = vmul.f32 %v3066, %v1951
        %v3192 = vmul.f32 %v3068, %v1951
        %v3193 = vmul.f32 %v3070, %v1951
        %v3194 = vmul.f32 %v3072, %v1951
        %v3195 = vmul.f32 %v3074, %v1951
        %v3196 = vmul.f32 %v3076, %v1951
        %v3197 = vmul.f32 %v3078, %v1951
        %v3198 = vmul.f32 %v3080, %v1951
        %v3199 = vmul.f32 %v3082, %v1951
        %v3200 = vmul.f32 %v3084, %v1951
        %v3201 = vmul.f32 %v3086, %v1951
        %v3202 = vmul.f32 %v3088, %v1951
        %v3203 = vmul.f32 %v3090, %v1951
        %v3204 = vmul.f32 %v3092, %v1951
        %v3205 = vmul.f32 %v3094, %v1951
        %v3206 = vmul.f32 %v3096, %v1951
        %v3207 = vmul.f32 %v3098, %v1951
        %v3208 = vmul.f32 %v3100, %v1951
        %v3209 = vmul.f32 %v3102, %v1951
        %v3210 = vmul.f32 %v3104, %v1951
        %v3211 = vmul.f32 %v3106, %v1951
        %v3212 = vmul.f32 %v3108, %v1951
        %v3213 = vmul.f32 %v3110, %v1951
        %v3214 = vmul.f32 %v3112, %v1951
        %v3215 = vmul.f32 %v3114, %v1951
        %v3216 = vmul.f32 %v3116, %v1951
        %v3217 = vmul.f32 %v3118, %v1951
        %v3218 = vmul.f32 %v3120, %v1951
        %v3219 = vmul.f32 %v3122, %v1951
        %v3220 = vmul.f32 %v3124, %v1951
        %v3221 = vmul.f32 %v3126, %v1951
        %v3222 = vmul.f32 %v3128, %v1951
        %v3223 = vmul.f32 %v3130, %v1951
        %v3224 = vmul.f32 %v3132, %v1951
        %v3225 = vmul.f32 %v3134, %v1951
        %v3226 = vmul.f32 %v3136, %v1951
        %v3227 = vmul.f32 %v3138, %v1951
        %v3228 = vmul.f32 %v3140, %v1951
        %v3229 = vmul.f32 %v3142, %v1951
        %v3230 = vmul.f32 %v3144, %v1951
        %v3231 = vmul.f32 %v3146, %v1951
        %v3232 = vmul.f32 %v3148, %v1951
        %v3233 = vmul.f32 %v3150, %v1951
        %v3234 = vmul.f32 %v3152, %v1951
        %v3235 = vmul.f32 %v3154, %v1951
        %v3236 = vmul.f32 %v3156, %v1951
        %v3237 = vmul.f32 %v3158, %v1951
        %v3238 = vmul.f32 %v3160, %v1951
        %v3239 = vmul.f32 %v3162, %v1951
        %v3240 = vmul.f32 %v3164, %v1951
        %v3241 = vmul.f32 %v3166, %v1951
        %v3242 = vmul.f32 %v3168, %v1951
        %v3243 = vmul.f32 %v3170, %v1951
        %v3244 = vmul.f32 %v3172, %v1951
        %v3245 = vmul.f32 %v3174, %v1951
        %v3246 = vmul.f32 %v3176, %v1951
        %v3247 = vmul.f32 %v3178, %v1951
        %v3248 = vmul.f32 %v3180, %v1951
        %v3249 = vmul.f32 %v3182, %v1951
        %v3250 = vmul.f32 %v3184, %v1951
        %v3251 = vmul.f32 %v3186, %v1951
        %v3252 = vmul.f32 %v3188, %v1951
        %v3253 = vadd.f32 %v3189, 1e-06
        %v3254 = vadd.f32 %v3190, 1e-06
        %v3255 = vadd.f32 %v3191, 1e-06
        %v3256 = vadd.f32 %v3192, 1e-06
        %v3257 = vadd.f32 %v3193, 1e-06
        %v3258 = vadd.f32 %v3194, 1e-06
        %v3259 = vadd.f32 %v3195, 1e-06
        %v3260 = vadd.f32 %v3196, 1e-06
        %v3261 = vadd.f32 %v3197, 1e-06
        %v3262 = vadd.f32 %v3198, 1e-06
        %v3263 = vadd.f32 %v3199, 1e-06
        %v3264 = vadd.f32 %v3200, 1e-06
        %v3265 = vadd.f32 %v3201, 1e-06
        %v3266 = vadd.f32 %v3202, 1e-06
        %v3267 = vadd.f32 %v3203, 1e-06
        %v3268 = vadd.f32 %v3204, 1e-06
        %v3269 = vadd.f32 %v3205, 1e-06
        %v3270 = vadd.f32 %v3206, 1e-06
        %v3271 = vadd.f32 %v3207, 1e-06
        %v3272 = vadd.f32 %v3208, 1e-06
        %v3273 = vadd.f32 %v3209, 1e-06
        %v3274 = vadd.f32 %v3210, 1e-06
        %v3275 = vadd.f32 %v3211, 1e-06
        %v3276 = vadd.f32 %v3212, 1e-06
        %v3277 = vadd.f32 %v3213, 1e-06
        %v3278 = vadd.f32 %v3214, 1e-06
        %v3279 = vadd.f32 %v3215, 1e-06
        %v3280 = vadd.f32 %v3216, 1e-06
        %v3281 = vadd.f32 %v3217, 1e-06
        %v3282 = vadd.f32 %v3218, 1e-06
        %v3283 = vadd.f32 %v3219, 1e-06
        %v3284 = vadd.f32 %v3220, 1e-06
        %v3285 = vadd.f32 %v3221, 1e-06
        %v3286 = vadd.f32 %v3222, 1e-06
        %v3287 = vadd.f32 %v3223, 1e-06
        %v3288 = vadd.f32 %v3224, 1e-06
        %v3289 = vadd.f32 %v3225, 1e-06
        %v3290 = vadd.f32 %v3226, 1e-06
        %v3291 = vadd.f32 %v3227, 1e-06
        %v3292 = vadd.f32 %v3228, 1e-06
        %v3293 = vadd.f32 %v3229, 1e-06
        %v3294 = vadd.f32 %v3230, 1e-06
        %v3295 = vadd.f32 %v3231, 1e-06
        %v3296 = vadd.f32 %v3232, 1e-06
        %v3297 = vadd.f32 %v3233, 1e-06
        %v3298 = vadd.f32 %v3234, 1e-06
        %v3299 = vadd.f32 %v3235, 1e-06
        %v3300 = vadd.f32 %v3236, 1e-06
        %v3301 = vadd.f32 %v3237, 1e-06
        %v3302 = vadd.f32 %v3238, 1e-06
        %v3303 = vadd.f32 %v3239, 1e-06
        %v3304 = vadd.f32 %v3240, 1e-06
        %v3305 = vadd.f32 %v3241, 1e-06
        %v3306 = vadd.f32 %v3242, 1e-06
        %v3307 = vadd.f32 %v3243, 1e-06
        %v3308 = vadd.f32 %v3244, 1e-06
        %v3309 = vadd.f32 %v3245, 1e-06
        %v3310 = vadd.f32 %v3246, 1e-06
        %v3311 = vadd.f32 %v3247, 1e-06
        %v3312 = vadd.f32 %v3248, 1e-06
        %v3313 = vadd.f32 %v3249, 1e-06
        %v3314 = vadd.f32 %v3250, 1e-06
        %v3315 = vadd.f32 %v3251, 1e-06
        %v3316 = vadd.f32 %v3252, 1e-06
        %v3317 = vrsqrt.pop %v3253
        %v3318 = vrsqrt.pop %v3254
        %v3319 = vrsqrt.pop %v3255
        %v3320 = vrsqrt.pop %v3256
        %v3321 = vrsqrt.pop %v3257
        %v3322 = vrsqrt.pop %v3258
        %v3323 = vrsqrt.pop %v3259
        %v3324 = vrsqrt.pop %v3260
        %v3325 = vrsqrt.pop %v3261
        %v3326 = vrsqrt.pop %v3262
        %v3327 = vrsqrt.pop %v3263
        %v3328 = vrsqrt.pop %v3264
        %v3329 = vrsqrt.pop %v3265
        %v3330 = vrsqrt.pop %v3266
        %v3331 = vrsqrt.pop %v3267
        %v3332 = vrsqrt.pop %v3268
        %v3333 = vrsqrt.pop %v3269
        %v3334 = vrsqrt.pop %v3270
        %v3335 = vrsqrt.pop %v3271
        %v3336 = vrsqrt.pop %v3272
        %v3337 = vrsqrt.pop %v3273
        %v3338 = vrsqrt.pop %v3274
        %v3339 = vrsqrt.pop %v3275
        %v3340 = vrsqrt.pop %v3276
        %v3341 = vrsqrt.pop %v3277
        %v3342 = vrsqrt.pop %v3278
        %v3343 = vrsqrt.pop %v3279
        %v3344 = vrsqrt.pop %v3280
        %v3345 = vrsqrt.pop %v3281
        %v3346 = vrsqrt.pop %v3282
        %v3347 = vrsqrt.pop %v3283
        %v3348 = vrsqrt.pop %v3284
        %v3349 = vrsqrt.pop %v3285
        %v3350 = vrsqrt.pop %v3286
        %v3351 = vrsqrt.pop %v3287
        %v3352 = vrsqrt.pop %v3288
        %v3353 = vrsqrt.pop %v3289
        %v3354 = vrsqrt.pop %v3290
        %v3355 = vrsqrt.pop %v3291
        %v3356 = vrsqrt.pop %v3292
        %v3357 = vrsqrt.pop %v3293
        %v3358 = vrsqrt.pop %v3294
        %v3359 = vrsqrt.pop %v3295
        %v3360 = vrsqrt.pop %v3296
        %v3361 = vrsqrt.pop %v3297
        %v3362 = vrsqrt.pop %v3298
        %v3363 = vrsqrt.pop %v3299
        %v3364 = vrsqrt.pop %v3300
        %v3365 = vrsqrt.pop %v3301
        %v3366 = vrsqrt.pop %v3302
        %v3367 = vrsqrt.pop %v3303
        %v3368 = vrsqrt.pop %v3304
        %v3369 = vrsqrt.pop %v3305
        %v3370 = vrsqrt.pop %v3306
        %v3371 = vrsqrt.pop %v3307
        %v3372 = vrsqrt.pop %v3308
        %v3373 = vrsqrt.pop %v3309
        %v3374 = vrsqrt.pop %v3310
        %v3375 = vrsqrt.pop %v3311
        %v3376 = vrsqrt.pop %v3312
        %v3377 = vrsqrt.pop %v3313
        %v3378 = vrsqrt.pop %v3314
        %v3379 = vrsqrt.pop %v3315
        %v3380 = vrsqrt.pop %v3316
        %v3381 = vmul.f32 %v911, %v3317
        %v3382 = vmul.f32 %v916, %v3318
        %v3383 = vmul.f32 %v921, %v3319
        %v3384 = vmul.f32 %v926, %v3320
        %v3385 = vmul.f32 %v931, %v3321
        %v3386 = vmul.f32 %v936, %v3322
        %v3387 = vmul.f32 %v941, %v3323
        %v3388 = vmul.f32 %v946, %v3324
        %v3389 = vmul.f32 %v951, %v3325
        %v3390 = vmul.f32 %v956, %v3326
        %v3391 = vmul.f32 %v961, %v3327
        %v3392 = vmul.f32 %v966, %v3328
        %v3393 = vmul.f32 %v971, %v3329
        %v3394 = vmul.f32 %v976, %v3330
        %v3395 = vmul.f32 %v981, %v3331
        %v3396 = vmul.f32 %v986, %v3332
        %v3397 = vmul.f32 %v991, %v3333
        %v3398 = vmul.f32 %v996, %v3334
        %v3399 = vmul.f32 %v1001, %v3335
        %v3400 = vmul.f32 %v1006, %v3336
        %v3401 = vmul.f32 %v1011, %v3337
        %v3402 = vmul.f32 %v1016, %v3338
        %v3403 = vmul.f32 %v1021, %v3339
        %v3404 = vmul.f32 %v1026, %v3340
        %v3405 = vmul.f32 %v1031, %v3341
        %v3406 = vmul.f32 %v1036, %v3342
        %v3407 = vmul.f32 %v1041, %v3343
        %v3408 = vmul.f32 %v1046, %v3344
        %v3409 = vmul.f32 %v1051, %v3345
        %v3410 = vmul.f32 %v1056, %v3346
        %v3411 = vmul.f32 %v1061, %v3347
        %v3412 = vmul.f32 %v1066, %v3348
        %v3413 = vmul.f32 %v1071, %v3349
        %v3414 = vmul.f32 %v1076, %v3350
        %v3415 = vmul.f32 %v1081, %v3351
        %v3416 = vmul.f32 %v1086, %v3352
        %v3417 = vmul.f32 %v1091, %v3353
        %v3418 = vmul.f32 %v1096, %v3354
        %v3419 = vmul.f32 %v1101, %v3355
        %v3420 = vmul.f32 %v1106, %v3356
        %v3421 = vmul.f32 %v1111, %v3357
        %v3422 = vmul.f32 %v1116, %v3358
        %v3423 = vmul.f32 %v1121, %v3359
        %v3424 = vmul.f32 %v1126, %v3360
        %v3425 = vmul.f32 %v1131, %v3361
        %v3426 = vmul.f32 %v1136, %v3362
        %v3427 = vmul.f32 %v1141, %v3363
        %v3428 = vmul.f32 %v1146, %v3364
        %v3429 = vmul.f32 %v1151, %v3365
        %v3430 = vmul.f32 %v1156, %v3366
        %v3431 = vmul.f32 %v1161, %v3367
        %v3432 = vmul.f32 %v1166, %v3368
        %v3433 = vmul.f32 %v1171, %v3369
        %v3434 = vmul.f32 %v1176, %v3370
        %v3435 = vmul.f32 %v1181, %v3371
        %v3436 = vmul.f32 %v1186, %v3372
        %v3437 = vmul.f32 %v1191, %v3373
        %v3438 = vmul.f32 %v1196, %v3374
        %v3439 = vmul.f32 %v1201, %v3375
        %v3440 = vmul.f32 %v1206, %v3376
        %v3441 = vmul.f32 %v1211, %v3377
        %v3442 = vmul.f32 %v1216, %v3378
        %v3443 = vmul.f32 %v1221, %v3379
        %v3444 = vmul.f32 %v1226, %v3380
        %v3445 = vmul.f32 %v3381, %v2212
        %v3446 = vmul.f32 %v3382, %v2212
        %v3447 = vmul.f32 %v3383, %v2212
        %v3448 = vmul.f32 %v3384, %v2212
        %v3449 = vmul.f32 %v3385, %v2212
        %v3450 = vmul.f32 %v3386, %v2212
        %v3451 = vmul.f32 %v3387, %v2212
        %v3452 = vmul.f32 %v3388, %v2212
        %v3453 = vmul.f32 %v3389, %v2212
        %v3454 = vmul.f32 %v3390, %v2212
        %v3455 = vmul.f32 %v3391, %v2212
        %v3456 = vmul.f32 %v3392, %v2212
        %v3457 = vmul.f32 %v3393, %v2212
        %v3458 = vmul.f32 %v3394, %v2212
        %v3459 = vmul.f32 %v3395, %v2212
        %v3460 = vmul.f32 %v3396, %v2212
        %v3461 = vmul.f32 %v3397, %v2212
        %v3462 = vmul.f32 %v3398, %v2212
        %v3463 = vmul.f32 %v3399, %v2212
        %v3464 = vmul.f32 %v3400, %v2212
        %v3465 = vmul.f32 %v3401, %v2212
        %v3466 = vmul.f32 %v3402, %v2212
        %v3467 = vmul.f32 %v3403, %v2212
        %v3468 = vmul.f32 %v3404, %v2212
        %v3469 = vmul.f32 %v3405, %v2212
        %v3470 = vmul.f32 %v3406, %v2212
        %v3471 = vmul.f32 %v3407, %v2212
        %v3472 = vmul.f32 %v3408, %v2212
        %v3473 = vmul.f32 %v3409, %v2212
        %v3474 = vmul.f32 %v3410, %v2212
        %v3475 = vmul.f32 %v3411, %v2212
        %v3476 = vmul.f32 %v3412, %v2212
        %v3477 = vmul.f32 %v3413, %v2212
        %v3478 = vmul.f32 %v3414, %v2212
        %v3479 = vmul.f32 %v3415, %v2212
        %v3480 = vmul.f32 %v3416, %v2212
        %v3481 = vmul.f32 %v3417, %v2212
        %v3482 = vmul.f32 %v3418, %v2212
        %v3483 = vmul.f32 %v3419, %v2212
        %v3484 = vmul.f32 %v3420, %v2212
        %v3485 = vmul.f32 %v3421, %v2212
        %v3486 = vmul.f32 %v3422, %v2212
        %v3487 = vmul.f32 %v3423, %v2212
        %v3488 = vmul.f32 %v3424, %v2212
        %v3489 = vmul.f32 %v3425, %v2212
        %v3490 = vmul.f32 %v3426, %v2212
        %v3491 = vmul.f32 %v3427, %v2212
        %v3492 = vmul.f32 %v3428, %v2212
        %v3493 = vmul.f32 %v3429, %v2212
        %v3494 = vmul.f32 %v3430, %v2212
        %v3495 = vmul.f32 %v3431, %v2212
        %v3496 = vmul.f32 %v3432, %v2212
        %v3497 = vmul.f32 %v3433, %v2212
        %v3498 = vmul.f32 %v3434, %v2212
        %v3499 = vmul.f32 %v3435, %v2212
        %v3500 = vmul.f32 %v3436, %v2212
        %v3501 = vmul.f32 %v3437, %v2212
        %v3502 = vmul.f32 %v3438, %v2212
        %v3503 = vmul.f32 %v3439, %v2212
        %v3504 = vmul.f32 %v3440, %v2212
        %v3505 = vmul.f32 %v3441, %v2212
        %v3506 = vmul.f32 %v3442, %v2212
        %v3507 = vmul.f32 %v3443, %v2212
        %v3508 = vmul.f32 %v3444, %v2212
        %3509 = vrot.lane.b32.xlu0 %v3445, 127
        %v3510 = vpop.permute.xlu0 %3509
        %3511 = vrot.lane.b32.xlu0 %v3446, 127
        %v3512 = vpop.permute.xlu0 %3511
        %3513 = vrot.lane.b32.xlu0 %v3447, 127
        %v3514 = vpop.permute.xlu0 %3513
        %3515 = vrot.lane.b32.xlu0 %v3448, 127
        %v3516 = vpop.permute.xlu0 %3515
        %3517 = vrot.lane.b32.xlu0 %v3449, 127
        %v3518 = vpop.permute.xlu0 %3517
        %3519 = vrot.lane.b32.xlu0 %v3450, 127
        %v3520 = vpop.permute.xlu0 %3519
        %3521 = vrot.lane.b32.xlu0 %v3451, 127
        %v3522 = vpop.permute.xlu0 %3521
        %3523 = vrot.lane.b32.xlu0 %v3452, 127
        %v3524 = vpop.permute.xlu0 %3523
        %3525 = vrot.lane.b32.xlu0 %v3453, 127
        %v3526 = vpop.permute.xlu0 %3525
        %3527 = vrot.lane.b32.xlu0 %v3454, 127
        %v3528 = vpop.permute.xlu0 %3527
        %3529 = vrot.lane.b32.xlu0 %v3455, 127
        %v3530 = vpop.permute.xlu0 %3529
        %3531 = vrot.lane.b32.xlu0 %v3456, 127
        %v3532 = vpop.permute.xlu0 %3531
        %3533 = vrot.lane.b32.xlu0 %v3457, 127
        %v3534 = vpop.permute.xlu0 %3533
        %3535 = vrot.lane.b32.xlu0 %v3458, 127
        %v3536 = vpop.permute.xlu0 %3535
        %3537 = vrot.lane.b32.xlu0 %v3459, 127
        %v3538 = vpop.permute.xlu0 %3537
        %3539 = vrot.lane.b32.xlu0 %v3460, 127
        %v3540 = vpop.permute.xlu0 %3539
        %3541 = vrot.lane.b32.xlu0 %v3461, 127
        %v3542 = vpop.permute.xlu0 %3541
        %3543 = vrot.lane.b32.xlu0 %v3462, 127
        %v3544 = vpop.permute.xlu0 %3543
        %3545 = vrot.lane.b32.xlu0 %v3463, 127
        %v3546 = vpop.permute.xlu0 %3545
        %3547 = vrot.lane.b32.xlu0 %v3464, 127
        %v3548 = vpop.permute.xlu0 %3547
        %3549 = vrot.lane.b32.xlu0 %v3465, 127
        %v3550 = vpop.permute.xlu0 %3549
        %3551 = vrot.lane.b32.xlu0 %v3466, 127
        %v3552 = vpop.permute.xlu0 %3551
        %3553 = vrot.lane.b32.xlu0 %v3467, 127
        %v3554 = vpop.permute.xlu0 %3553
        %3555 = vrot.lane.b32.xlu0 %v3468, 127
        %v3556 = vpop.permute.xlu0 %3555
        %3557 = vrot.lane.b32.xlu0 %v3469, 127
        %v3558 = vpop.permute.xlu0 %3557
        %3559 = vrot.lane.b32.xlu0 %v3470, 127
        %v3560 = vpop.permute.xlu0 %3559
        %3561 = vrot.lane.b32.xlu0 %v3471, 127
        %v3562 = vpop.permute.xlu0 %3561
        %3563 = vrot.lane.b32.xlu0 %v3472, 127
        %v3564 = vpop.permute.xlu0 %3563
        %3565 = vrot.lane.b32.xlu0 %v3473, 127
        %v3566 = vpop.permute.xlu0 %3565
        %3567 = vrot.lane.b32.xlu0 %v3474, 127
        %v3568 = vpop.permute.xlu0 %3567
        %3569 = vrot.lane.b32.xlu0 %v3475, 127
        %v3570 = vpop.permute.xlu0 %3569
        %3571 = vrot.lane.b32.xlu0 %v3476, 127
        %v3572 = vpop.permute.xlu0 %3571
        %3573 = vrot.lane.b32.xlu0 %v3477, 127
        %v3574 = vpop.permute.xlu0 %3573
        %3575 = vrot.lane.b32.xlu0 %v3478, 127
        %v3576 = vpop.permute.xlu0 %3575
        %3577 = vrot.lane.b32.xlu0 %v3479, 127
        %v3578 = vpop.permute.xlu0 %3577
        %3579 = vrot.lane.b32.xlu0 %v3480, 127
        %v3580 = vpop.permute.xlu0 %3579
        %3581 = vrot.lane.b32.xlu0 %v3481, 127
        %v3582 = vpop.permute.xlu0 %3581
        %3583 = vrot.lane.b32.xlu0 %v3482, 127
        %v3584 = vpop.permute.xlu0 %3583
        %3585 = vrot.lane.b32.xlu0 %v3483, 127
        %v3586 = vpop.permute.xlu0 %3585
        %3587 = vrot.lane.b32.xlu0 %v3484, 127
        %v3588 = vpop.permute.xlu0 %3587
        %3589 = vrot.lane.b32.xlu0 %v3485, 127
        %v3590 = vpop.permute.xlu0 %3589
        %3591 = vrot.lane.b32.xlu0 %v3486, 127
        %v3592 = vpop.permute.xlu0 %3591
        %3593 = vrot.lane.b32.xlu0 %v3487, 127
        %v3594 = vpop.permute.xlu0 %3593
        %3595 = vrot.lane.b32.xlu0 %v3488, 127
        %v3596 = vpop.permute.xlu0 %3595
        %3597 = vrot.lane.b32.xlu0 %v3489, 127
        %v3598 = vpop.permute.xlu0 %3597
        %3599 = vrot.lane.b32.xlu0 %v3490, 127
        %v3600 = vpop.permute.xlu0 %3599
        %3601 = vrot.lane.b32.xlu0 %v3491, 127
        %v3602 = vpop.permute.xlu0 %3601
        %3603 = vrot.lane.b32.xlu0 %v3492, 127
        %v3604 = vpop.permute.xlu0 %3603
        %3605 = vrot.lane.b32.xlu0 %v3493, 127
        %v3606 = vpop.permute.xlu0 %3605
        %3607 = vrot.lane.b32.xlu0 %v3494, 127
        %v3608 = vpop.permute.xlu0 %3607
        %3609 = vrot.lane.b32.xlu0 %v3495, 127
        %v3610 = vpop.permute.xlu0 %3609
        %3611 = vrot.lane.b32.xlu0 %v3496, 127
        %v3612 = vpop.permute.xlu0 %3611
        %3613 = vrot.lane.b32.xlu0 %v3497, 127
        %v3614 = vpop.permute.xlu0 %3613
        %3615 = vrot.lane.b32.xlu0 %v3498, 127
        %v3616 = vpop.permute.xlu0 %3615
        %3617 = vrot.lane.b32.xlu0 %v3499, 127
        %v3618 = vpop.permute.xlu0 %3617
        %3619 = vrot.lane.b32.xlu0 %v3500, 127
        %v3620 = vpop.permute.xlu0 %3619
        %3621 = vrot.lane.b32.xlu0 %v3501, 127
        %v3622 = vpop.permute.xlu0 %3621
        %3623 = vrot.lane.b32.xlu0 %v3502, 127
        %v3624 = vpop.permute.xlu0 %3623
        %3625 = vrot.lane.b32.xlu0 %v3503, 127
        %v3626 = vpop.permute.xlu0 %3625
        %3627 = vrot.lane.b32.xlu0 %v3504, 127
        %v3628 = vpop.permute.xlu0 %3627
        %3629 = vrot.lane.b32.xlu0 %v3505, 127
        %v3630 = vpop.permute.xlu0 %3629
        %3631 = vrot.lane.b32.xlu0 %v3506, 127
        %v3632 = vpop.permute.xlu0 %3631
        %3633 = vrot.lane.b32.xlu0 %v3507, 127
        %v3634 = vpop.permute.xlu0 %3633
        %3635 = vrot.lane.b32.xlu0 %v3508, 127
        %v3636 = vpop.permute.xlu0 %3635
        %3637 = vrot.lane.b32.xlu0 %v3445, 1
        %v3638 = vpop.permute.xlu0 %3637
        %3639 = vrot.lane.b32.xlu0 %v3446, 1
        %v3640 = vpop.permute.xlu0 %3639
        %3641 = vrot.lane.b32.xlu0 %v3447, 1
        %v3642 = vpop.permute.xlu0 %3641
        %3643 = vrot.lane.b32.xlu0 %v3448, 1
        %v3644 = vpop.permute.xlu0 %3643
        %3645 = vrot.lane.b32.xlu0 %v3449, 1
        %v3646 = vpop.permute.xlu0 %3645
        %3647 = vrot.lane.b32.xlu0 %v3450, 1
        %v3648 = vpop.permute.xlu0 %3647
        %3649 = vrot.lane.b32.xlu0 %v3451, 1
        %v3650 = vpop.permute.xlu0 %3649
        %3651 = vrot.lane.b32.xlu0 %v3452, 1
        %v3652 = vpop.permute.xlu0 %3651
        %3653 = vrot.lane.b32.xlu0 %v3453, 1
        %v3654 = vpop.permute.xlu0 %3653
        %3655 = vrot.lane.b32.xlu0 %v3454, 1
        %v3656 = vpop.permute.xlu0 %3655
        %3657 = vrot.lane.b32.xlu0 %v3455, 1
        %v3658 = vpop.permute.xlu0 %3657
        %3659 = vrot.lane.b32.xlu0 %v3456, 1
        %v3660 = vpop.permute.xlu0 %3659
        %3661 = vrot.lane.b32.xlu0 %v3457, 1
        %v3662 = vpop.permute.xlu0 %3661
        %3663 = vrot.lane.b32.xlu0 %v3458, 1
        %v3664 = vpop.permute.xlu0 %3663
        %3665 = vrot.lane.b32.xlu0 %v3459, 1
        %v3666 = vpop.permute.xlu0 %3665
        %3667 = vrot.lane.b32.xlu0 %v3460, 1
        %v3668 = vpop.permute.xlu0 %3667
        %3669 = vrot.lane.b32.xlu0 %v3461, 1
        %v3670 = vpop.permute.xlu0 %3669
        %3671 = vrot.lane.b32.xlu0 %v3462, 1
        %v3672 = vpop.permute.xlu0 %3671
        %3673 = vrot.lane.b32.xlu0 %v3463, 1
        %v3674 = vpop.permute.xlu0 %3673
        %3675 = vrot.lane.b32.xlu0 %v3464, 1
        %v3676 = vpop.permute.xlu0 %3675
        %3677 = vrot.lane.b32.xlu0 %v3465, 1
        %v3678 = vpop.permute.xlu0 %3677
        %3679 = vrot.lane.b32.xlu0 %v3466, 1
        %v3680 = vpop.permute.xlu0 %3679
        %3681 = vrot.lane.b32.xlu0 %v3467, 1
        %v3682 = vpop.permute.xlu0 %3681
        %3683 = vrot.lane.b32.xlu0 %v3468, 1
        %v3684 = vpop.permute.xlu0 %3683
        %3685 = vrot.lane.b32.xlu0 %v3469, 1
        %v3686 = vpop.permute.xlu0 %3685
        %3687 = vrot.lane.b32.xlu0 %v3470, 1
        %v3688 = vpop.permute.xlu0 %3687
        %3689 = vrot.lane.b32.xlu0 %v3471, 1
        %v3690 = vpop.permute.xlu0 %3689
        %3691 = vrot.lane.b32.xlu0 %v3472, 1
        %v3692 = vpop.permute.xlu0 %3691
        %3693 = vrot.lane.b32.xlu0 %v3473, 1
        %v3694 = vpop.permute.xlu0 %3693
        %3695 = vrot.lane.b32.xlu0 %v3474, 1
        %v3696 = vpop.permute.xlu0 %3695
        %3697 = vrot.lane.b32.xlu0 %v3475, 1
        %v3698 = vpop.permute.xlu0 %3697
        %3699 = vrot.lane.b32.xlu0 %v3476, 1
        %v3700 = vpop.permute.xlu0 %3699
        %3701 = vrot.lane.b32.xlu0 %v3477, 1
        %v3702 = vpop.permute.xlu0 %3701
        %3703 = vrot.lane.b32.xlu0 %v3478, 1
        %v3704 = vpop.permute.xlu0 %3703
        %3705 = vrot.lane.b32.xlu0 %v3479, 1
        %v3706 = vpop.permute.xlu0 %3705
        %3707 = vrot.lane.b32.xlu0 %v3480, 1
        %v3708 = vpop.permute.xlu0 %3707
        %3709 = vrot.lane.b32.xlu0 %v3481, 1
        %v3710 = vpop.permute.xlu0 %3709
        %3711 = vrot.lane.b32.xlu0 %v3482, 1
        %v3712 = vpop.permute.xlu0 %3711
        %3713 = vrot.lane.b32.xlu0 %v3483, 1
        %v3714 = vpop.permute.xlu0 %3713
        %3715 = vrot.lane.b32.xlu0 %v3484, 1
        %v3716 = vpop.permute.xlu0 %3715
        %3717 = vrot.lane.b32.xlu0 %v3485, 1
        %v3718 = vpop.permute.xlu0 %3717
        %3719 = vrot.lane.b32.xlu0 %v3486, 1
        %v3720 = vpop.permute.xlu0 %3719
        %3721 = vrot.lane.b32.xlu0 %v3487, 1
        %v3722 = vpop.permute.xlu0 %3721
        %3723 = vrot.lane.b32.xlu0 %v3488, 1
        %v3724 = vpop.permute.xlu0 %3723
        %3725 = vrot.lane.b32.xlu0 %v3489, 1
        %v3726 = vpop.permute.xlu0 %3725
        %3727 = vrot.lane.b32.xlu0 %v3490, 1
        %v3728 = vpop.permute.xlu0 %3727
        %3729 = vrot.lane.b32.xlu0 %v3491, 1
        %v3730 = vpop.permute.xlu0 %3729
        %3731 = vrot.lane.b32.xlu0 %v3492, 1
        %v3732 = vpop.permute.xlu0 %3731
        %3733 = vrot.lane.b32.xlu0 %v3493, 1
        %v3734 = vpop.permute.xlu0 %3733
        %3735 = vrot.lane.b32.xlu0 %v3494, 1
        %v3736 = vpop.permute.xlu0 %3735
        %3737 = vrot.lane.b32.xlu0 %v3495, 1
        %v3738 = vpop.permute.xlu0 %3737
        %3739 = vrot.lane.b32.xlu0 %v3496, 1
        %v3740 = vpop.permute.xlu0 %3739
        %3741 = vrot.lane.b32.xlu0 %v3497, 1
        %v3742 = vpop.permute.xlu0 %3741
        %3743 = vrot.lane.b32.xlu0 %v3498, 1
        %v3744 = vpop.permute.xlu0 %3743
        %3745 = vrot.lane.b32.xlu0 %v3499, 1
        %v3746 = vpop.permute.xlu0 %3745
        %3747 = vrot.lane.b32.xlu0 %v3500, 1
        %v3748 = vpop.permute.xlu0 %3747
        %3749 = vrot.lane.b32.xlu0 %v3501, 1
        %v3750 = vpop.permute.xlu0 %3749
        %3751 = vrot.lane.b32.xlu0 %v3502, 1
        %v3752 = vpop.permute.xlu0 %3751
        %3753 = vrot.lane.b32.xlu0 %v3503, 1
        %v3754 = vpop.permute.xlu0 %3753
        %3755 = vrot.lane.b32.xlu0 %v3504, 1
        %v3756 = vpop.permute.xlu0 %3755
        %3757 = vrot.lane.b32.xlu0 %v3505, 1
        %v3758 = vpop.permute.xlu0 %3757
        %3759 = vrot.lane.b32.xlu0 %v3506, 1
        %v3760 = vpop.permute.xlu0 %3759
        %3761 = vrot.lane.b32.xlu0 %v3507, 1
        %v3762 = vpop.permute.xlu0 %3761
        %3763 = vrot.lane.b32.xlu0 %v3508, 1
        %v3764 = vpop.permute.xlu0 %3763
        %v3765 = vsub.f32 0.0, %v3510
        %v3766 = vsub.f32 0.0, %v3512
        %v3767 = vsub.f32 0.0, %v3514
        %v3768 = vsub.f32 0.0, %v3516
        %v3769 = vsub.f32 0.0, %v3518
        %v3770 = vsub.f32 0.0, %v3520
        %v3771 = vsub.f32 0.0, %v3522
        %v3772 = vsub.f32 0.0, %v3524
        %v3773 = vsub.f32 0.0, %v3526
        %v3774 = vsub.f32 0.0, %v3528
        %v3775 = vsub.f32 0.0, %v3530
        %v3776 = vsub.f32 0.0, %v3532
        %v3777 = vsub.f32 0.0, %v3534
        %v3778 = vsub.f32 0.0, %v3536
        %v3779 = vsub.f32 0.0, %v3538
        %v3780 = vsub.f32 0.0, %v3540
        %v3781 = vsub.f32 0.0, %v3542
        %v3782 = vsub.f32 0.0, %v3544
        %v3783 = vsub.f32 0.0, %v3546
        %v3784 = vsub.f32 0.0, %v3548
        %v3785 = vsub.f32 0.0, %v3550
        %v3786 = vsub.f32 0.0, %v3552
        %v3787 = vsub.f32 0.0, %v3554
        %v3788 = vsub.f32 0.0, %v3556
        %v3789 = vsub.f32 0.0, %v3558
        %v3790 = vsub.f32 0.0, %v3560
        %v3791 = vsub.f32 0.0, %v3562
        %v3792 = vsub.f32 0.0, %v3564
        %v3793 = vsub.f32 0.0, %v3566
        %v3794 = vsub.f32 0.0, %v3568
        %v3795 = vsub.f32 0.0, %v3570
        %v3796 = vsub.f32 0.0, %v3572
        %v3797 = vsub.f32 0.0, %v3574
        %v3798 = vsub.f32 0.0, %v3576
        %v3799 = vsub.f32 0.0, %v3578
        %v3800 = vsub.f32 0.0, %v3580
        %v3801 = vsub.f32 0.0, %v3582
        %v3802 = vsub.f32 0.0, %v3584
        %v3803 = vsub.f32 0.0, %v3586
        %v3804 = vsub.f32 0.0, %v3588
        %v3805 = vsub.f32 0.0, %v3590
        %v3806 = vsub.f32 0.0, %v3592
        %v3807 = vsub.f32 0.0, %v3594
        %v3808 = vsub.f32 0.0, %v3596
        %v3809 = vsub.f32 0.0, %v3598
        %v3810 = vsub.f32 0.0, %v3600
        %v3811 = vsub.f32 0.0, %v3602
        %v3812 = vsub.f32 0.0, %v3604
        %v3813 = vsub.f32 0.0, %v3606
        %v3814 = vsub.f32 0.0, %v3608
        %v3815 = vsub.f32 0.0, %v3610
        %v3816 = vsub.f32 0.0, %v3612
        %v3817 = vsub.f32 0.0, %v3614
        %v3818 = vsub.f32 0.0, %v3616
        %v3819 = vsub.f32 0.0, %v3618
        %v3820 = vsub.f32 0.0, %v3620
        %v3821 = vsub.f32 0.0, %v3622
        %v3822 = vsub.f32 0.0, %v3624
        %v3823 = vsub.f32 0.0, %v3626
        %v3824 = vsub.f32 0.0, %v3628
        %v3825 = vsub.f32 0.0, %v3630
        %v3826 = vsub.f32 0.0, %v3632
        %v3827 = vsub.f32 0.0, %v3634
        %v3828 = vsub.f32 0.0, %v3636
        %v3829 = vsel %vm2548, %v3765, %v3638
        %v3830 = vsel %vm2548, %v3766, %v3640
        %v3831 = vsel %vm2548, %v3767, %v3642
        %v3832 = vsel %vm2548, %v3768, %v3644
        %v3833 = vsel %vm2548, %v3769, %v3646
        %v3834 = vsel %vm2548, %v3770, %v3648
        %v3835 = vsel %vm2548, %v3771, %v3650
        %v3836 = vsel %vm2548, %v3772, %v3652
        %v3837 = vsel %vm2548, %v3773, %v3654
        %v3838 = vsel %vm2548, %v3774, %v3656
        %v3839 = vsel %vm2548, %v3775, %v3658
        %v3840 = vsel %vm2548, %v3776, %v3660
        %v3841 = vsel %vm2548, %v3777, %v3662
        %v3842 = vsel %vm2548, %v3778, %v3664
        %v3843 = vsel %vm2548, %v3779, %v3666
        %v3844 = vsel %vm2548, %v3780, %v3668
        %v3845 = vsel %vm2548, %v3781, %v3670
        %v3846 = vsel %vm2548, %v3782, %v3672
        %v3847 = vsel %vm2548, %v3783, %v3674
        %v3848 = vsel %vm2548, %v3784, %v3676
        %v3849 = vsel %vm2548, %v3785, %v3678
        %v3850 = vsel %vm2548, %v3786, %v3680
        %v3851 = vsel %vm2548, %v3787, %v3682
        %v3852 = vsel %vm2548, %v3788, %v3684
        %v3853 = vsel %vm2548, %v3789, %v3686
        %v3854 = vsel %vm2548, %v3790, %v3688
        %v3855 = vsel %vm2548, %v3791, %v3690
        %v3856 = vsel %vm2548, %v3792, %v3692
        %v3857 = vsel %vm2548, %v3793, %v3694
        %v3858 = vsel %vm2548, %v3794, %v3696
        %v3859 = vsel %vm2548, %v3795, %v3698
        %v3860 = vsel %vm2548, %v3796, %v3700
        %v3861 = vsel %vm2548, %v3797, %v3702
        %v3862 = vsel %vm2548, %v3798, %v3704
        %v3863 = vsel %vm2548, %v3799, %v3706
        %v3864 = vsel %vm2548, %v3800, %v3708
        %v3865 = vsel %vm2548, %v3801, %v3710
        %v3866 = vsel %vm2548, %v3802, %v3712
        %v3867 = vsel %vm2548, %v3803, %v3714
        %v3868 = vsel %vm2548, %v3804, %v3716
        %v3869 = vsel %vm2548, %v3805, %v3718
        %v3870 = vsel %vm2548, %v3806, %v3720
        %v3871 = vsel %vm2548, %v3807, %v3722
        %v3872 = vsel %vm2548, %v3808, %v3724
        %v3873 = vsel %vm2548, %v3809, %v3726
        %v3874 = vsel %vm2548, %v3810, %v3728
        %v3875 = vsel %vm2548, %v3811, %v3730
        %v3876 = vsel %vm2548, %v3812, %v3732
        %v3877 = vsel %vm2548, %v3813, %v3734
        %v3878 = vsel %vm2548, %v3814, %v3736
        %v3879 = vsel %vm2548, %v3815, %v3738
        %v3880 = vsel %vm2548, %v3816, %v3740
        %v3881 = vsel %vm2548, %v3817, %v3742
        %v3882 = vsel %vm2548, %v3818, %v3744
        %v3883 = vsel %vm2548, %v3819, %v3746
        %v3884 = vsel %vm2548, %v3820, %v3748
        %v3885 = vsel %vm2548, %v3821, %v3750
        %v3886 = vsel %vm2548, %v3822, %v3752
        %v3887 = vsel %vm2548, %v3823, %v3754
        %v3888 = vsel %vm2548, %v3824, %v3756
        %v3889 = vsel %vm2548, %v3825, %v3758
        %v3890 = vsel %vm2548, %v3826, %v3760
        %v3891 = vsel %vm2548, %v3827, %v3762
        %v3892 = vsel %vm2548, %v3828, %v3764
        %v3893 = vmul.f32 %v3445, %v1631
        %v3894 = vmul.f32 %v3446, %v1632
        %v3895 = vmul.f32 %v3447, %v1633
        %v3896 = vmul.f32 %v3448, %v1634
        %v3897 = vmul.f32 %v3449, %v1635
        %v3898 = vmul.f32 %v3450, %v1636
        %v3899 = vmul.f32 %v3451, %v1637
        %v3900 = vmul.f32 %v3452, %v1638
        %v3901 = vmul.f32 %v3453, %v1639
        %v3902 = vmul.f32 %v3454, %v1640
        %v3903 = vmul.f32 %v3455, %v1641
        %v3904 = vmul.f32 %v3456, %v1642
        %v3905 = vmul.f32 %v3457, %v1643
        %v3906 = vmul.f32 %v3458, %v1644
        %v3907 = vmul.f32 %v3459, %v1645
        %v3908 = vmul.f32 %v3460, %v1646
        %v3909 = vmul.f32 %v3461, %v1647
        %v3910 = vmul.f32 %v3462, %v1648
        %v3911 = vmul.f32 %v3463, %v1649
        %v3912 = vmul.f32 %v3464, %v1650
        %v3913 = vmul.f32 %v3465, %v1651
        %v3914 = vmul.f32 %v3466, %v1652
        %v3915 = vmul.f32 %v3467, %v1653
        %v3916 = vmul.f32 %v3468, %v1654
        %v3917 = vmul.f32 %v3469, %v1655
        %v3918 = vmul.f32 %v3470, %v1656
        %v3919 = vmul.f32 %v3471, %v1657
        %v3920 = vmul.f32 %v3472, %v1658
        %v3921 = vmul.f32 %v3473, %v1659
        %v3922 = vmul.f32 %v3474, %v1660
        %v3923 = vmul.f32 %v3475, %v1661
        %v3924 = vmul.f32 %v3476, %v1662
        %v3925 = vmul.f32 %v3477, %v1663
        %v3926 = vmul.f32 %v3478, %v1664
        %v3927 = vmul.f32 %v3479, %v1665
        %v3928 = vmul.f32 %v3480, %v1666
        %v3929 = vmul.f32 %v3481, %v1667
        %v3930 = vmul.f32 %v3482, %v1668
        %v3931 = vmul.f32 %v3483, %v1669
        %v3932 = vmul.f32 %v3484, %v1670
        %v3933 = vmul.f32 %v3485, %v1671
        %v3934 = vmul.f32 %v3486, %v1672
        %v3935 = vmul.f32 %v3487, %v1673
        %v3936 = vmul.f32 %v3488, %v1674
        %v3937 = vmul.f32 %v3489, %v1675
        %v3938 = vmul.f32 %v3490, %v1676
        %v3939 = vmul.f32 %v3491, %v1677
        %v3940 = vmul.f32 %v3492, %v1678
        %v3941 = vmul.f32 %v3493, %v1679
        %v3942 = vmul.f32 %v3494, %v1680
        %v3943 = vmul.f32 %v3495, %v1681
        %v3944 = vmul.f32 %v3496, %v1682
        %v3945 = vmul.f32 %v3497, %v1683
        %v3946 = vmul.f32 %v3498, %v1684
        %v3947 = vmul.f32 %v3499, %v1685
        %v3948 = vmul.f32 %v3500, %v1686
        %v3949 = vmul.f32 %v3501, %v1687
        %v3950 = vmul.f32 %v3502, %v1688
        %v3951 = vmul.f32 %v3503, %v1689
        %v3952 = vmul.f32 %v3504, %v1690
        %v3953 = vmul.f32 %v3505, %v1691
        %v3954 = vmul.f32 %v3506, %v1692
        %v3955 = vmul.f32 %v3507, %v1693
        %v3956 = vmul.f32 %v3508, %v1694
        %v3957 = vmul.f32 %v3829, %v1695
        %v3958 = vmul.f32 %v3830, %v1696
        %v3959 = vmul.f32 %v3831, %v1697
        %v3960 = vmul.f32 %v3832, %v1698
        %v3961 = vmul.f32 %v3833, %v1699
        %v3962 = vmul.f32 %v3834, %v1700
        %v3963 = vmul.f32 %v3835, %v1701
        %v3964 = vmul.f32 %v3836, %v1702
        %v3965 = vmul.f32 %v3837, %v1703
        %v3966 = vmul.f32 %v3838, %v1704
        %v3967 = vmul.f32 %v3839, %v1705
        %v3968 = vmul.f32 %v3840, %v1706
        %v3969 = vmul.f32 %v3841, %v1707
        %v3970 = vmul.f32 %v3842, %v1708
        %v3971 = vmul.f32 %v3843, %v1709
        %v3972 = vmul.f32 %v3844, %v1710
        %v3973 = vmul.f32 %v3845, %v1711
        %v3974 = vmul.f32 %v3846, %v1712
        %v3975 = vmul.f32 %v3847, %v1713
        %v3976 = vmul.f32 %v3848, %v1714
        %v3977 = vmul.f32 %v3849, %v1715
        %v3978 = vmul.f32 %v3850, %v1716
        %v3979 = vmul.f32 %v3851, %v1717
        %v3980 = vmul.f32 %v3852, %v1718
        %v3981 = vmul.f32 %v3853, %v1719
        %v3982 = vmul.f32 %v3854, %v1720
        %v3983 = vmul.f32 %v3855, %v1721
        %v3984 = vmul.f32 %v3856, %v1722
        %v3985 = vmul.f32 %v3857, %v1723
        %v3986 = vmul.f32 %v3858, %v1724
        %v3987 = vmul.f32 %v3859, %v1725
        %v3988 = vmul.f32 %v3860, %v1726
        %v3989 = vmul.f32 %v3861, %v1727
        %v3990 = vmul.f32 %v3862, %v1728
        %v3991 = vmul.f32 %v3863, %v1729
        %v3992 = vmul.f32 %v3864, %v1730
        %v3993 = vmul.f32 %v3865, %v1731
        %v3994 = vmul.f32 %v3866, %v1732
        %v3995 = vmul.f32 %v3867, %v1733
        %v3996 = vmul.f32 %v3868, %v1734
        %v3997 = vmul.f32 %v3869, %v1735
        %v3998 = vmul.f32 %v3870, %v1736
        %v3999 = vmul.f32 %v3871, %v1737
        %v4000 = vmul.f32 %v3872, %v1738
        %v4001 = vmul.f32 %v3873, %v1739
        %v4002 = vmul.f32 %v3874, %v1740
        %v4003 = vmul.f32 %v3875, %v1741
        %v4004 = vmul.f32 %v3876, %v1742
        %v4005 = vmul.f32 %v3877, %v1743
        %v4006 = vmul.f32 %v3878, %v1744
        %v4007 = vmul.f32 %v3879, %v1745
        %v4008 = vmul.f32 %v3880, %v1746
        %v4009 = vmul.f32 %v3881, %v1747
        %v4010 = vmul.f32 %v3882, %v1748
        %v4011 = vmul.f32 %v3883, %v1749
        %v4012 = vmul.f32 %v3884, %v1750
        %v4013 = vmul.f32 %v3885, %v1751
        %v4014 = vmul.f32 %v3886, %v1752
        %v4015 = vmul.f32 %v3887, %v1753
        %v4016 = vmul.f32 %v3888, %v1754
        %v4017 = vmul.f32 %v3889, %v1755
        %v4018 = vmul.f32 %v3890, %v1756
        %v4019 = vmul.f32 %v3891, %v1757
        %v4020 = vmul.f32 %v3892, %v1758
        %v4021 = vadd.f32 %v3893, %v3957
        %v4022 = vadd.f32 %v3894, %v3958
        %v4023 = vadd.f32 %v3895, %v3959
        %v4024 = vadd.f32 %v3896, %v3960
        %v4025 = vadd.f32 %v3897, %v3961
        %v4026 = vadd.f32 %v3898, %v3962
        %v4027 = vadd.f32 %v3899, %v3963
        %v4028 = vadd.f32 %v3900, %v3964
        %v4029 = vadd.f32 %v3901, %v3965
        %v4030 = vadd.f32 %v3902, %v3966
        %v4031 = vadd.f32 %v3903, %v3967
        %v4032 = vadd.f32 %v3904, %v3968
        %v4033 = vadd.f32 %v3905, %v3969
        %v4034 = vadd.f32 %v3906, %v3970
        %v4035 = vadd.f32 %v3907, %v3971
        %v4036 = vadd.f32 %v3908, %v3972
        %v4037 = vadd.f32 %v3909, %v3973
        %v4038 = vadd.f32 %v3910, %v3974
        %v4039 = vadd.f32 %v3911, %v3975
        %v4040 = vadd.f32 %v3912, %v3976
        %v4041 = vadd.f32 %v3913, %v3977
        %v4042 = vadd.f32 %v3914, %v3978
        %v4043 = vadd.f32 %v3915, %v3979
        %v4044 = vadd.f32 %v3916, %v3980
        %v4045 = vadd.f32 %v3917, %v3981
        %v4046 = vadd.f32 %v3918, %v3982
        %v4047 = vadd.f32 %v3919, %v3983
        %v4048 = vadd.f32 %v3920, %v3984
        %v4049 = vadd.f32 %v3921, %v3985
        %v4050 = vadd.f32 %v3922, %v3986
        %v4051 = vadd.f32 %v3923, %v3987
        %v4052 = vadd.f32 %v3924, %v3988
        %v4053 = vadd.f32 %v3925, %v3989
        %v4054 = vadd.f32 %v3926, %v3990
        %v4055 = vadd.f32 %v3927, %v3991
        %v4056 = vadd.f32 %v3928, %v3992
        %v4057 = vadd.f32 %v3929, %v3993
        %v4058 = vadd.f32 %v3930, %v3994
        %v4059 = vadd.f32 %v3931, %v3995
        %v4060 = vadd.f32 %v3932, %v3996
        %v4061 = vadd.f32 %v3933, %v3997
        %v4062 = vadd.f32 %v3934, %v3998
        %v4063 = vadd.f32 %v3935, %v3999
        %v4064 = vadd.f32 %v3936, %v4000
        %v4065 = vadd.f32 %v3937, %v4001
        %v4066 = vadd.f32 %v3938, %v4002
        %v4067 = vadd.f32 %v3939, %v4003
        %v4068 = vadd.f32 %v3940, %v4004
        %v4069 = vadd.f32 %v3941, %v4005
        %v4070 = vadd.f32 %v3942, %v4006
        %v4071 = vadd.f32 %v3943, %v4007
        %v4072 = vadd.f32 %v3944, %v4008
        %v4073 = vadd.f32 %v3945, %v4009
        %v4074 = vadd.f32 %v3946, %v4010
        %v4075 = vadd.f32 %v3947, %v4011
        %v4076 = vadd.f32 %v3948, %v4012
        %v4077 = vadd.f32 %v3949, %v4013
        %v4078 = vadd.f32 %v3950, %v4014
        %v4079 = vadd.f32 %v3951, %v4015
        %v4080 = vadd.f32 %v3952, %v4016
        %v4081 = vadd.f32 %v3953, %v4017
        %v4082 = vadd.f32 %v3954, %v4018
        %v4083 = vadd.f32 %v3955, %v4019
        %v4084 = vadd.f32 %v3956, %v4020
        %4085 = vst [vmem:[%s351] sm:$0xff] %v4021
        %4086 = vst [vmem:[%s351 + $0x8] sm:$0xff] %v4022
        %4087 = vst [vmem:[%s351 + $0x10] sm:$0xff] %v4023
        %4088 = vst [vmem:[%s351 + $0x18] sm:$0xff] %v4024
        %4089 = vst [vmem:[%s351 + $0x20] sm:$0xff] %v4025
        %4090 = vst [vmem:[%s351 + $0x28] sm:$0xff] %v4026
        %4091 = vst [vmem:[%s351 + $0x30] sm:$0xff] %v4027
        %4092 = vst [vmem:[%s351 + $0x38] sm:$0xff] %v4028
        %4093 = vst [vmem:[%s351 + $0x40] sm:$0xff] %v4029
        %4094 = vst [vmem:[%s351 + $0x48] sm:$0xff] %v4030
        %4095 = vst [vmem:[%s351 + $0x50] sm:$0xff] %v4031
        %4096 = vst [vmem:[%s351 + $0x58] sm:$0xff] %v4032
        %4097 = vst [vmem:[%s351 + $0x60] sm:$0xff] %v4033
        %4098 = vst [vmem:[%s351 + $0x68] sm:$0xff] %v4034
        %4099 = vst [vmem:[%s351 + $0x70] sm:$0xff] %v4035
        %4100 = vst [vmem:[%s351 + $0x78] sm:$0xff] %v4036
        %4101 = vst [vmem:[%s351 + $0x80] sm:$0xff] %v4037
        %4102 = vst [vmem:[%s351 + $0x88] sm:$0xff] %v4038
        %4103 = vst [vmem:[%s351 + $0x90] sm:$0xff] %v4039
        %4104 = vst [vmem:[%s351 + $0x98] sm:$0xff] %v4040
        %4105 = vst [vmem:[%s351 + $0xa0] sm:$0xff] %v4041
        %4106 = vst [vmem:[%s351 + $0xa8] sm:$0xff] %v4042
        %4107 = vst [vmem:[%s351 + $0xb0] sm:$0xff] %v4043
        %4108 = vst [vmem:[%s351 + $0xb8] sm:$0xff] %v4044
        %4109 = vst [vmem:[%s351 + $0xc0] sm:$0xff] %v4045
        %4110 = vst [vmem:[%s351 + $0xc8] sm:$0xff] %v4046
        %4111 = vst [vmem:[%s351 + $0xd0] sm:$0xff] %v4047
        %4112 = vst [vmem:[%s351 + $0xd8] sm:$0xff] %v4048
        %4113 = vst [vmem:[%s351 + $0xe0] sm:$0xff] %v4049
        %4114 = vst [vmem:[%s351 + $0xe8] sm:$0xff] %v4050
        %4115 = vst [vmem:[%s351 + $0xf0] sm:$0xff] %v4051
        %4116 = vst [vmem:[%s351 + $0xf8] sm:$0xff] %v4052
        %4117 = vst [vmem:[%s351 + $0x100] sm:$0xff] %v4053
        %4118 = vst [vmem:[%s351 + $0x108] sm:$0xff] %v4054
        %4119 = vst [vmem:[%s351 + $0x110] sm:$0xff] %v4055
        %4120 = vst [vmem:[%s351 + $0x118] sm:$0xff] %v4056
        %4121 = vst [vmem:[%s351 + $0x120] sm:$0xff] %v4057
        %4122 = vst [vmem:[%s351 + $0x128] sm:$0xff] %v4058
        %4123 = vst [vmem:[%s351 + $0x130] sm:$0xff] %v4059
        %4124 = vst [vmem:[%s351 + $0x138] sm:$0xff] %v4060
        %4125 = vst [vmem:[%s351 + $0x140] sm:$0xff] %v4061
        %4126 = vst [vmem:[%s351 + $0x148] sm:$0xff] %v4062
        %4127 = vst [vmem:[%s351 + $0x150] sm:$0xff] %v4063
        %4128 = vst [vmem:[%s351 + $0x158] sm:$0xff] %v4064
        %4129 = vst [vmem:[%s351 + $0x160] sm:$0xff] %v4065
        %4130 = vst [vmem:[%s351 + $0x168] sm:$0xff] %v4066
        %4131 = vst [vmem:[%s351 + $0x170] sm:$0xff] %v4067
        %4132 = vst [vmem:[%s351 + $0x178] sm:$0xff] %v4068
        %4133 = vst [vmem:[%s351 + $0x180] sm:$0xff] %v4069
        %4134 = vst [vmem:[%s351 + $0x188] sm:$0xff] %v4070
        %4135 = vst [vmem:[%s351 + $0x190] sm:$0xff] %v4071
        %4136 = vst [vmem:[%s351 + $0x198] sm:$0xff] %v4072
        %4137 = vst [vmem:[%s351 + $0x1a0] sm:$0xff] %v4073
        %4138 = vst [vmem:[%s351 + $0x1a8] sm:$0xff] %v4074
        %4139 = vst [vmem:[%s351 + $0x1b0] sm:$0xff] %v4075
        %4140 = vst [vmem:[%s351 + $0x1b8] sm:$0xff] %v4076
        %4141 = vst [vmem:[%s351 + $0x1c0] sm:$0xff] %v4077
        %4142 = vst [vmem:[%s351 + $0x1c8] sm:$0xff] %v4078
        %4143 = vst [vmem:[%s351 + $0x1d0] sm:$0xff] %v4079
        %4144 = vst [vmem:[%s351 + $0x1d8] sm:$0xff] %v4080
        %4145 = vst [vmem:[%s351 + $0x1e0] sm:$0xff] %v4081
        %4146 = vst [vmem:[%s351 + $0x1e8] sm:$0xff] %v4082
        %4147 = vst [vmem:[%s351 + $0x1f0] sm:$0xff] %v4083
        %4148 = vst [vmem:[%s351 + $0x1f8] sm:$0xff] %v4084
        %4149 = vst [vmem:[%s358] sm:$0xff] %v1312
        %4150 = vst [vmem:[%s358 + $0x8] sm:$0xff] %v1317
        %4151 = vst [vmem:[%s358 + $0x10] sm:$0xff] %v1322
        %4152 = vst [vmem:[%s358 + $0x18] sm:$0xff] %v1327
        %4153 = vst [vmem:[%s358 + $0x20] sm:$0xff] %v1332
        %4154 = vst [vmem:[%s358 + $0x28] sm:$0xff] %v1337
        %4155 = vst [vmem:[%s358 + $0x30] sm:$0xff] %v1342
        %4156 = vst [vmem:[%s358 + $0x38] sm:$0xff] %v1347
        %4157 = vst [vmem:[%s358 + $0x40] sm:$0xff] %v1352
        %4158 = vst [vmem:[%s358 + $0x48] sm:$0xff] %v1357
        %4159 = vst [vmem:[%s358 + $0x50] sm:$0xff] %v1362
        %4160 = vst [vmem:[%s358 + $0x58] sm:$0xff] %v1367
        %4161 = vst [vmem:[%s358 + $0x60] sm:$0xff] %v1372
        %4162 = vst [vmem:[%s358 + $0x68] sm:$0xff] %v1377
        %4163 = vst [vmem:[%s358 + $0x70] sm:$0xff] %v1382
        %4164 = vst [vmem:[%s358 + $0x78] sm:$0xff] %v1387
        %4165 = vst [vmem:[%s358 + $0x80] sm:$0xff] %v1392
        %4166 = vst [vmem:[%s358 + $0x88] sm:$0xff] %v1397
        %4167 = vst [vmem:[%s358 + $0x90] sm:$0xff] %v1402
        %4168 = vst [vmem:[%s358 + $0x98] sm:$0xff] %v1407
        %4169 = vst [vmem:[%s358 + $0xa0] sm:$0xff] %v1412
        %4170 = vst [vmem:[%s358 + $0xa8] sm:$0xff] %v1417
        %4171 = vst [vmem:[%s358 + $0xb0] sm:$0xff] %v1422
        %4172 = vst [vmem:[%s358 + $0xb8] sm:$0xff] %v1427
        %4173 = vst [vmem:[%s358 + $0xc0] sm:$0xff] %v1432
        %4174 = vst [vmem:[%s358 + $0xc8] sm:$0xff] %v1437
        %4175 = vst [vmem:[%s358 + $0xd0] sm:$0xff] %v1442
        %4176 = vst [vmem:[%s358 + $0xd8] sm:$0xff] %v1447
        %4177 = vst [vmem:[%s358 + $0xe0] sm:$0xff] %v1452
        %4178 = vst [vmem:[%s358 + $0xe8] sm:$0xff] %v1457
        %4179 = vst [vmem:[%s358 + $0xf0] sm:$0xff] %v1462
        %4180 = vst [vmem:[%s358 + $0xf8] sm:$0xff] %v1467
        %4181 = vst [vmem:[%s358 + $0x100] sm:$0xff] %v1472
        %4182 = vst [vmem:[%s358 + $0x108] sm:$0xff] %v1477
        %4183 = vst [vmem:[%s358 + $0x110] sm:$0xff] %v1482
        %4184 = vst [vmem:[%s358 + $0x118] sm:$0xff] %v1487
        %4185 = vst [vmem:[%s358 + $0x120] sm:$0xff] %v1492
        %4186 = vst [vmem:[%s358 + $0x128] sm:$0xff] %v1497
        %4187 = vst [vmem:[%s358 + $0x130] sm:$0xff] %v1502
        %4188 = vst [vmem:[%s358 + $0x138] sm:$0xff] %v1507
        %4189 = vst [vmem:[%s358 + $0x140] sm:$0xff] %v1512
        %4190 = vst [vmem:[%s358 + $0x148] sm:$0xff] %v1517
        %4191 = vst [vmem:[%s358 + $0x150] sm:$0xff] %v1522
        %4192 = vst [vmem:[%s358 + $0x158] sm:$0xff] %v1527
        %4193 = vst [vmem:[%s358 + $0x160] sm:$0xff] %v1532
        %4194 = vst [vmem:[%s358 + $0x168] sm:$0xff] %v1537
        %4195 = vst [vmem:[%s358 + $0x170] sm:$0xff] %v1542
        %4196 = vst [vmem:[%s358 + $0x178] sm:$0xff] %v1547
        %4197 = vst [vmem:[%s358 + $0x180] sm:$0xff] %v1552
        %4198 = vst [vmem:[%s358 + $0x188] sm:$0xff] %v1557
        %4199 = vst [vmem:[%s358 + $0x190] sm:$0xff] %v1562
        %4200 = vst [vmem:[%s358 + $0x198] sm:$0xff] %v1567
        %4201 = vst [vmem:[%s358 + $0x1a0] sm:$0xff] %v1572
        %4202 = vst [vmem:[%s358 + $0x1a8] sm:$0xff] %v1577
        %4203 = vst [vmem:[%s358 + $0x1b0] sm:$0xff] %v1582
        %4204 = vst [vmem:[%s358 + $0x1b8] sm:$0xff] %v1587
        %4205 = vst [vmem:[%s358 + $0x1c0] sm:$0xff] %v1592
        %4206 = vst [vmem:[%s358 + $0x1c8] sm:$0xff] %v1597
        %4207 = vst [vmem:[%s358 + $0x1d0] sm:$0xff] %v1602
        %4208 = vst [vmem:[%s358 + $0x1d8] sm:$0xff] %v1607
        %4209 = vst [vmem:[%s358 + $0x1e0] sm:$0xff] %v1612
        %4210 = vst [vmem:[%s358 + $0x1e8] sm:$0xff] %v1617
        %4211 = vst [vmem:[%s358 + $0x1f0] sm:$0xff] %v1622
        %4212 = vst [vmem:[%s358 + $0x1f8] sm:$0xff] %v1627
        %s4213 = sand.u32 %s148, 1
        %s4214 = scalar_lea.sflag [#allocation4], %s4213
        %s4215 = sand.u32 %s148, 1
        %s4216 = smul.addr %s4215, 512
        %s4217 = scalar_lea.vmem [#allocation10], %s4216
        %s4218 = sand.u32 %s30, 1
        %s4219 = scalar_lea.sflag [#allocation12], %s4218
        %s4220 = sand.u32 %s174, 1
        %s4221 = smul.addr %s4220, 512
        %s4222 = scalar_lea.vmem [#allocation11], %s4221
        %s4223 = sand.u32 %s30, 1
        %s4224 = scalar_lea.sflag [#allocation12], %s4223
        %s4225 = sand.u32 %s200, 1
        %s4226 = smul.addr %s4225, 512
        %s4227 = scalar_lea.vmem [#allocation13], %s4226
        // Predicated region
        $region57: #{tpu_custom_call.1} parent=39 // pred_check
          %p4228 = pneg %p158
        $region58: #{tpu_custom_call.1} parent=39 // pred_check_branch
          %4230 = sbr.rel (%p4228) target = $region60
        $region59: #{tpu_custom_call.1} parent=39 // pred_region
          %s4231 = smul.u32 64, %s30
          %s4233 = ssub.s32 8192, 8192
          %4234 = vsyncadd %s4214, %s4233
          %s4235 = smul.addr %s4231, 128
          %s4236 = scalar_lea.hbm %s5, %s4235
          %s4237 = sshll.u32 %s4217, 4
          %s4238 = int_to_ptr.vmem [resolvable:$true] %s4237
          %4243 = dma.vmem_to_hbm [thread:$0]  %s4238, 8192, %s4236, %s4214, 128, 128, 8
        $region60: #{tpu_custom_call.1} parent=39 // pred_fallthru
          _
        // Predicated region
        $region61: #{tpu_custom_call.1} parent=39 // pred_check
          %p4244 = pneg %p184
        $region62: #{tpu_custom_call.1} parent=39 // pred_check_branch
          %4246 = sbr.rel (%p4244) target = $region64
        $region63: #{tpu_custom_call.1} parent=39 // pred_region
          %s4247 = smul.u32 64, %s30
          %s4249 = ssub.s32 8192, 8192
          %4250 = vsyncadd %s4219, %s4249
          %s4251 = smul.addr %s4247, 128
          %s4252 = scalar_lea.hbm %s6, %s4251
          %s4253 = sshll.u32 %s4222, 4
          %s4254 = int_to_ptr.vmem [resolvable:$true] %s4253
          %4259 = dma.vmem_to_hbm [thread:$0]  %s4254, 8192, %s4252, %s4219, 128, 128, 8
        $region64: #{tpu_custom_call.1} parent=39 // pred_fallthru
          _
        // Predicated region
        $region65: #{tpu_custom_call.1} parent=39 // pred_check
          %p4260 = pneg %p210
        $region66: #{tpu_custom_call.1} parent=39 // pred_check_branch
          %4262 = sbr.rel (%p4260) target = $region68
        $region67: #{tpu_custom_call.1} parent=39 // pred_region
          %s4263 = smul.u32 64, %s30
          %s4265 = ssub.s32 8192, 8192
          %4266 = vsyncadd %s4224, %s4265
          %s4267 = smul.addr %s4263, 128
          %s4268 = scalar_lea.hbm %s7, %s4267
          %s4269 = sshll.u32 %s4227, 4
          %s4270 = int_to_ptr.vmem [resolvable:$true] %s4269
          %4275 = dma.vmem_to_hbm [thread:$0]  %s4270, 8192, %s4268, %s4224, 128, 128, 8
        $region68: #{tpu_custom_call.1} parent=39 // pred_fallthru
          _
      $region40: #{tpu_custom_call.1} parent=5 // pred_fallthru
        _
      %p4276 = scmp.le.s32.totalorder 2, %s25
      // Predicated region
      $region69: #{tpu_custom_call.1} parent=5 // pred_check
        %p4277 = pneg %p4276
      $region70: #{tpu_custom_call.1} parent=5 // pred_check_branch
        %4279 = sbr.rel (%p4277) target = $region72
      $region71: #{tpu_custom_call.1} parent=5 // pred_region
        %s4280 = ssub.s32 %s25, 2
        // Predicated region
        $region73: #{tpu_custom_call.1} parent=71 // pred_check
          %p4281 = pneg %p164
        $region74: #{tpu_custom_call.1} parent=71 // pred_check_branch
          %4283 = sbr.rel (%p4281) target = $region76
        $region75: #{tpu_custom_call.1} parent=71 // pred_region
          %s4284 = sand.u32 %s149, 1
          %s4285 = scalar_lea.sflag [#allocation4], %s4284
          %s4286 = sand.u32 %s149, 1
          %s4287 = smul.addr %s4286, 512
          %s4288 = scalar_lea.vmem [#allocation10], %s4287
          %4289 = dma.done %s4285, 8192
        $region76: #{tpu_custom_call.1} parent=71 // pred_fallthru
          _
        // Predicated region
        $region77: #{tpu_custom_call.1} parent=71 // pred_check
          %p4290 = pneg %p190
        $region78: #{tpu_custom_call.1} parent=71 // pred_check_branch
          %4292 = sbr.rel (%p4290) target = $region80
        $region79: #{tpu_custom_call.1} parent=71 // pred_region
          %s4293 = sand.u32 %s31, 1
          %s4294 = scalar_lea.sflag [#allocation12], %s4293
          %s4295 = sand.u32 %s175, 1
          %s4296 = smul.addr %s4295, 512
          %s4297 = scalar_lea.vmem [#allocation11], %s4296
          %4298 = dma.done %s4294, 8192
        $region80: #{tpu_custom_call.1} parent=71 // pred_fallthru
          _
        // Predicated region
        $region81: #{tpu_custom_call.1} parent=71 // pred_check
          %p4299 = pneg %p216
        $region82: #{tpu_custom_call.1} parent=71 // pred_check_branch
          %4301 = sbr.rel (%p4299) target = $region84
        $region83: #{tpu_custom_call.1} parent=71 // pred_region
          %s4302 = sand.u32 %s31, 1
          %s4303 = scalar_lea.sflag [#allocation12], %s4302
          %s4304 = sand.u32 %s201, 1
          %s4305 = smul.addr %s4304, 512
          %s4306 = scalar_lea.vmem [#allocation13], %s4305
          %4307 = dma.done %s4303, 8192
        $region84: #{tpu_custom_call.1} parent=71 // pred_fallthru
          _
      $region72: #{tpu_custom_call.1} parent=5 // pred_fallthru
        _
    $region6: #{tpu_custom_call.1} parent=1 // loop_footer
      %s29 = sadd.s32 1, %s25
    $region7: #{tpu_custom_call.1} parent=1 // loop_footer_branch
      %24 = sbr.rel target = $region3
    $region8: #{tpu_custom_call.1} parent=1 // loop_exit
      _
    %4308 = vsyncpa [#allocation3], 1
    %s4309 = scalar_lea.sflag [#allocation3], 1
    %4310 = vsyncpa %s4309, 1
    %4311 = vsyncpa [#allocation6], 1
    %4312 = vsyncpa [#allocation9], 1
    %4313 = vsyncpa [#allocation4], 1
    %s4314 = scalar_lea.sflag [#allocation4], 1
    %4315 = vsyncpa %s4314, 1
    %4316 = vsyncpa [#allocation12], 1
    %s4317 = scalar_lea.sflag [#allocation12], 1
    %4318 = vsyncpa %s4317, 1

</llo_original>
